<compile_context>
chip_gen: v7x
topology: tpu7x:2x2x1
jax: 0.10.0
libtpu: 0.0.40
codegen_flags: <defaults>
</compile_context>

<pallas_src>
import functools
import math

import jax
import jax.numpy as jnp
from jax import lax
from jax.experimental import pallas as pl
from jax.experimental.pallas import tpu as pltpu

_EEP = 16      # padded width of the [edge_attr | 1 | 0...] block (>= in_edge_nf + 1)
_LANE = 128


def _silu(x):
    return x * jax.nn.sigmoid(x)


def _round_up(x, m):
    return -(-x // m) * m


# ---------------------------------------------------------------------------
# Fused GNN kernel.  grid = (n_layers, n_edge_tiles); h carried in VMEM scratch.
# ---------------------------------------------------------------------------
def _fused_gnn_kernel(inv_norm, has_emask, has_nmask, n_pad, hid, eep, *refs):
    it = iter(refs)
    h0_ref = next(it)                               # (N_pad, IN_PAD)    f32
    g_ref = next(it)                                # (TE, KG)           bf16
    emask_ref = next(it) if has_emask else None     # (TE, 1)            f32
    nmask_ref = next(it) if has_nmask else None     # (N_pad, 1)         f32
    emb_w_ref = next(it)                            # (IN_PAD, hid)      bf16
    emb_b_ref = next(it)                            # (1, hid)           f32
    out_w_ref = next(it)                            # (hid, OUT_PAD)     bf16
    out_b_ref = next(it)                            # (1, OUT_PAD)       f32
    wslab_ref = next(it)                            # (6*hid+eep, hid)   bf16  (layer slice)
    bslab_ref = next(it)                            # (8, hid)           f32   (layer slice)
    out_ref = next(it)                              # (N_pad, OUT_PAD)   f32
    h_scr = next(it)                                # (N_pad, hid)       f32  persists
    agg_scr = next(it)                              # (N_pad, hid)       f32  persists
    s_scr = next(it)                                # (KG, hid)          bf16 persists

    l = pl.program_id(0)
    t = pl.program_id(1)
    last_l = pl.num_programs(0) - 1
    last_t = pl.num_programs(1) - 1
    f32 = jnp.float32
    bf16 = jnp.bfloat16

    # -- very first grid step: node embedding into the VMEM-resident h -------
    @pl.when((l == 0) & (t == 0))
    def _():
        h_scr[...] = (jnp.dot(h0_ref[...].astype(bf16), emb_w_ref[...],
                              preferred_element_type=f32) + emb_b_ref[...])

    # -- layer start (first edge tile): reset agg, rebuild S for this layer --
    #    S = [h @ We1_src ; h @ We1_tgt ; We1_edge ; b_e1 ; 0pad]  (bf16)
    @pl.when(t == 0)
    def _():
        agg_scr[...] = jnp.zeros_like(agg_scr)
        hb = h_scr[...].astype(bf16)
        s_scr[0:n_pad, :] = jnp.dot(
            hb, wslab_ref[0:hid, :], preferred_element_type=f32).astype(bf16)
        s_scr[n_pad:2 * n_pad, :] = jnp.dot(
            hb, wslab_ref[hid:2 * hid, :], preferred_element_type=f32).astype(bf16)
        s_scr[2 * n_pad:2 * n_pad + eep, :] = wslab_ref[6 * hid:6 * hid + eep, :]

    # -- every edge tile: fused edge MLP (one gather matmul) + scatter-add ---
    g = g_ref[...]                                                     # (TE, KG) bf16
    z = jnp.dot(g, s_scr[...], preferred_element_type=f32)             # incl. b_e1
    mij = _silu(jnp.dot(_silu(z).astype(bf16), wslab_ref[2 * hid:3 * hid, :],
                        preferred_element_type=f32) + bslab_ref[0:1, :])
    ef = mij * emask_ref[...] if has_emask else mij                    # (TE, hid) f32
    # unsorted_segment_sum over edge_index[0]: contract the one-hot over edges.
    agg_scr[...] += lax.dot_general(
        g[:, 0:n_pad], ef.astype(bf16),
        dimension_numbers=(((0,), (0,)), ((), ())),
        preferred_element_type=f32)

    # -- layer end (last edge tile): node MLP + residual ----------------------
    @pl.when(t == last_t)
    def _():
        h = h_scr[...]
        agg = agg_scr[...] * inv_norm
        xcat = jnp.concatenate([h, agg], axis=1).astype(bf16)          # (N_pad, 2*hid)
        z2 = (jnp.dot(xcat, wslab_ref[3 * hid:5 * hid, :],
                      preferred_element_type=f32) + bslab_ref[1:2, :])
        h_new = h + (jnp.dot(_silu(z2).astype(bf16), wslab_ref[5 * hid:6 * hid, :],
                             preferred_element_type=f32) + bslab_ref[2:3, :])
        if has_nmask:
            h_new = h_new * nmask_ref[...]
        h_scr[...] = h_new

    # -- very last grid step: output embedding (+ optional node mask) ---------
    @pl.when((l == last_l) & (t == last_t))
    def _():
        out = (jnp.dot(h_scr[...].astype(bf16), out_w_ref[...],
                       preferred_element_type=f32) + out_b_ref[...])
        if has_nmask:
            out = out * nmask_ref[...]
        out_ref[...] = out


# ---------------------------------------------------------------------------
# Parameter init (PyTorch-Linear-like uniform init), packed for the kernel.
# Linear weights stored (in_features, out_features) so y = x @ W + b.
# ---------------------------------------------------------------------------
def init_params(key, in_node_nf, in_edge_nf, hidden_nf, out_node_nf, n_layers):
    assert hidden_nf % _LANE == 0, "hidden_nf must be a multiple of 128"
    assert in_edge_nf + 1 <= _EEP
    H = hidden_nf

    def lin(k, fan_in, fan_out):
        kw, kb = jax.random.split(k)
        bound = 1.0 / math.sqrt(fan_in)
        w = jax.random.uniform(kw, (fan_in, fan_out), jnp.float32, -bound, bound)
        b = jax.random.uniform(kb, (1, fan_out), jnp.float32, -bound, bound)
        return w, b

    keys = jax.random.split(key, 2 + n_layers)
    emb_w, emb_b = lin(keys[0], in_node_nf, H)
    out_w, out_b = lin(keys[1], H, out_node_nf)

    in_pad = _round_up(in_node_nf, 8)
    out_pad = _round_up(out_node_nf, _LANE)

    raw = {"emb_w": emb_w, "emb_b": emb_b, "out_w": out_w, "out_b": out_b,
           "layers": []}

    slab_w, slab_b = [], []
    for i in range(n_layers):
        lk = jax.random.split(keys[2 + i], 4)
        # edge_mlp: Linear(2H + in_edge_nf, H), SiLU, Linear(H, H), SiLU
        we1, be1 = lin(lk[0], 2 * H + in_edge_nf, H)
        we2, be2 = lin(lk[1], H, H)
        # node_mlp: Linear(2H, H), SiLU, Linear(H, H)
        wn1, bn1 = lin(lk[2], 2 * H, H)
        wn2, bn2 = lin(lk[3], H, H)
        raw["layers"].append({"we1": we1, "be1": be1, "we2": we2, "be2": be2,
                              "wn1": wn1, "bn1": bn1, "wn2": wn2, "bn2": bn2})

        # [We1_edge ; b_e1 ; 0pad]  (matched against the [edge_attr | 1 | 0] cols of G)
        we1eb = jnp.zeros((_EEP, H), jnp.float32)
        we1eb = we1eb.at[:in_edge_nf].set(we1[2 * H:])
        we1eb = we1eb.at[in_edge_nf].set(be1[0])

        # weight slab rows: [We1_src | We1_tgt | We2 | Wn1 | Wn2 | We1_edge+b_e1]
        slab_w.append(jnp.concatenate(
            [we1[:H], we1[H:2 * H], we2, wn1, wn2, we1eb], axis=0))   # (6H+EEP, H)
        slab_b.append(jnp.concatenate(
            [be2, bn1, bn2, jnp.zeros((5, H), jnp.float32)], axis=0))  # (8, H)

    params = {
        "emb_w": jnp.pad(emb_w, ((0, in_pad - in_node_nf), (0, 0))).astype(jnp.bfloat16),
        "emb_b": emb_b,
        "out_w": jnp.pad(out_w, ((0, 0), (0, out_pad - out_node_nf))).astype(jnp.bfloat16),
        "out_b": jnp.pad(out_b, ((0, 0), (0, out_pad - out_node_nf))),
        "slab_w": jnp.stack(slab_w, axis=0).astype(jnp.bfloat16),      # (L, 6H+EEP, H)
        "slab_b": jnp.stack(slab_b, axis=0),                           # (L, 8, H) f32
        "out_node_nf": out_node_nf,
        "ref": raw,
    }
    return params


# ---------------------------------------------------------------------------
# Pure-JAX f32 reference (mirrors the PyTorch module) -- used for checking only.
# ---------------------------------------------------------------------------
def gnn_reference(raw, h, edge_index, edge_attr, node_mask=None, edge_mask=None,
                  normalization_factor=1.0):
    row, col = edge_index
    n = h.shape[0]
    x = h @ raw["emb_w"] + raw["emb_b"]
    for lyr in raw["layers"]:
        e_in = jnp.concatenate([x[row], x[col], edge_attr], axis=1)
        mij = _silu(_silu(e_in @ lyr["we1"] + lyr["be1"]) @ lyr["we2"] + lyr["be2"])
        ef = mij * edge_mask if edge_mask is not None else mij
        agg = jax.ops.segment_sum(ef, row, num_segments=n) / normalization_factor
        x = x + _silu(jnp.concatenate([x, agg], axis=1) @ lyr["wn1"]
                      + lyr["bn1"]) @ lyr["wn2"] + lyr["bn2"]
        if node_mask is not None:
            x = x * node_mask
    out = x @ raw["out_w"] + raw["out_b"]
    if node_mask is not None:
        out = out * node_mask
    return out


# ---------------------------------------------------------------------------
# VMEM working-set estimate (bytes) for tile sizing / vmem_limit derivation.
# ---------------------------------------------------------------------------
def _vmem_bytes(n_p, in_pad, out_pad, hid, kg, te, has_emask, has_nmask):
    b = 2 * te * kg * 2                                  # G tile, double buffered, bf16
    if has_emask:
        b += 2 * te * 4
    b += 2 * n_p * in_pad * 4                            # h0
    if has_nmask:
        b += 2 * n_p * 4
    b += 2 * (in_pad * hid * 2 + hid * 4)                # emb_w / emb_b
    b += 2 * (hid * out_pad * 2 + out_pad * 4)           # out_w / out_b
    b += 2 * ((6 * hid + _EEP) * hid * 2 + 8 * hid * 4)  # per-layer slabs
    b += 2 * n_p * out_pad * 4                           # output block
    b += 2 * n_p * hid * 4                               # h + agg scratch
    b += kg * hid * 2                                    # S scratch
    return b


# ---------------------------------------------------------------------------
# Full GNN forward (one fused pallas_call)
# ---------------------------------------------------------------------------
def gnn_forward(params, h, edge_index, edge_attr, node_mask=None, edge_mask=None,
                normalization_factor=1.0, aggregation_method="sum", edge_tile=512):
    if aggregation_method != "sum":
        raise NotImplementedError("only aggregation_method='sum' is implemented")
    # TODO(synk): normalization_factor is baked in as a static Python scalar
    # (matches the module, where it is a constructor-time constant).

    h = jnp.asarray(h, jnp.float32)
    edge_attr = jnp.asarray(edge_attr, jnp.float32)
    row, col = edge_index

    n_nodes = int(h.shape[0])
    n_edges = int(row.shape[0])
    in_edge_nf = int(edge_attr.shape[1])
    hid = int(params["slab_w"].shape[2])
    n_layers = int(params["slab_w"].shape[0])
    in_pad = int(params["emb_w"].shape[0])
    out_pad = int(params["out_w"].shape[1])
    out_nf = int(params["out_node_nf"])
    assert hid % _LANE == 0
    assert in_edge_nf + 1 <= _EEP
    assert h.shape[1] <= in_pad

    has_emask = edge_mask is not None
    has_nmask = node_mask is not None

    # node axis padded to 128 (lane-dense one-hots, aligned VMEM slices)
    n_p = _round_up(n_nodes, _LANE)
    kg = 2 * n_p + _EEP

    # edge tile: start from edge_tile, shrink until the working set fits.
    VMEM_BUDGET = 40 * 1024 * 1024
    te = max(16, (min(edge_tile, _round_up(n_edges, 16)) // 16) * 16)
    while te > 16 and _vmem_bytes(n_p, in_pad, out_pad, hid, kg, te,
                                  has_emask, has_nmask) > VMEM_BUDGET:
        te = max(16, (te // 2 // 16) * 16)
    e_p = _round_up(n_edges, te)
    n_tiles = e_p // te
    est = _vmem_bytes(n_p, in_pad, out_pad, hid, kg, te, has_emask, has_nmask)
    vmem_limit = int(min(96 * 1024 * 1024, max(32 * 1024 * 1024, int(1.3 * est))))

    # Fused gather matrix G = [onehot(row) | onehot(col) | edge_attr | 1 | 0pad], bf16.
    # Padded edge rows are all-zero -> they contribute nothing to the scatter; padded
    # node columns are never selected -> padded agg/h rows never reach real outputs.
    grow = jax.nn.one_hot(row, n_p, dtype=jnp.bfloat16)
    gcol = jax.nn.one_hot(col, n_p, dtype=jnp.bfloat16)
    ones = jnp.ones((n_edges, 1), jnp.bfloat16)
    zpad = jnp.zeros((n_edges, _EEP - in_edge_nf - 1), jnp.bfloat16)
    g = jnp.concatenate([grow, gcol, edge_attr.astype(jnp.bfloat16), ones, zpad], axis=1)
    g = jnp.pad(g, ((0, e_p - n_edges), (0, 0)))

    h0 = jnp.pad(h, ((0, n_p - n_nodes), (0, in_pad - h.shape[1])))

    args = [h0, g]
    in_specs = [
        pl.BlockSpec((n_p, in_pad), lambda l, t: (0, 0)),
        pl.BlockSpec((te, kg), lambda l, t: (t, 0)),
    ]
    if has_emask:
        em = jnp.pad(jnp.asarray(edge_mask, jnp.float32), ((0, e_p - n_edges), (0, 0)))
        args.append(em)
        in_specs.append(pl.BlockSpec((te, 1), lambda l, t: (t, 0)))
    if has_nmask:
        nm = jnp.pad(jnp.asarray(node_mask, jnp.float32), ((0, n_p - n_nodes), (0, 0)))
        args.append(nm)
        in_specs.append(pl.BlockSpec((n_p, 1), lambda l, t: (0, 0)))
    for name in ("emb_w", "emb_b", "out_w", "out_b"):
        p = params[name]
        args.append(p)
        in_specs.append(pl.BlockSpec(p.shape, lambda l, t: (0, 0)))
    # per-layer packed slabs: 2 DMA descriptors per layer, leading layer dim squeezed
    slab_w, slab_b = params["slab_w"], params["slab_b"]
    args += [slab_w, slab_b]
    in_specs += [
        pl.BlockSpec((None,) + slab_w.shape[1:], lambda l, t: (l, 0, 0)),
        pl.BlockSpec((None,) + slab_b.shape[1:], lambda l, t: (l, 0, 0)),
    ]

    kern = functools.partial(
        _fused_gnn_kernel,
        float(1.0 / float(normalization_factor)),
        has_emask, has_nmask, n_p, hid, _EEP)

    out_padded = pl.pallas_call(
        kern,
        out_shape=jax.ShapeDtypeStruct((n_p, out_pad), jnp.float32),
        grid_spec=pltpu.PrefetchScalarGridSpec(
            num_scalar_prefetch=0,
            grid=(n_layers, n_tiles),
            in_specs=in_specs,
            out_specs=pl.BlockSpec((n_p, out_pad), lambda l, t: (0, 0)),
            scratch_shapes=[
                pltpu.VMEM((n_p, hid), jnp.float32),    # h, carried across layers
                pltpu.VMEM((n_p, hid), jnp.float32),    # per-layer agg accumulator
                pltpu.VMEM((kg, hid), jnp.bfloat16),    # S = [h@We1s; h@We1t; We1e; b_e1]
            ],
        ),
        compiler_params=pltpu.CompilerParams(
            # both axes carry state in VMEM scratch -> sequential
            dimension_semantics=("arbitrary", "arbitrary"),
            vmem_limit_bytes=vmem_limit,
        ),
    )(*args)
    return out_padded[:n_nodes, :out_nf]


if __name__ == "__main__":
    key = jax.random.PRNGKey(0)

    N_NODES = 16
    IN_NODE_NF = 4
    IN_EDGE_NF = 2
    HIDDEN_NF = 128
    OUT_NODE_NF = 4
    N_LAYERS = 4

    # fully-connected graph without self loops: E = N*(N-1) = 240
    rows, cols = [], []
    for i in range(N_NODES):
        for j in range(N_NODES):
            if i != j:
                rows.append(i)
                cols.append(j)
    row = jnp.asarray(rows, jnp.int32)
    col = jnp.asarray(cols, jnp.int32)
    n_edges = int(row.shape[0])

    k_h, k_e, k_p = jax.random.split(key, 3)
    h = jax.random.normal(k_h, (N_NODES, IN_NODE_NF), jnp.float32)
    edge_attr = jax.random.normal(k_e, (n_edges, IN_EDGE_NF), jnp.float32)

    params = init_params(k_p, IN_NODE_NF, IN_EDGE_NF, HIDDEN_NF, OUT_NODE_NF, N_LAYERS)

    out = gnn_forward(params, h, (row, col), edge_attr,
                      node_mask=None, edge_mask=None, normalization_factor=1.0)
    jax.block_until_ready(out)
    assert out.shape == (N_NODES, OUT_NODE_NF)
    assert bool(jnp.all(jnp.isfinite(out)))

    # Pure-JAX f32 reference of the PyTorch module.  The kernel feeds the MXU
    # bf16 inputs (f32 accumulation), so compare with a loose tolerance.
    ref = gnn_reference(params["ref"], h, (row, col), edge_attr,
                        normalization_factor=1.0)
    assert bool(jnp.allclose(out, ref, rtol=1e-1, atol=1e-1)), float(
        jnp.max(jnp.abs(out - ref)))

    # Masked code path with all-ones masks must reproduce the unmasked result.
    node_mask = jnp.ones((N_NODES, 1), jnp.float32)
    edge_mask = jnp.ones((n_edges, 1), jnp.float32)
    out_m = gnn_forward(params, h, (row, col), edge_attr,
                        node_mask=node_mask, edge_mask=edge_mask,
                        normalization_factor=1.0)
    jax.block_until_ready(out_m)
    assert bool(jnp.allclose(out, out_m, rtol=1e-5, atol=1e-6))

    print("KERNEL_OK")
</pallas_src>

<mosaic_0001>
module attributes {stable_mosaic.version = 11 : i64} {
  func.func @_fused_gnn_kernel(%arg0: i32, %arg1: i32, %arg2: memref<128x8xf32, #tpu.memory_space<vmem>>, %arg3: memref<240x272xbf16, #tpu.memory_space<vmem>>, %arg4: memref<8x128xbf16, #tpu.memory_space<vmem>>, %arg5: memref<1x128xf32, #tpu.memory_space<vmem>>, %arg6: memref<128x128xbf16, #tpu.memory_space<vmem>>, %arg7: memref<1x128xf32, #tpu.memory_space<vmem>>, %arg8: memref<1x784x128xbf16, #tpu.memory_space<vmem>>, %arg9: memref<1x8x128xf32, #tpu.memory_space<vmem>>, %arg10: memref<128x128xf32, #tpu.memory_space<vmem>>, %arg11: memref<128x128xf32, #tpu.memory_space<vmem>>, %arg12: memref<128x128xf32, #tpu.memory_space<vmem>>, %arg13: memref<272x128xbf16, #tpu.memory_space<vmem>>) attributes {dimension_semantics = [#tpu.dimension_semantics<arbitrary>, #tpu.dimension_semantics<arbitrary>], iteration_bounds = array<i64: 4, 1>, scalar_prefetch = 0 : i64, scratch_operands = 3 : i64, tpu.core_type = #tpu.core_type<tc>, window_params = [{pipeline_mode = #tpu.pipeline_mode<synchronous>, transform_indices = @transform_0, window_bounds = array<i64: 128, 8>}, {transform_indices = @transform_1, window_bounds = array<i64: 240, 272>}, {pipeline_mode = #tpu.pipeline_mode<synchronous>, transform_indices = @transform_2, window_bounds = array<i64: 8, 128>}, {pipeline_mode = #tpu.pipeline_mode<synchronous>, transform_indices = @transform_3, window_bounds = array<i64: 1, 128>}, {pipeline_mode = #tpu.pipeline_mode<synchronous>, transform_indices = @transform_4, window_bounds = array<i64: 128, 128>}, {pipeline_mode = #tpu.pipeline_mode<synchronous>, transform_indices = @transform_5, window_bounds = array<i64: 1, 128>}, {transform_indices = @transform_6, window_bounds = array<i64: 1, 784, 128>}, {transform_indices = @transform_7, window_bounds = array<i64: 1, 8, 128>}, {pipeline_mode = #tpu.pipeline_mode<synchronous>, transform_indices = @transform_8, window_bounds = array<i64: 128, 128>}]} {
    %c0_i32 = arith.constant 0 : i32
    %0 = arith.cmpi eq, %arg0, %c0_i32 : i32
    %c0_i32_0 = arith.constant 0 : i32
    %1 = arith.cmpi eq, %arg1, %c0_i32_0 : i32
    %2 = arith.andi %0, %1 : i1
    %3 = arith.extui %2 : i1 to i32
    %c0_i32_1 = arith.constant 0 : i32
    %4 = arith.cmpi ne, %3, %c0_i32_1 : i32
    scf.if %4 {
      %c0_24 = arith.constant 0 : index
      %c0_25 = arith.constant 0 : index
      %45 = vector.load %arg2[%c0_24, %c0_25] : memref<128x8xf32, #tpu.memory_space<vmem>>, vector<128x8xf32>
      %46 = arith.truncf %45 : vector<128x8xf32> to vector<128x8xbf16>
      %c0_26 = arith.constant 0 : index
      %c0_27 = arith.constant 0 : index
      %47 = vector.load %arg4[%c0_26, %c0_27] : memref<8x128xbf16, #tpu.memory_space<vmem>>, vector<8x128xbf16>
      %cst_28 = arith.constant dense<0.000000e+00> : vector<128x128xf32>
      %48 = tpu.matmul %46, %47, %cst_28 {dimension_numbers = #tpu.dot_dimension_numbers<[1], [0], [0], [1], [0, 0, 1, 1], [], []>} : vector<128x8xbf16>, vector<8x128xbf16>, vector<128x128xf32> -> vector<128x128xf32>
      %c0_29 = arith.constant 0 : index
      %c0_30 = arith.constant 0 : index
      %49 = vector.load %arg5[%c0_29, %c0_30] : memref<1x128xf32, #tpu.memory_space<vmem>>, vector<1x128xf32>
      %50 = vector.broadcast %49 : vector<1x128xf32> to vector<128x128xf32>
      %51 = arith.addf %48, %50 : vector<128x128xf32>
      %c0_31 = arith.constant 0 : index
      %c0_32 = arith.constant 0 : index
      %52 = vector.load %arg11[%c0_31, %c0_32] : memref<128x128xf32, #tpu.memory_space<vmem>>, vector<128x128xf32>
      tpu.vector_store %arg11[%c0_31, %c0_32], %51 {strides = array<i32>} : memref<128x128xf32, #tpu.memory_space<vmem>>, vector<128x128xf32>,
    } else {
    }
    %c0_i32_2 = arith.constant 0 : i32
    %5 = arith.cmpi eq, %arg1, %c0_i32_2 : i32
    %6 = arith.extui %5 : i1 to i32
    %c0_i32_3 = arith.constant 0 : i32
    %7 = arith.cmpi ne, %6, %c0_i32_3 : i32
    scf.if %7 {
      %cst_24 = arith.constant 0.000000e+00 : f32
      %45 = vector.broadcast %cst_24 : f32 to vector<128x128xf32>
      %c0_25 = arith.constant 0 : index
      %c0_26 = arith.constant 0 : index
      %46 = vector.load %arg12[%c0_25, %c0_26] : memref<128x128xf32, #tpu.memory_space<vmem>>, vector<128x128xf32>
      tpu.vector_store %arg12[%c0_25, %c0_26], %45 {strides = array<i32>} : memref<128x128xf32, #tpu.memory_space<vmem>>, vector<128x128xf32>,
      %c0_27 = arith.constant 0 : index
      %c0_28 = arith.constant 0 : index
      %47 = vector.load %arg11[%c0_27, %c0_28] : memref<128x128xf32, #tpu.memory_space<vmem>>, vector<128x128xf32>
      %48 = arith.truncf %47 : vector<128x128xf32> to vector<128x128xbf16>
      %c0_29 = arith.constant 0 : index
      %c0_30 = arith.constant 0 : index
      %c0_31 = arith.constant 0 : index
      %49 = vector.load %arg8[%c0_29, %c0_30, %c0_31] : memref<1x784x128xbf16, #tpu.memory_space<vmem>>, vector<1x128x128xbf16>
      %50 = vector.shape_cast %49 : vector<1x128x128xbf16> to vector<128x128xbf16>
      %cst_32 = arith.constant dense<0.000000e+00> : vector<128x128xf32>
      %51 = tpu.matmul %48, %50, %cst_32 {dimension_numbers = #tpu.dot_dimension_numbers<[1], [0], [0], [1], [0, 0, 1, 1], [], []>} : vector<128x128xbf16>, vector<128x128xbf16>, vector<128x128xf32> -> vector<128x128xf32>
      %52 = arith.truncf %51 : vector<128x128xf32> to vector<128x128xbf16>
      %c0_33 = arith.constant 0 : index
      %c0_34 = arith.constant 0 : index
      %53 = vector.load %arg13[%c0_33, %c0_34] : memref<272x128xbf16, #tpu.memory_space<vmem>>, vector<128x128xbf16>
      tpu.vector_store %arg13[%c0_33, %c0_34], %52 {strides = array<i32>} : memref<272x128xbf16, #tpu.memory_space<vmem>>, vector<128x128xbf16>,
      %c0_35 = arith.constant 0 : index
      %c128 = arith.constant 128 : index
      %c0_36 = arith.constant 0 : index
      %54 = vector.load %arg8[%c0_35, %c128, %c0_36] : memref<1x784x128xbf16, #tpu.memory_space<vmem>>, vector<1x128x128xbf16>
      %55 = vector.shape_cast %54 : vector<1x128x128xbf16> to vector<128x128xbf16>
      %cst_37 = arith.constant dense<0.000000e+00> : vector<128x128xf32>
      %56 = tpu.matmul %48, %55, %cst_37 {dimension_numbers = #tpu.dot_dimension_numbers<[1], [0], [0], [1], [0, 0, 1, 1], [], []>} : vector<128x128xbf16>, vector<128x128xbf16>, vector<128x128xf32> -> vector<128x128xf32>
      %57 = arith.truncf %56 : vector<128x128xf32> to vector<128x128xbf16>
      %c128_38 = arith.constant 128 : index
      %c0_39 = arith.constant 0 : index
      %58 = vector.load %arg13[%c128_38, %c0_39] : memref<272x128xbf16, #tpu.memory_space<vmem>>, vector<128x128xbf16>
      tpu.vector_store %arg13[%c128_38, %c0_39], %57 {strides = array<i32>} : memref<272x128xbf16, #tpu.memory_space<vmem>>, vector<128x128xbf16>,
      %c0_40 = arith.constant 0 : index
      %c768 = arith.constant 768 : index
      %c0_41 = arith.constant 0 : index
      %59 = vector.load %arg8[%c0_40, %c768, %c0_41] : memref<1x784x128xbf16, #tpu.memory_space<vmem>>, vector<1x16x128xbf16>
      %60 = vector.shape_cast %59 : vector<1x16x128xbf16> to vector<16x128xbf16>
      %c256_42 = arith.constant 256 : index
      %c0_43 = arith.constant 0 : index
      %61 = vector.load %arg13[%c256_42, %c0_43] : memref<272x128xbf16, #tpu.memory_space<vmem>>, vector<16x128xbf16>
      tpu.vector_store %arg13[%c256_42, %c0_43], %60 {strides = array<i32>} : memref<272x128xbf16, #tpu.memory_space<vmem>>, vector<16x128xbf16>,
    } else {
    }
    %c0 = arith.constant 0 : index
    %c0_4 = arith.constant 0 : index
    %8 = vector.load %arg3[%c0, %c0_4] : memref<240x272xbf16, #tpu.memory_space<vmem>>, vector<240x272xbf16>
    %c0_5 = arith.constant 0 : index
    %c0_6 = arith.constant 0 : index
    %9 = vector.load %arg13[%c0_5, %c0_6] : memref<272x128xbf16, #tpu.memory_space<vmem>>, vector<272x128xbf16>
    %cst = arith.constant dense<0.000000e+00> : vector<240x128xf32>
    %10 = tpu.matmul %8, %9, %cst {dimension_numbers = #tpu.dot_dimension_numbers<[1], [0], [0], [1], [0, 0, 1, 1], [], []>} : vector<240x272xbf16>, vector<272x128xbf16>, vector<240x128xf32> -> vector<240x128xf32>
    %11 = arith.negf %10 : vector<240x128xf32>
    %12 = math.exp %11 : vector<240x128xf32>
    %cst_7 = arith.constant 1.000000e+00 : f32
    %13 = vector.broadcast %cst_7 : f32 to vector<240x128xf32>
    %14 = arith.addf %13, %12 : vector<240x128xf32>
    %15 = arith.divf %13, %14 : vector<240x128xf32>
    %16 = arith.mulf %10, %15 : vector<240x128xf32>
    %17 = arith.truncf %16 : vector<240x128xf32> to vector<240x128xbf16>
    %c0_8 = arith.constant 0 : index
    %c256 = arith.constant 256 : index
    %c0_9 = arith.constant 0 : index
    %18 = vector.load %arg8[%c0_8, %c256, %c0_9] : memref<1x784x128xbf16, #tpu.memory_space<vmem>>, vector<1x128x128xbf16>
    %19 = vector.shape_cast %18 : vector<1x128x128xbf16> to vector<128x128xbf16>
    %cst_10 = arith.constant dense<0.000000e+00> : vector<240x128xf32>
    %20 = tpu.matmul %17, %19, %cst_10 {dimension_numbers = #tpu.dot_dimension_numbers<[1], [0], [0], [1], [0, 0, 1, 1], [], []>} : vector<240x128xbf16>, vector<128x128xbf16>, vector<240x128xf32> -> vector<240x128xf32>
    %c0_11 = arith.constant 0 : index
    %c0_12 = arith.constant 0 : index
    %c0_13 = arith.constant 0 : index
    %21 = vector.load %arg9[%c0_11, %c0_12, %c0_13] : memref<1x8x128xf32, #tpu.memory_space<vmem>>, vector<1x1x128xf32>
    %22 = vector.shape_cast %21 : vector<1x1x128xf32> to vector<1x128xf32>
    %23 = vector.broadcast %22 : vector<1x128xf32> to vector<240x128xf32>
    %24 = arith.addf %20, %23 : vector<240x128xf32>
    %25 = arith.negf %24 : vector<240x128xf32>
    %26 = math.exp %25 : vector<240x128xf32>
    %cst_14 = arith.constant 1.000000e+00 : f32
    %27 = vector.broadcast %cst_14 : f32 to vector<240x128xf32>
    %28 = arith.addf %27, %26 : vector<240x128xf32>
    %29 = arith.divf %27, %28 : vector<240x128xf32>
    %30 = arith.mulf %24, %29 : vector<240x128xf32>
    %c0_15 = arith.constant 0 : index
    %c0_16 = arith.constant 0 : index
    %31 = vector.load %arg12[%c0_15, %c0_16] : memref<128x128xf32, #tpu.memory_space<vmem>>, vector<128x128xf32>
    %32 = vector.extract_strided_slice %8 {offsets = [0, 0], sizes = [240, 128], strides = [1, 1]} : vector<240x272xbf16> to vector<240x128xbf16>
    %33 = arith.truncf %30 : vector<240x128xf32> to vector<240x128xbf16>
    %cst_17 = arith.constant dense<0.000000e+00> : vector<128x128xf32>
    %34 = tpu.matmul %32, %33, %cst_17 {dimension_numbers = #tpu.dot_dimension_numbers<[0], [0], [1], [1], [0, 1, 1, 1], [], []>} : vector<240x128xbf16>, vector<240x128xbf16>, vector<128x128xf32> -> vector<128x128xf32>
    %35 = arith.addf %31, %34 : vector<128x128xf32>
    %c0_18 = arith.constant 0 : index
    %c0_19 = arith.constant 0 : index
    %36 = vector.load %arg12[%c0_18, %c0_19] : memref<128x128xf32, #tpu.memory_space<vmem>>, vector<128x128xf32>
    tpu.vector_store %arg12[%c0_18, %c0_19], %35 {strides = array<i32>} : memref<128x128xf32, #tpu.memory_space<vmem>>, vector<128x128xf32>,
    %c0_i32_20 = arith.constant 0 : i32
    %37 = arith.cmpi eq, %arg1, %c0_i32_20 : i32
    %38 = arith.extui %37 : i1 to i32
    %c0_i32_21 = arith.constant 0 : i32
    %39 = arith.cmpi ne, %38, %c0_i32_21 : i32
    scf.if %39 {
      %c0_24 = arith.constant 0 : index
      %c0_25 = arith.constant 0 : index
      %45 = vector.load %arg11[%c0_24, %c0_25] : memref<128x128xf32, #tpu.memory_space<vmem>>, vector<128x128xf32>
      %c0_26 = arith.constant 0 : index
      %c0_27 = arith.constant 0 : index
      %46 = vector.load %arg12[%c0_26, %c0_27] : memref<128x128xf32, #tpu.memory_space<vmem>>, vector<128x128xf32>
      %cst_28 = arith.constant 1.000000e+00 : f32
      %47 = vector.broadcast %cst_28 : f32 to vector<128x128xf32>
      %48 = arith.mulf %46, %47 : vector<128x128xf32>
      %49 = tpu.concatenate %45, %48 in 1 : vector<128x128xf32>, vector<128x128xf32> -> vector<128x256xf32>
      %50 = arith.truncf %49 : vector<128x256xf32> to vector<128x256xbf16>
      %c0_29 = arith.constant 0 : index
      %c384 = arith.constant 384 : index
      %c0_30 = arith.constant 0 : index
      %51 = vector.load %arg8[%c0_29, %c384, %c0_30] : memref<1x784x128xbf16, #tpu.memory_space<vmem>>, vector<1x256x128xbf16>
      %52 = vector.shape_cast %51 : vector<1x256x128xbf16> to vector<256x128xbf16>
      %cst_31 = arith.constant dense<0.000000e+00> : vector<128x128xf32>
      %53 = tpu.matmul %50, %52, %cst_31 {dimension_numbers = #tpu.dot_dimension_numbers<[1], [0], [0], [1], [0, 0, 1, 1], [], []>} : vector<128x256xbf16>, vector<256x128xbf16>, vector<128x128xf32> -> vector<128x128xf32>
      %c0_32 = arith.constant 0 : index
      %c1 = arith.constant 1 : index
      %c0_33 = arith.constant 0 : index
      %54 = vector.load %arg9[%c0_32, %c1, %c0_33] : memref<1x8x128xf32, #tpu.memory_space<vmem>>, vector<1x1x128xf32>
      %55 = vector.shape_cast %54 : vector<1x1x128xf32> to vector<1x128xf32>
      %56 = vector.broadcast %55 : vector<1x128xf32> to vector<128x128xf32>
      %57 = arith.addf %53, %56 : vector<128x128xf32>
      %58 = arith.negf %57 : vector<128x128xf32>
      %59 = math.exp %58 : vector<128x128xf32>
      %cst_34 = arith.constant 1.000000e+00 : f32
      %60 = vector.broadcast %cst_34 : f32 to vector<128x128xf32>
      %61 = arith.addf %60, %59 : vector<128x128xf32>
      %62 = arith.divf %60, %61 : vector<128x128xf32>
      %63 = arith.mulf %57, %62 : vector<128x128xf32>
      %64 = arith.truncf %63 : vector<128x128xf32> to vector<128x128xbf16>
      %c0_35 = arith.constant 0 : index
      %c640 = arith.constant 640 : index
      %c0_36 = arith.constant 0 : index
      %65 = vector.load %arg8[%c0_35, %c640, %c0_36] : memref<1x784x128xbf16, #tpu.memory_space<vmem>>, vector<1x128x128xbf16>
      %66 = vector.shape_cast %65 : vector<1x128x128xbf16> to vector<128x128xbf16>
      %cst_37 = arith.constant dense<0.000000e+00> : vector<128x128xf32>
      %67 = tpu.matmul %64, %66, %cst_37 {dimension_numbers = #tpu.dot_dimension_numbers<[1], [0], [0], [1], [0, 0, 1, 1], [], []>} : vector<128x128xbf16>, vector<128x128xbf16>, vector<128x128xf32> -> vector<128x128xf32>
      %c0_38 = arith.constant 0 : index
      %c2 = arith.constant 2 : index
      %c0_39 = arith.constant 0 : index
      %68 = vector.load %arg9[%c0_38, %c2, %c0_39] : memref<1x8x128xf32, #tpu.memory_space<vmem>>, vector<1x1x128xf32>
      %69 = vector.shape_cast %68 : vector<1x1x128xf32> to vector<1x128xf32>
      %70 = vector.broadcast %69 : vector<1x128xf32> to vector<128x128xf32>
      %71 = arith.addf %67, %70 : vector<128x128xf32>
      %72 = arith.addf %45, %71 : vector<128x128xf32>
      %c0_40 = arith.constant 0 : index
      %c0_41 = arith.constant 0 : index
      %73 = vector.load %arg11[%c0_40, %c0_41] : memref<128x128xf32, #tpu.memory_space<vmem>>, vector<128x128xf32>
      tpu.vector_store %arg11[%c0_40, %c0_41], %72 {strides = array<i32>} : memref<128x128xf32, #tpu.memory_space<vmem>>, vector<128x128xf32>,
    } else {
    }
    %c3_i32 = arith.constant 3 : i32
    %40 = arith.cmpi eq, %arg0, %c3_i32 : i32
    %c0_i32_22 = arith.constant 0 : i32
    %41 = arith.cmpi eq, %arg1, %c0_i32_22 : i32
    %42 = arith.andi %40, %41 : i1
    %43 = arith.extui %42 : i1 to i32
    %c0_i32_23 = arith.constant 0 : i32
    %44 = arith.cmpi ne, %43, %c0_i32_23 : i32
    scf.if %44 {
      %c0_24 = arith.constant 0 : index
      %c0_25 = arith.constant 0 : index
      %45 = vector.load %arg11[%c0_24, %c0_25] : memref<128x128xf32, #tpu.memory_space<vmem>>, vector<128x128xf32>
      %46 = arith.truncf %45 : vector<128x128xf32> to vector<128x128xbf16>
      %c0_26 = arith.constant 0 : index
      %c0_27 = arith.constant 0 : index
      %47 = vector.load %arg6[%c0_26, %c0_27] : memref<128x128xbf16, #tpu.memory_space<vmem>>, vector<128x128xbf16>
      %cst_28 = arith.constant dense<0.000000e+00> : vector<128x128xf32>
      %48 = tpu.matmul %46, %47, %cst_28 {dimension_numbers = #tpu.dot_dimension_numbers<[1], [0], [0], [1], [0, 0, 1, 1], [], []>} : vector<128x128xbf16>, vector<128x128xbf16>, vector<128x128xf32> -> vector<128x128xf32>
      %c0_29 = arith.constant 0 : index
      %c0_30 = arith.constant 0 : index
      %49 = vector.load %arg7[%c0_29, %c0_30] : memref<1x128xf32, #tpu.memory_space<vmem>>, vector<1x128xf32>
      %50 = vector.broadcast %49 : vector<1x128xf32> to vector<128x128xf32>
      %51 = arith.addf %48, %50 : vector<128x128xf32>
      %c0_31 = arith.constant 0 : index
      %c0_32 = arith.constant 0 : index
      %52 = vector.load %arg10[%c0_31, %c0_32] : memref<128x128xf32, #tpu.memory_space<vmem>>, vector<128x128xf32>
      tpu.vector_store %arg10[%c0_31, %c0_32], %51 {strides = array<i32>} : memref<128x128xf32, #tpu.memory_space<vmem>>, vector<128x128xf32>,
    } else {
    }
    return
  }
  func.func @transform_0(%arg0: i32, %arg1: i32) -> (i32, i32) {
    %c0_i32 = arith.constant 0 : i32
    %c0_i32_0 = arith.constant 0 : i32
    %c0_i32_1 = arith.constant 0 : i32
    return %c0_i32, %c0_i32_0 : i32, i32
  }
  func.func @transform_1(%arg0: i32, %arg1: i32) -> (i32, i32) {
    %c0_i32 = arith.constant 0 : i32
    %c0_i32_0 = arith.constant 0 : i32
    return %arg1, %c0_i32 : i32, i32
  }
  func.func @transform_2(%arg0: i32, %arg1: i32) -> (i32, i32) {
    %c0_i32 = arith.constant 0 : i32
    %c0_i32_0 = arith.constant 0 : i32
    %c0_i32_1 = arith.constant 0 : i32
    return %c0_i32, %c0_i32_0 : i32, i32
  }
  func.func @transform_3(%arg0: i32, %arg1: i32) -> (i32, i32) {
    %c0_i32 = arith.constant 0 : i32
    %c0_i32_0 = arith.constant 0 : i32
    %c0_i32_1 = arith.constant 0 : i32
    return %c0_i32, %c0_i32_0 : i32, i32
  }
  func.func @transform_4(%arg0: i32, %arg1: i32) -> (i32, i32) {
    %c0_i32 = arith.constant 0 : i32
    %c0_i32_0 = arith.constant 0 : i32
    %c0_i32_1 = arith.constant 0 : i32
    return %c0_i32, %c0_i32_0 : i32, i32
  }
  func.func @transform_5(%arg0: i32, %arg1: i32) -> (i32, i32) {
    %c0_i32 = arith.constant 0 : i32
    %c0_i32_0 = arith.constant 0 : i32
    %c0_i32_1 = arith.constant 0 : i32
    return %c0_i32, %c0_i32_0 : i32, i32
  }
  func.func @transform_6(%arg0: i32, %arg1: i32) -> (i32, i32, i32) {
    %c0_i32 = arith.constant 0 : i32
    %c0_i32_0 = arith.constant 0 : i32
    %c0_i32_1 = arith.constant 0 : i32
    return %arg0, %c0_i32, %c0_i32_0 : i32, i32, i32
  }
  func.func @transform_7(%arg0: i32, %arg1: i32) -> (i32, i32, i32) {
    %c0_i32 = arith.constant 0 : i32
    %c0_i32_0 = arith.constant 0 : i32
    %c0_i32_1 = arith.constant 0 : i32
    return %arg0, %c0_i32, %c0_i32_0 : i32, i32, i32
  }
  func.func @transform_8(%arg0: i32, %arg1: i32) -> (i32, i32) {
    %c0_i32 = arith.constant 0 : i32
    %c0_i32_0 = arith.constant 0 : i32
    %c0_i32_1 = arith.constant 0 : i32
    return %c0_i32, %c0_i32_0 : i32, i32
  }
}

</mosaic_0001>

<llo_original>
// kernel: tpu_custom_call.1
$region0: #{tpu_custom_call.1}
  #allocation0 [shape = 'u32[]', space=smem, size = 0x4, offset = 0x4, fixed_abs, tag = 'smem constant byte address 0x4 - core index']
  #allocation1 [shape = 'u32[144,128]{1,0:T(1,128)}', space=vmem, size = 0x12000, scoped, tag = 'internal scratch']
  #allocation2 [shape = 'f32[128,128]{1,0:T(8,128)}', space=vmem, size = 0x10000, scoped, tag = 'scratch operand']
  #allocation3 [shape = 'f32[128,128]{1,0:T(8,128)}', space=vmem, size = 0x10000, scoped, tag = 'scratch operand']
  #allocation4 [shape = 'bf16[272,128]{1,0:T(16,128)(2,1)}', space=vmem, size = 0x11000, scoped, tag = 'scratch operand']
  %s0 = inlined_call_operand.vmem [shape: f32[128,8], index: 0, kind: input, shape index: {}]
  %s1 = inlined_call_operand.vmem [shape: bf16[240,272], index: 1, kind: input, shape index: {}]
  %s2 = inlined_call_operand.vmem [shape: bf16[8,128], index: 2, kind: input, shape index: {}]
  %s3 = inlined_call_operand.vmem [shape: f32[1,128], index: 3, kind: input, shape index: {}]
  %s4 = inlined_call_operand.vmem [shape: bf16[128,128], index: 4, kind: input, shape index: {}]
  %s5 = inlined_call_operand.vmem [shape: f32[1,128], index: 5, kind: input, shape index: {}]
  %s6 = inlined_call_operand.hbm [shape: bf16[4,784,128], index: 6, kind: input, shape index: {}]
  %s7 = inlined_call_operand.vmem [shape: f32[4,8,128], index: 7, kind: input, shape index: {}]
  %s8 = inlined_call_operand.hbm [shape: f32[128,128], index: 8, kind: output, shape index: {}]
  %s9 = sld [smem:[#allocation0]]
  $region85: #{tpu_custom_call.1} parent=0
    _
  %s11 = ssub.s32 1, %s9
  %s12 = scalar_select 0, %s11, %s9
  $region1: #{tpu_custom_call.1} parent=0
    #allocation5 [shape = 'u8[401408]{0}', space=vmem, size = 0x62000, scoped, tag = 'input window, operand 6']
    #allocation6 [shape = 's32[2]{0}', space=sflag, size = 0x8, scoped, tag = 'scoped memory for tpu_custom_call.1']
    #allocation7 [shape = 's32[2]{0}', space=sflag, size = 0x8, scoped, tag = 'scoped memory for tpu_custom_call.1']
    #allocation8 [shape = 'u8[65536]{0}', space=vmem, size = 0x10000, scoped, tag = 'output window, operand 0, single buffered']
    %13 = vsyncpa [#allocation6], 0
    %s14 = scalar_lea.sflag [#allocation6], 1
    %15 = vsyncpa %s14, 0
    %16 = vsyncpa [#allocation7], 0
    loop: start=0, step=1, limit=6
    $region2: #{tpu_custom_call.1} parent=1 // loop_pre_header
      _
    $region3: #{tpu_custom_call.1} parent=1 // loop_header
      %s18 = sphi 0, %s22
      %p19 = scmp.ge.s32.totalorder %s18, 6
      %s25 = sphi 0, %s37
      %s26 = sphi 0, %s33
      %s27 = sphi 0, %s25
      %s28 = sphi 0, %s26
      %s29 = sphi 0, %s27
      %s30 = sphi 0, %s28
      %s38 = sphi 0, %s38
      %s40 = sphi 0, %s38
      %s41 = sphi 0, %s40
      %s55 = sphi 0, %s41
      %s61 = sphi 0, %s63
      %s64 = sphi 0, %s61
      %s65 = sphi 0, %s64
      %s81 = sphi 0, %s65
      %s85 = sphi 0, %s85
      %s87 = sphi 0, %s85
      %s88 = sphi 0, %s87
      %s102 = sphi 0, %s88
      %s106 = sphi 0, %s106
      %s108 = sphi 0, %s106
      %s109 = sphi 0, %s108
      %s123 = sphi 0, %s109
      %s127 = sphi 0, %s127
      %s129 = sphi 0, %s127
      %s130 = sphi 0, %s129
      %s144 = sphi 0, %s130
      %s148 = sphi 0, %s148
      %s150 = sphi 0, %s148
      %s151 = sphi 0, %s150
      %s165 = sphi 0, %s151
      %s171 = sphi 0, %s173
      %s174 = sphi 0, %s171
      %s175 = sphi 0, %s174
      %s191 = sphi 0, %s175
      %s197 = sphi 0, %s199
      %s200 = sphi 0, %s197
      %s201 = sphi 0, %s200
      %s217 = sphi 0, %s201
      %s221 = sphi 0, %s221
      %s223 = sphi 0, %s221
      %s224 = sphi 0, %s223
      %s238 = sphi 0, %s224
    $region4: #{tpu_custom_call.1} parent=1 // loop_header_branch
      %21 = sbr.rel (%p19) target = $region8
    $region5: #{tpu_custom_call.1} parent=1 // loop_body
      %s23 = ssub.s32 %s18, 1
      %s24 = ssub.s32 %s18, 2
      %s31 = sadd.s32 1, %s26
      %p32 = scmp.ge.s32.totalorder %s31, 1
      %s33 = scalar_select %p32, 0, %s31
      %s34 = sadd.s32 1, %s25
      %s35 = scalar_select %p32, %s34, %s25
      %p36 = scmp.ge.s32.totalorder %s35, 4
      %s37 = scalar_select %p36, 0, %s35
      %s39 = sadd.s32 %s38, 1
      %p42 = scmp.eq.s32.totalorder %s18, 3
      %p43 = scmp.ne.s32.totalorder %s38, %s40
      %p44 = scmp.eq.s32.totalorder %s18, 0
      %p45 = por %p43, %p44
      %p46 = scmp.ne.s32.totalorder %s38, %s40
      %p47 = scmp.eq.s32.totalorder %s23, 3
      %p48 = por %p46, %p47
      %p49 = scmp.ne.s32.totalorder %s40, %s41
      %p50 = scmp.eq.s32.totalorder %s23, 0
      %p51 = por %p49, %p50
      %p52 = scmp.ne.s32.totalorder %s40, %s41
      %p53 = scmp.eq.s32.totalorder %s24, 3
      %p54 = por %p52, %p53
      %p56 = scmp.ne.s32.totalorder %s41, %s55
      %p57 = scmp.eq.s32.totalorder %s24, 0
      %p58 = por %p56, %p57
      %s59 = ssub.s32 %s26, %s33
      %p60 = scmp.eq.s32.totalorder %s59, 0
      %s62 = sadd.s32 %s61, 1
      %s63 = scalar_select %p60, %s61, %s62
      %p66 = pneg %p60
      %p67 = scmp.eq.s32.totalorder %s18, 3
      %p68 = por %p66, %p67
      %p69 = scmp.ne.s32.totalorder %s61, %s64
      %p70 = scmp.eq.s32.totalorder %s18, 0
      %p71 = por %p69, %p70
      %p72 = scmp.ne.s32.totalorder %s61, %s64
      %p73 = scmp.eq.s32.totalorder %s23, 3
      %p74 = por %p72, %p73
      %p75 = scmp.ne.s32.totalorder %s64, %s65
      %p76 = scmp.eq.s32.totalorder %s23, 0
      %p77 = por %p75, %p76
      %p78 = scmp.ne.s32.totalorder %s64, %s65
      %p79 = scmp.eq.s32.totalorder %s24, 3
      %p80 = por %p78, %p79
      %p82 = scmp.ne.s32.totalorder %s65, %s81
      %p83 = scmp.eq.s32.totalorder %s24, 0
      %p84 = por %p82, %p83
      %s86 = sadd.s32 %s85, 1
      %p89 = scmp.eq.s32.totalorder %s18, 3
      %p90 = scmp.ne.s32.totalorder %s85, %s87
      %p91 = scmp.eq.s32.totalorder %s18, 0
      %p92 = por %p90, %p91
      %p93 = scmp.ne.s32.totalorder %s85, %s87
      %p94 = scmp.eq.s32.totalorder %s23, 3
      %p95 = por %p93, %p94
      %p96 = scmp.ne.s32.totalorder %s87, %s88
      %p97 = scmp.eq.s32.totalorder %s23, 0
      %p98 = por %p96, %p97
      %p99 = scmp.ne.s32.totalorder %s87, %s88
      %p100 = scmp.eq.s32.totalorder %s24, 3
      %p101 = por %p99, %p100
      %p103 = scmp.ne.s32.totalorder %s88, %s102
      %p104 = scmp.eq.s32.totalorder %s24, 0
      %p105 = por %p103, %p104
      %s107 = sadd.s32 %s106, 1
      %p110 = scmp.eq.s32.totalorder %s18, 3
      %p111 = scmp.ne.s32.totalorder %s106, %s108
      %p112 = scmp.eq.s32.totalorder %s18, 0
      %p113 = por %p111, %p112
      %p114 = scmp.ne.s32.totalorder %s106, %s108
      %p115 = scmp.eq.s32.totalorder %s23, 3
      %p116 = por %p114, %p115
      %p117 = scmp.ne.s32.totalorder %s108, %s109
      %p118 = scmp.eq.s32.totalorder %s23, 0
      %p119 = por %p117, %p118
      %p120 = scmp.ne.s32.totalorder %s108, %s109
      %p121 = scmp.eq.s32.totalorder %s24, 3
      %p122 = por %p120, %p121
      %p124 = scmp.ne.s32.totalorder %s109, %s123
      %p125 = scmp.eq.s32.totalorder %s24, 0
      %p126 = por %p124, %p125
      %s128 = sadd.s32 %s127, 1
      %p131 = scmp.eq.s32.totalorder %s18, 3
      %p132 = scmp.ne.s32.totalorder %s127, %s129
      %p133 = scmp.eq.s32.totalorder %s18, 0
      %p134 = por %p132, %p133
      %p135 = scmp.ne.s32.totalorder %s127, %s129
      %p136 = scmp.eq.s32.totalorder %s23, 3
      %p137 = por %p135, %p136
      %p138 = scmp.ne.s32.totalorder %s129, %s130
      %p139 = scmp.eq.s32.totalorder %s23, 0
      %p140 = por %p138, %p139
      %p141 = scmp.ne.s32.totalorder %s129, %s130
      %p142 = scmp.eq.s32.totalorder %s24, 3
      %p143 = por %p141, %p142
      %p145 = scmp.ne.s32.totalorder %s130, %s144
      %p146 = scmp.eq.s32.totalorder %s24, 0
      %p147 = por %p145, %p146
      %s149 = sadd.s32 %s148, 1
      %p152 = scmp.eq.s32.totalorder %s18, 3
      %p153 = scmp.ne.s32.totalorder %s148, %s150
      %p154 = scmp.eq.s32.totalorder %s18, 0
      %p155 = por %p153, %p154
      %p156 = scmp.ne.s32.totalorder %s148, %s150
      %p157 = scmp.eq.s32.totalorder %s23, 3
      %p158 = por %p156, %p157
      %p159 = scmp.ne.s32.totalorder %s150, %s151
      %p160 = scmp.eq.s32.totalorder %s23, 0
      %p161 = por %p159, %p160
      %p162 = scmp.ne.s32.totalorder %s150, %s151
      %p163 = scmp.eq.s32.totalorder %s24, 3
      %p164 = por %p162, %p163
      %p166 = scmp.ne.s32.totalorder %s151, %s165
      %p167 = scmp.eq.s32.totalorder %s24, 0
      %p168 = por %p166, %p167
      %s169 = ssub.s32 %s25, %s37
      %p170 = scmp.eq.s32.totalorder %s169, 0
      %s172 = sadd.s32 %s171, 1
      %s173 = scalar_select %p170, %s171, %s172
      %p176 = pneg %p170
      %p177 = scmp.eq.s32.totalorder %s18, 3
      %p178 = por %p176, %p177
      %p179 = scmp.ne.s32.totalorder %s171, %s174
      %p180 = scmp.eq.s32.totalorder %s18, 0
      %p181 = por %p179, %p180
      %p182 = scmp.ne.s32.totalorder %s171, %s174
      %p183 = scmp.eq.s32.totalorder %s23, 3
      %p184 = por %p182, %p183
      %p185 = scmp.ne.s32.totalorder %s174, %s175
      %p186 = scmp.eq.s32.totalorder %s23, 0
      %p187 = por %p185, %p186
      %p188 = scmp.ne.s32.totalorder %s174, %s175
      %p189 = scmp.eq.s32.totalorder %s24, 3
      %p190 = por %p188, %p189
      %p192 = scmp.ne.s32.totalorder %s175, %s191
      %p193 = scmp.eq.s32.totalorder %s24, 0
      %p194 = por %p192, %p193
      %s195 = ssub.s32 %s25, %s37
      %p196 = scmp.eq.s32.totalorder %s195, 0
      %s198 = sadd.s32 %s197, 1
      %s199 = scalar_select %p196, %s197, %s198
      %p202 = pneg %p196
      %p203 = scmp.eq.s32.totalorder %s18, 3
      %p204 = por %p202, %p203
      %p205 = scmp.ne.s32.totalorder %s197, %s200
      %p206 = scmp.eq.s32.totalorder %s18, 0
      %p207 = por %p205, %p206
      %p208 = scmp.ne.s32.totalorder %s197, %s200
      %p209 = scmp.eq.s32.totalorder %s23, 3
      %p210 = por %p208, %p209
      %p211 = scmp.ne.s32.totalorder %s200, %s201
      %p212 = scmp.eq.s32.totalorder %s23, 0
      %p213 = por %p211, %p212
      %p214 = scmp.ne.s32.totalorder %s200, %s201
      %p215 = scmp.eq.s32.totalorder %s24, 3
      %p216 = por %p214, %p215
      %p218 = scmp.ne.s32.totalorder %s201, %s217
      %p219 = scmp.eq.s32.totalorder %s24, 0
      %p220 = por %p218, %p219
      %s222 = sadd.s32 %s221, 1
      %p225 = scmp.eq.s32.totalorder %s18, 3
      %p226 = scmp.ne.s32.totalorder %s221, %s223
      %p227 = scmp.eq.s32.totalorder %s18, 0
      %p228 = por %p226, %p227
      %p229 = scmp.ne.s32.totalorder %s221, %s223
      %p230 = scmp.eq.s32.totalorder %s23, 3
      %p231 = por %p229, %p230
      %p232 = scmp.ne.s32.totalorder %s223, %s224
      %p233 = scmp.eq.s32.totalorder %s23, 0
      %p234 = por %p232, %p233
      %p235 = scmp.ne.s32.totalorder %s223, %s224
      %p236 = scmp.eq.s32.totalorder %s24, 3
      %p237 = por %p235, %p236
      %p239 = scmp.ne.s32.totalorder %s224, %s238
      %p240 = scmp.eq.s32.totalorder %s24, 0
      %p241 = por %p239, %p240
      %p242 = scmp.le.s32.totalorder 1, %s18
      %p243 = scmp.lt.s32.totalorder %s18, 5
      %p244 = pnand %p242, %p243
      %p245 = pneg %p244
      // Predicated region
      $region9: #{tpu_custom_call.1} parent=5 // pred_check
        _
      $region10: #{tpu_custom_call.1} parent=5 // pred_check_branch
        %247 = sbr.rel (%p244) target = $region12
      $region11: #{tpu_custom_call.1} parent=5 // pred_region
        %s248 = ssub.s32 %s18, 1
        // Predicated region
        $region13: #{tpu_custom_call.1} parent=11 // pred_check
          %p249 = pneg %p51
        $region14: #{tpu_custom_call.1} parent=11 // pred_check_branch
          %251 = sbr.rel (%p249) target = $region16
        $region15: #{tpu_custom_call.1} parent=11 // pred_region
          _
        $region16: #{tpu_custom_call.1} parent=11 // pred_fallthru
          _
        // Predicated region
        $region17: #{tpu_custom_call.1} parent=11 // pred_check
          %p252 = pneg %p77
        $region18: #{tpu_custom_call.1} parent=11 // pred_check_branch
          %254 = sbr.rel (%p252) target = $region20
        $region19: #{tpu_custom_call.1} parent=11 // pred_region
          %s255 = smul.u32 30, %s28
          %p256 = scmp.lt.s32.totalorder %s255, 29
          %s257 = scalar_select %p256, %s255, 29
          %s258 = smul.addr %s257, 3
          %s259 = smul.addr %s258, 4
          %s260 = scalar_lea.vmem %s1, %s259
          %s261 = smul.u32 30, %s28
        $region20: #{tpu_custom_call.1} parent=11 // pred_fallthru
          _
        // Predicated region
        $region21: #{tpu_custom_call.1} parent=11 // pred_check
          %p262 = pneg %p98
        $region22: #{tpu_custom_call.1} parent=11 // pred_check_branch
          %264 = sbr.rel (%p262) target = $region24
        $region23: #{tpu_custom_call.1} parent=11 // pred_region
          _
        $region24: #{tpu_custom_call.1} parent=11 // pred_fallthru
          _
        // Predicated region
        $region25: #{tpu_custom_call.1} parent=11 // pred_check
          %p265 = pneg %p119
        $region26: #{tpu_custom_call.1} parent=11 // pred_check_branch
          %267 = sbr.rel (%p265) target = $region28
        $region27: #{tpu_custom_call.1} parent=11 // pred_region
          _
        $region28: #{tpu_custom_call.1} parent=11 // pred_fallthru
          _
        // Predicated region
        $region29: #{tpu_custom_call.1} parent=11 // pred_check
          %p268 = pneg %p140
        $region30: #{tpu_custom_call.1} parent=11 // pred_check_branch
          %270 = sbr.rel (%p268) target = $region32
        $region31: #{tpu_custom_call.1} parent=11 // pred_region
          _
        $region32: #{tpu_custom_call.1} parent=11 // pred_fallthru
          _
        // Predicated region
        $region33: #{tpu_custom_call.1} parent=11 // pred_check
          %p271 = pneg %p161
        $region34: #{tpu_custom_call.1} parent=11 // pred_check_branch
          %273 = sbr.rel (%p271) target = $region36
        $region35: #{tpu_custom_call.1} parent=11 // pred_region
          _
        $region36: #{tpu_custom_call.1} parent=11 // pred_fallthru
          _
      $region12: #{tpu_custom_call.1} parent=5 // pred_fallthru
        _
      %p274 = scmp.lt.s32.totalorder %s18, 4
      // Predicated region
      $region37: #{tpu_custom_call.1} parent=5 // pred_check
        %p275 = pneg %p274
      $region38: #{tpu_custom_call.1} parent=5 // pred_check_branch
        %277 = sbr.rel (%p275) target = $region40
      $region39: #{tpu_custom_call.1} parent=5 // pred_region
        // Predicated region
        $region41: #{tpu_custom_call.1} parent=39 // pred_check
          %p278 = pneg %p181
        $region42: #{tpu_custom_call.1} parent=39 // pred_check_branch
          %280 = sbr.rel (%p278) target = $region44
        $region43: #{tpu_custom_call.1} parent=39 // pred_region
          %s281 = sand.u32 %s171, 1
          %s282 = scalar_lea.sflag [#allocation6], %s281
          %s283 = sand.u32 %s171, 1
          %s284 = smul.addr %s283, 392
          %s285 = scalar_lea.vmem [#allocation5], %s284
          %s287 = ssub.s32 6272, 6272
          %288 = vsyncadd %s282, %s287
          %s289 = smul.addr %s25, 98
          %s290 = smul.addr %s289, 64
          %s291 = scalar_lea.hbm %s6, %s290
          %s292 = sshll.u32 %s285, 4
          %s293 = int_to_ptr.vmem [resolvable:$true] %s292
          %298 = dma.hbm_to_vmem [thread:$0]  %s291, 6272, %s293, %s282, 64, 64, 4
        $region44: #{tpu_custom_call.1} parent=39 // pred_fallthru
          _
        // Predicated region
        $region45: #{tpu_custom_call.1} parent=39 // pred_check
          %p299 = pneg %p207
        $region46: #{tpu_custom_call.1} parent=39 // pred_check_branch
          %301 = sbr.rel (%p299) target = $region48
        $region47: #{tpu_custom_call.1} parent=39 // pred_region
          %p302 = scmp.lt.s32.totalorder %s25, 3
          %s303 = scalar_select %p302, %s25, 3
          %s304 = smul.addr %s303, 8
          %s305 = scalar_lea.vmem %s7, %s304
        $region48: #{tpu_custom_call.1} parent=39 // pred_fallthru
          _
      $region40: #{tpu_custom_call.1} parent=5 // pred_fallthru
        _
      %p306 = scmp.le.s32.totalorder 1, %s18
      %p307 = scmp.lt.s32.totalorder %s18, 5
      %p308 = pnand %p306, %p307
      %p309 = pneg %p308
      // Predicated region
      $region49: #{tpu_custom_call.1} parent=5 // pred_check
        _
      $region50: #{tpu_custom_call.1} parent=5 // pred_check_branch
        %311 = sbr.rel (%p308) target = $region52
      $region51: #{tpu_custom_call.1} parent=5 // pred_region
        %s312 = ssub.s32 %s18, 1
        %s313 = sand.u32 %s174, 1
        %s314 = scalar_lea.sflag [#allocation6], %s313
        %s315 = sand.u32 %s174, 1
        %s316 = smul.addr %s315, 392
        %s317 = scalar_lea.vmem [#allocation5], %s316
        // Predicated region
        $region53: #{tpu_custom_call.1} parent=51 // pred_check
          %p318 = pneg %p187
        $region54: #{tpu_custom_call.1} parent=51 // pred_check_branch
          %320 = sbr.rel (%p318) target = $region56
        $region55: #{tpu_custom_call.1} parent=51 // pred_region
          %321 = dma.done %s314, 6272
        $region56: #{tpu_custom_call.1} parent=51 // pred_fallthru
          _
        %p322 = pneg %p51
        %p323 = pneg %p48
        %s324 = smul.u32 30, %s28
        %p325 = scmp.lt.s32.totalorder %s324, 29
        %s326 = scalar_select %p325, %s324, 29
        %s327 = smul.addr %s326, 3
        %s328 = smul.addr %s327, 4
        %s329 = scalar_lea.vmem %s1, %s328
        %p330 = pneg %p77
        %p331 = pneg %p74
        %p332 = pneg %p98
        %p333 = pneg %p95
        %p334 = pneg %p119
        %p335 = pneg %p116
        %p336 = pneg %p140
        %p337 = pneg %p137
        %p338 = pneg %p161
        %p339 = pneg %p158
        %s340 = sand.u32 %s174, 1
        %s341 = scalar_lea.sflag [#allocation6], %s340
        %s342 = sand.u32 %s174, 1
        %s343 = smul.addr %s342, 392
        %s344 = scalar_lea.vmem [#allocation5], %s343
        %p345 = pneg %p187
        %p346 = pneg %p184
        %p347 = scmp.lt.s32.totalorder %s27, 3
        %s348 = scalar_select %p347, %s27, 3
        %s349 = smul.addr %s348, 8
        %s350 = scalar_lea.vmem %s7, %s349
        %p351 = pneg %p213
        %p352 = pneg %p210
        %p353 = pneg %p234
        %p354 = pneg %p231
        %s355 = smul.u32 30, %s28
        %p356 = scmp.lt.s32.totalorder %s355, 29
        %s357 = scalar_select %p356, %s355, 29
        %s358 = smul.addr %s357, 3
        %s359 = smul.addr %s358, 4
        %s360 = scalar_lea.vmem %s1, %s359
        %s361 = smul.u32 30, %s28
        %p362 = scmp.lt.s32.totalorder %s27, 3
        %s363 = scalar_select %p362, %s27, 3
        %s364 = smul.addr %s363, 8
        %s365 = scalar_lea.vmem %s7, %s364
        %p367 = scmp.eq.s32.totalorder %s27, 0
        %p368 = scmp.eq.s32.totalorder %s28, 0
        %p369 = pnand %p367, %p368
        %p370 = pneg %p369
        // Predicated region
        $region57: #{tpu_custom_call.1} parent=51 // pred_check
          _
        $region58: #{tpu_custom_call.1} parent=51 // pred_check_branch
          %372 = sbr.rel (%p369) target = $region60
        $region59: #{tpu_custom_call.1} parent=51 // pred_region
          %v373 = vld [vmem:[%s0] sm:$0xff]
          %v374 = vld [vmem:[%s0 + $0x8] sm:$0xff]
          %v375 = vld [vmem:[%s0 + $0x10] sm:$0xff]
          %v376 = vld [vmem:[%s0 + $0x18] sm:$0xff]
          %v377 = vld [vmem:[%s0 + $0x20] sm:$0xff]
          %v378 = vld [vmem:[%s0 + $0x28] sm:$0xff]
          %v379 = vld [vmem:[%s0 + $0x30] sm:$0xff]
          %v380 = vld [vmem:[%s0 + $0x38] sm:$0xff]
          %v381 = vld [vmem:[%s0 + $0x40] sm:$0xff]
          %v382 = vld [vmem:[%s0 + $0x48] sm:$0xff]
          %v383 = vld [vmem:[%s0 + $0x50] sm:$0xff]
          %v384 = vld [vmem:[%s0 + $0x58] sm:$0xff]
          %v385 = vld [vmem:[%s0 + $0x60] sm:$0xff]
          %v386 = vld [vmem:[%s0 + $0x68] sm:$0xff]
          %v387 = vld [vmem:[%s0 + $0x70] sm:$0xff]
          %v388 = vld [vmem:[%s0 + $0x78] sm:$0xff]
          %v389 = vpack.c.bf16 %v374, %v373
          %v390 = vpack.c.bf16 %v376, %v375
          %v391 = vpack.c.bf16 %v378, %v377
          %v392 = vpack.c.bf16 %v380, %v379
          %v393 = vpack.c.bf16 %v382, %v381
          %v394 = vpack.c.bf16 %v384, %v383
          %v395 = vpack.c.bf16 %v386, %v385
          %v396 = vpack.c.bf16 %v388, %v387
          %v397 = vld [vmem:[%s2] sm:$0xf]
          %v398 = vld [vmem:[%s3] sm:$0x1]
          %v400 = vlaneseq
          %v401 = vshrl.u32 %v400, 7
          %v402 = vsub.s32 0, %v401
          %v403 = vrot.slane %v398, %v402
          %vm405 = vcmask 64512
          %v407 = vsel %vm405, %v389, 0
          %v410 = vsel %vm405, %v390, 0
          %v413 = vsel %vm405, %v391, 0
          %v416 = vsel %vm405, %v392, 0
          %v419 = vsel %vm405, %v393, 0
          %v422 = vsel %vm405, %v394, 0
          %v425 = vsel %vm405, %v395, 0
          %v428 = vsel %vm405, %v396, 0
          %vm430 = vcmask 1043456
          %v432 = vsel %vm430, %v397, 0
          %434 = vmatprep.subr.bf16.mxu0 0
          %435 = vmatpush1.bf16.msra.mxu0 %v432
          %436 = vmatprep.subr.bf16.mxu0 0
          %437 = vmatpush1.bf16.msra.mxu0 0
          %438 = vmatprep.subr.bf16.mxu0 0
          %439 = vmatpush1.bf16.msra.mxu0 0
          %440 = vmatprep.subr.bf16.mxu0 0
          %441 = vmatpush1.bf16.msra.mxu0 0
          %442 = vmatprep.subr.bf16.mxu0 0
          %443 = vmatpush1.bf16.msra.mxu0 0
          %444 = vmatprep.subr.bf16.mxu0 0
          %445 = vmatpush1.bf16.msra.mxu0 0
          %446 = vmatprep.subr.bf16.mxu0 0
          %447 = vmatpush1.bf16.msra.mxu0 0
          %448 = vmatprep.subr.bf16.mxu0 0
          %449 = vmatpush1.bf16.msra.mxu0 0
          %450 = vmatprep.subr.bf16.mxu0 0
          %451 = vmatpush1.bf16.msra.mxu0 0
          %452 = vmatprep.subr.bf16.mxu0 0
          %453 = vmatpush1.bf16.msra.mxu0 0
          %454 = vmatprep.subr.bf16.mxu0 0
          %455 = vmatpush1.bf16.msra.mxu0 0
          %456 = vmatprep.subr.bf16.mxu0 0
          %457 = vmatpush1.bf16.msra.mxu0 0
          %458 = vmatprep.subr.bf16.mxu0 0
          %459 = vmatpush1.bf16.msra.mxu0 0
          %460 = vmatprep.subr.bf16.mxu0 0
          %461 = vmatpush1.bf16.msra.mxu0 0
          %462 = vmatprep.subr.bf16.mxu0 0
          %463 = vmatpush1.bf16.msra.mxu0 0
          %464 = vmatprep.subr.bf16.mxu0 0
          %465 = vmatpush1.bf16.msra.mxu0 0
          %466 = vmatprep.mubr.bf16.mxu0 0
          %467 = vmatmul.mubr.bf16.gmra.mrb[0].mxu0 %v407
          %v468 = vpop.f32.mrb[0].mxu0
          %v469 = vadd.f32 %v403, %v468
          %v470 = vpop.f32.mrb[0].mxu0
          %v471 = vpop.f32.mrb[0].mxu0
          %v472 = vadd.f32 %v403, %v471
          %v473 = vpop.f32.mrb[0].mxu0
          %474 = vmatprep.mubr.bf16.mxu0 0
          %475 = vmatmul.mubr.bf16.gmra.mrb[0].mxu0 %v410
          %v476 = vpop.f32.mrb[0].mxu0
          %v477 = vadd.f32 %v403, %v476
          %v478 = vpop.f32.mrb[0].mxu0
          %v479 = vpop.f32.mrb[0].mxu0
          %v480 = vadd.f32 %v403, %v479
          %v481 = vpop.f32.mrb[0].mxu0
          %482 = vmatprep.mubr.bf16.mxu0 0
          %483 = vmatmul.mubr.bf16.gmra.mrb[0].mxu0 %v413
          %v484 = vpop.f32.mrb[0].mxu0
          %v485 = vadd.f32 %v403, %v484
          %v486 = vpop.f32.mrb[0].mxu0
          %v487 = vpop.f32.mrb[0].mxu0
          %v488 = vadd.f32 %v403, %v487
          %v489 = vpop.f32.mrb[0].mxu0
          %490 = vmatprep.mubr.bf16.mxu0 0
          %491 = vmatmul.mubr.bf16.gmra.mrb[0].mxu0 %v416
          %v492 = vpop.f32.mrb[0].mxu0
          %v493 = vadd.f32 %v403, %v492
          %v494 = vpop.f32.mrb[0].mxu0
          %v495 = vpop.f32.mrb[0].mxu0
          %v496 = vadd.f32 %v403, %v495
          %v497 = vpop.f32.mrb[0].mxu0
          %498 = vmatprep.mubr.bf16.mxu0 0
          %499 = vmatmul.mubr.bf16.gmra.mrb[0].mxu0 %v419
          %v500 = vpop.f32.mrb[0].mxu0
          %v501 = vadd.f32 %v403, %v500
          %v502 = vpop.f32.mrb[0].mxu0
          %v503 = vpop.f32.mrb[0].mxu0
          %v504 = vadd.f32 %v403, %v503
          %v505 = vpop.f32.mrb[0].mxu0
          %506 = vmatprep.mubr.bf16.mxu0 0
          %507 = vmatmul.mubr.bf16.gmra.mrb[0].mxu0 %v422
          %v508 = vpop.f32.mrb[0].mxu0
          %v509 = vadd.f32 %v403, %v508
          %v510 = vpop.f32.mrb[0].mxu0
          %v511 = vpop.f32.mrb[0].mxu0
          %v512 = vadd.f32 %v403, %v511
          %v513 = vpop.f32.mrb[0].mxu0
          %514 = vmatprep.mubr.bf16.mxu0 0
          %515 = vmatmul.mubr.bf16.gmra.mrb[0].mxu0 %v425
          %v516 = vpop.f32.mrb[0].mxu0
          %v517 = vadd.f32 %v403, %v516
          %v518 = vpop.f32.mrb[0].mxu0
          %v519 = vpop.f32.mrb[0].mxu0
          %v520 = vadd.f32 %v403, %v519
          %v521 = vpop.f32.mrb[0].mxu0
          %522 = vmatprep.mubr.bf16.mxu0 0
          %523 = vmatmul.mubr.bf16.gmra.mrb[0].mxu0 %v428
          %v524 = vpop.f32.mrb[0].mxu0
          %v525 = vadd.f32 %v403, %v524
          %v526 = vpop.f32.mrb[0].mxu0
          %v527 = vpop.f32.mrb[0].mxu0
          %v528 = vadd.f32 %v403, %v527
          %v529 = vpop.f32.mrb[0].mxu0
          %530 = vdwg.mxu0
          %531 = vst [vmem:[#allocation2] sm:$0xff] %v469
          %532 = vst [vmem:[#allocation2 + $0x8] sm:$0xff] %v472
          %533 = vst [vmem:[#allocation2 + $0x10] sm:$0xff] %v477
          %534 = vst [vmem:[#allocation2 + $0x18] sm:$0xff] %v480
          %535 = vst [vmem:[#allocation2 + $0x20] sm:$0xff] %v485
          %536 = vst [vmem:[#allocation2 + $0x28] sm:$0xff] %v488
          %537 = vst [vmem:[#allocation2 + $0x30] sm:$0xff] %v493
          %538 = vst [vmem:[#allocation2 + $0x38] sm:$0xff] %v496
          %539 = vst [vmem:[#allocation2 + $0x40] sm:$0xff] %v501
          %540 = vst [vmem:[#allocation2 + $0x48] sm:$0xff] %v504
          %541 = vst [vmem:[#allocation2 + $0x50] sm:$0xff] %v509
          %542 = vst [vmem:[#allocation2 + $0x58] sm:$0xff] %v512
          %543 = vst [vmem:[#allocation2 + $0x60] sm:$0xff] %v517
          %544 = vst [vmem:[#allocation2 + $0x68] sm:$0xff] %v520
          %545 = vst [vmem:[#allocation2 + $0x70] sm:$0xff] %v525
          %546 = vst [vmem:[#allocation2 + $0x78] sm:$0xff] %v528
        $region60: #{tpu_custom_call.1} parent=51 // pred_fallthru
          _
        // Predicated region
        $region61: #{tpu_custom_call.1} parent=51 // pred_check
          %p547 = pneg %p368
        $region62: #{tpu_custom_call.1} parent=51 // pred_check_branch
          %549 = sbr.rel (%p547) target = $region64
        $region63: #{tpu_custom_call.1} parent=51 // pred_region
          %550 = vst [vmem:[#allocation3] sm:$0xff] 0.0
          %551 = vst [vmem:[#allocation3 + $0x8] sm:$0xff] 0.0
          %552 = vst [vmem:[#allocation3 + $0x10] sm:$0xff] 0.0
          %553 = vst [vmem:[#allocation3 + $0x18] sm:$0xff] 0.0
          %554 = vst [vmem:[#allocation3 + $0x20] sm:$0xff] 0.0
          %555 = vst [vmem:[#allocation3 + $0x28] sm:$0xff] 0.0
          %556 = vst [vmem:[#allocation3 + $0x30] sm:$0xff] 0.0
          %557 = vst [vmem:[#allocation3 + $0x38] sm:$0xff] 0.0
          %558 = vst [vmem:[#allocation3 + $0x40] sm:$0xff] 0.0
          %559 = vst [vmem:[#allocation3 + $0x48] sm:$0xff] 0.0
          %560 = vst [vmem:[#allocation3 + $0x50] sm:$0xff] 0.0
          %561 = vst [vmem:[#allocation3 + $0x58] sm:$0xff] 0.0
          %562 = vst [vmem:[#allocation3 + $0x60] sm:$0xff] 0.0
          %563 = vst [vmem:[#allocation3 + $0x68] sm:$0xff] 0.0
          %564 = vst [vmem:[#allocation3 + $0x70] sm:$0xff] 0.0
          %565 = vst [vmem:[#allocation3 + $0x78] sm:$0xff] 0.0
          %v566 = vld [vmem:[#allocation2] sm:$0xff]
          %v567 = vld [vmem:[#allocation2 + $0x8] sm:$0xff]
          %v568 = vld [vmem:[#allocation2 + $0x10] sm:$0xff]
          %v569 = vld [vmem:[#allocation2 + $0x18] sm:$0xff]
          %v570 = vld [vmem:[#allocation2 + $0x20] sm:$0xff]
          %v571 = vld [vmem:[#allocation2 + $0x28] sm:$0xff]
          %v572 = vld [vmem:[#allocation2 + $0x30] sm:$0xff]
          %v573 = vld [vmem:[#allocation2 + $0x38] sm:$0xff]
          %v574 = vld [vmem:[#allocation2 + $0x40] sm:$0xff]
          %v575 = vld [vmem:[#allocation2 + $0x48] sm:$0xff]
          %v576 = vld [vmem:[#allocation2 + $0x50] sm:$0xff]
          %v577 = vld [vmem:[#allocation2 + $0x58] sm:$0xff]
          %v578 = vld [vmem:[#allocation2 + $0x60] sm:$0xff]
          %v579 = vld [vmem:[#allocation2 + $0x68] sm:$0xff]
          %v580 = vld [vmem:[#allocation2 + $0x70] sm:$0xff]
          %v581 = vld [vmem:[#allocation2 + $0x78] sm:$0xff]
          %v582 = vpack.c.bf16 %v567, %v566
          %v583 = vpack.c.bf16 %v569, %v568
          %v584 = vpack.c.bf16 %v571, %v570
          %v585 = vpack.c.bf16 %v573, %v572
          %v586 = vpack.c.bf16 %v575, %v574
          %v587 = vpack.c.bf16 %v577, %v576
          %v588 = vpack.c.bf16 %v579, %v578
          %v589 = vpack.c.bf16 %v581, %v580
          %v590 = vld [vmem:[%s317] sm:$0xf]
          %v591 = vld [vmem:[%s317 + $0x4] sm:$0xf]
          %v592 = vld [vmem:[%s317 + $0x8] sm:$0xf]
          %v593 = vld [vmem:[%s317 + $0xc] sm:$0xf]
          %v594 = vld [vmem:[%s317 + $0x10] sm:$0xf]
          %v595 = vld [vmem:[%s317 + $0x14] sm:$0xf]
          %v596 = vld [vmem:[%s317 + $0x18] sm:$0xf]
          %v597 = vld [vmem:[%s317 + $0x1c] sm:$0xf]
          %v598 = vld [vmem:[%s317 + $0x20] sm:$0xf]
          %v599 = vld [vmem:[%s317 + $0x24] sm:$0xf]
          %v600 = vld [vmem:[%s317 + $0x28] sm:$0xf]
          %v601 = vld [vmem:[%s317 + $0x2c] sm:$0xf]
          %v602 = vld [vmem:[%s317 + $0x30] sm:$0xf]
          %v603 = vld [vmem:[%s317 + $0x34] sm:$0xf]
          %v604 = vld [vmem:[%s317 + $0x38] sm:$0xf]
          %v605 = vld [vmem:[%s317 + $0x3c] sm:$0xf]
          %v622 = vunpack.c.l.b16 %v590
          %v623 = vunpack.c.l.b16 %v591
          %v624 = vunpack.c.l.b16 %v592
          %v625 = vunpack.c.l.b16 %v593
          %v626 = vunpack.c.l.b16 %v594
          %v627 = vunpack.c.l.b16 %v595
          %v628 = vunpack.c.l.b16 %v596
          %v629 = vunpack.c.l.b16 %v597
          %v630 = vunpack.c.l.b16 %v598
          %v631 = vunpack.c.l.b16 %v599
          %v632 = vunpack.c.l.b16 %v600
          %v633 = vunpack.c.l.b16 %v601
          %v634 = vunpack.c.l.b16 %v602
          %v635 = vunpack.c.l.b16 %v603
          %v636 = vunpack.c.l.b16 %v604
          %v637 = vunpack.c.l.b16 %v605
          %v638 = vpack.c.b16 %v623, %v622
          %v639 = vpack.c.b16 %v625, %v624
          %v640 = vpack.c.b16 %v627, %v626
          %v641 = vpack.c.b16 %v629, %v628
          %v642 = vpack.c.b16 %v631, %v630
          %v643 = vpack.c.b16 %v633, %v632
          %v644 = vpack.c.b16 %v635, %v634
          %v645 = vpack.c.b16 %v637, %v636
          %654 = vmatprep.subr.bf16.mxu0 0
          %655 = vmatpush1.bf16.msra.mxu0 %v638
          %656 = vmatprep.subr.bf16.mxu0 0
          %657 = vmatpush1.bf16.msra.mxu0 %v639
          %658 = vmatprep.subr.bf16.mxu0 0
          %659 = vmatpush1.bf16.msra.mxu0 %v640
          %660 = vmatprep.subr.bf16.mxu0 0
          %661 = vmatpush1.bf16.msra.mxu0 %v641
          %662 = vmatprep.subr.bf16.mxu0 0
          %663 = vmatpush1.bf16.msra.mxu0 %v642
          %664 = vmatprep.subr.bf16.mxu0 0
          %665 = vmatpush1.bf16.msra.mxu0 %v643
          %666 = vmatprep.subr.bf16.mxu0 0
          %667 = vmatpush1.bf16.msra.mxu0 %v644
          %668 = vmatprep.subr.bf16.mxu0 0
          %669 = vmatpush1.bf16.msra.mxu0 %v645
          %670 = vmatprep.subr.bf16.mxu0 0
          %671 = vmatpush1.bf16.msra.mxu0 0
          %672 = vmatprep.subr.bf16.mxu0 0
          %673 = vmatpush1.bf16.msra.mxu0 0
          %674 = vmatprep.subr.bf16.mxu0 0
          %675 = vmatpush1.bf16.msra.mxu0 0
          %676 = vmatprep.subr.bf16.mxu0 0
          %677 = vmatpush1.bf16.msra.mxu0 0
          %678 = vmatprep.subr.bf16.mxu0 0
          %679 = vmatpush1.bf16.msra.mxu0 0
          %680 = vmatprep.subr.bf16.mxu0 0
          %681 = vmatpush1.bf16.msra.mxu0 0
          %682 = vmatprep.subr.bf16.mxu0 0
          %683 = vmatpush1.bf16.msra.mxu0 0
          %684 = vmatprep.subr.bf16.mxu0 0
          %685 = vmatpush1.bf16.msra.mxu0 0
          %686 = vmatprep.mubr.bf16.mxu0 0
          %687 = vmatmul.mubr.bf16.gmra.mrb[0].mxu0 %v582
          %v688 = vpop.f32.mrb[0].mxu0
          %v689 = vadd.f32 0.0, %v688
          %v690 = vpop.f32.mrb[0].mxu0
          %v691 = vpop.f32.mrb[0].mxu0
          %v692 = vadd.f32 0.0, %v691
          %v693 = vpop.f32.mrb[0].mxu0
          %694 = vmatprep.mubr.bf16.mxu0 0
          %695 = vmatmul.mubr.bf16.gmra.mrb[0].mxu0 %v583
          %v696 = vpop.f32.mrb[0].mxu0
          %v697 = vadd.f32 0.0, %v696
          %v698 = vpop.f32.mrb[0].mxu0
          %v699 = vpop.f32.mrb[0].mxu0
          %v700 = vadd.f32 0.0, %v699
          %v701 = vpop.f32.mrb[0].mxu0
          %702 = vmatprep.mubr.bf16.mxu0 0
          %703 = vmatmul.mubr.bf16.gmra.mrb[0].mxu0 %v584
          %v704 = vpop.f32.mrb[0].mxu0
          %v705 = vadd.f32 0.0, %v704
          %v706 = vpop.f32.mrb[0].mxu0
          %v707 = vpop.f32.mrb[0].mxu0
          %v708 = vadd.f32 0.0, %v707
          %v709 = vpop.f32.mrb[0].mxu0
          %710 = vmatprep.mubr.bf16.mxu0 0
          %711 = vmatmul.mubr.bf16.gmra.mrb[0].mxu0 %v585
          %v712 = vpop.f32.mrb[0].mxu0
          %v713 = vadd.f32 0.0, %v712
          %v714 = vpop.f32.mrb[0].mxu0
          %v715 = vpop.f32.mrb[0].mxu0
          %v716 = vadd.f32 0.0, %v715
          %v717 = vpop.f32.mrb[0].mxu0
          %718 = vmatprep.mubr.bf16.mxu0 0
          %719 = vmatmul.mubr.bf16.gmra.mrb[0].mxu0 %v586
          %v720 = vpop.f32.mrb[0].mxu0
          %v721 = vadd.f32 0.0, %v720
          %v722 = vpop.f32.mrb[0].mxu0
          %v723 = vpop.f32.mrb[0].mxu0
          %v724 = vadd.f32 0.0, %v723
          %v725 = vpop.f32.mrb[0].mxu0
          %726 = vmatprep.mubr.bf16.mxu0 0
          %727 = vmatmul.mubr.bf16.gmra.mrb[0].mxu0 %v587
          %v728 = vpop.f32.mrb[0].mxu0
          %v729 = vadd.f32 0.0, %v728
          %v730 = vpop.f32.mrb[0].mxu0
          %v731 = vpop.f32.mrb[0].mxu0
          %v732 = vadd.f32 0.0, %v731
          %v733 = vpop.f32.mrb[0].mxu0
          %734 = vmatprep.mubr.bf16.mxu0 0
          %735 = vmatmul.mubr.bf16.gmra.mrb[0].mxu0 %v588
          %v736 = vpop.f32.mrb[0].mxu0
          %v737 = vadd.f32 0.0, %v736
          %v738 = vpop.f32.mrb[0].mxu0
          %v739 = vpop.f32.mrb[0].mxu0
          %v740 = vadd.f32 0.0, %v739
          %v741 = vpop.f32.mrb[0].mxu0
          %742 = vmatprep.mubr.bf16.mxu0 0
          %743 = vmatmul.mubr.bf16.gmra.mrb[0].mxu0 %v589
          %v744 = vpop.f32.mrb[0].mxu0
          %v745 = vadd.f32 0.0, %v744
          %v746 = vpop.f32.mrb[0].mxu0
          %v747 = vpop.f32.mrb[0].mxu0
          %v748 = vadd.f32 0.0, %v747
          %v749 = vpop.f32.mrb[0].mxu0
          %750 = vdwg.mxu0
          %v751 = vpack.c.bf16 %v692, %v689
          %v752 = vpack.c.bf16 %v700, %v697
          %v753 = vpack.c.bf16 %v708, %v705
          %v754 = vpack.c.bf16 %v716, %v713
          %v755 = vpack.c.bf16 %v724, %v721
          %v756 = vpack.c.bf16 %v732, %v729
          %v757 = vpack.c.bf16 %v740, %v737
          %v758 = vpack.c.bf16 %v748, %v745
          %759 = vst [vmem:[#allocation4] sm:$0xff] %v751
          %760 = vst [vmem:[#allocation4 + $0x8] sm:$0xff] %v752
          %761 = vst [vmem:[#allocation4 + $0x10] sm:$0xff] %v753
          %762 = vst [vmem:[#allocation4 + $0x18] sm:$0xff] %v754
          %763 = vst [vmem:[#allocation4 + $0x20] sm:$0xff] %v755
          %764 = vst [vmem:[#allocation4 + $0x28] sm:$0xff] %v756
          %765 = vst [vmem:[#allocation4 + $0x30] sm:$0xff] %v757
          %766 = vst [vmem:[#allocation4 + $0x38] sm:$0xff] %v758
          %v767 = vld [vmem:[%s317 + $0x40] sm:$0xf]
          %v768 = vld [vmem:[%s317 + $0x44] sm:$0xf]
          %v769 = vld [vmem:[%s317 + $0x48] sm:$0xf]
          %v770 = vld [vmem:[%s317 + $0x4c] sm:$0xf]
          %v771 = vld [vmem:[%s317 + $0x50] sm:$0xf]
          %v772 = vld [vmem:[%s317 + $0x54] sm:$0xf]
          %v773 = vld [vmem:[%s317 + $0x58] sm:$0xf]
          %v774 = vld [vmem:[%s317 + $0x5c] sm:$0xf]
          %v775 = vld [vmem:[%s317 + $0x60] sm:$0xf]
          %v776 = vld [vmem:[%s317 + $0x64] sm:$0xf]
          %v777 = vld [vmem:[%s317 + $0x68] sm:$0xf]
          %v778 = vld [vmem:[%s317 + $0x6c] sm:$0xf]
          %v779 = vld [vmem:[%s317 + $0x70] sm:$0xf]
          %v780 = vld [vmem:[%s317 + $0x74] sm:$0xf]
          %v781 = vld [vmem:[%s317 + $0x78] sm:$0xf]
          %v782 = vld [vmem:[%s317 + $0x7c] sm:$0xf]
          %v799 = vunpack.c.l.b16 %v767
          %v800 = vunpack.c.l.b16 %v768
          %v801 = vunpack.c.l.b16 %v769
          %v802 = vunpack.c.l.b16 %v770
          %v803 = vunpack.c.l.b16 %v771
          %v804 = vunpack.c.l.b16 %v772
          %v805 = vunpack.c.l.b16 %v773
          %v806 = vunpack.c.l.b16 %v774
          %v807 = vunpack.c.l.b16 %v775
          %v808 = vunpack.c.l.b16 %v776
          %v809 = vunpack.c.l.b16 %v777
          %v810 = vunpack.c.l.b16 %v778
          %v811 = vunpack.c.l.b16 %v779
          %v812 = vunpack.c.l.b16 %v780
          %v813 = vunpack.c.l.b16 %v781
          %v814 = vunpack.c.l.b16 %v782
          %v815 = vpack.c.b16 %v800, %v799
          %v816 = vpack.c.b16 %v802, %v801
          %v817 = vpack.c.b16 %v804, %v803
          %v818 = vpack.c.b16 %v806, %v805
          %v819 = vpack.c.b16 %v808, %v807
          %v820 = vpack.c.b16 %v810, %v809
          %v821 = vpack.c.b16 %v812, %v811
          %v822 = vpack.c.b16 %v814, %v813
          %831 = vmatprep.subr.bf16.mxu0 0
          %832 = vmatpush1.bf16.msra.mxu0 %v815
          %833 = vmatprep.subr.bf16.mxu0 0
          %834 = vmatpush1.bf16.msra.mxu0 %v816
          %835 = vmatprep.subr.bf16.mxu0 0
          %836 = vmatpush1.bf16.msra.mxu0 %v817
          %837 = vmatprep.subr.bf16.mxu0 0
          %838 = vmatpush1.bf16.msra.mxu0 %v818
          %839 = vmatprep.subr.bf16.mxu0 0
          %840 = vmatpush1.bf16.msra.mxu0 %v819
          %841 = vmatprep.subr.bf16.mxu0 0
          %842 = vmatpush1.bf16.msra.mxu0 %v820
          %843 = vmatprep.subr.bf16.mxu0 0
          %844 = vmatpush1.bf16.msra.mxu0 %v821
          %845 = vmatprep.subr.bf16.mxu0 0
          %846 = vmatpush1.bf16.msra.mxu0 %v822
          %847 = vmatprep.subr.bf16.mxu0 0
          %848 = vmatpush1.bf16.msra.mxu0 0
          %849 = vmatprep.subr.bf16.mxu0 0
          %850 = vmatpush1.bf16.msra.mxu0 0
          %851 = vmatprep.subr.bf16.mxu0 0
          %852 = vmatpush1.bf16.msra.mxu0 0
          %853 = vmatprep.subr.bf16.mxu0 0
          %854 = vmatpush1.bf16.msra.mxu0 0
          %855 = vmatprep.subr.bf16.mxu0 0
          %856 = vmatpush1.bf16.msra.mxu0 0
          %857 = vmatprep.subr.bf16.mxu0 0
          %858 = vmatpush1.bf16.msra.mxu0 0
          %859 = vmatprep.subr.bf16.mxu0 0
          %860 = vmatpush1.bf16.msra.mxu0 0
          %861 = vmatprep.subr.bf16.mxu0 0
          %862 = vmatpush1.bf16.msra.mxu0 0
          %863 = vmatprep.mubr.bf16.mxu0 0
          %864 = vmatmul.mubr.bf16.gmra.mrb[0].mxu0 %v582
          %v865 = vpop.f32.mrb[0].mxu0
          %v866 = vadd.f32 0.0, %v865
          %v867 = vpop.f32.mrb[0].mxu0
          %v868 = vpop.f32.mrb[0].mxu0
          %v869 = vadd.f32 0.0, %v868
          %v870 = vpop.f32.mrb[0].mxu0
          %871 = vmatprep.mubr.bf16.mxu0 0
          %872 = vmatmul.mubr.bf16.gmra.mrb[0].mxu0 %v583
          %v873 = vpop.f32.mrb[0].mxu0
          %v874 = vadd.f32 0.0, %v873
          %v875 = vpop.f32.mrb[0].mxu0
          %v876 = vpop.f32.mrb[0].mxu0
          %v877 = vadd.f32 0.0, %v876
          %v878 = vpop.f32.mrb[0].mxu0
          %879 = vmatprep.mubr.bf16.mxu0 0
          %880 = vmatmul.mubr.bf16.gmra.mrb[0].mxu0 %v584
          %v881 = vpop.f32.mrb[0].mxu0
          %v882 = vadd.f32 0.0, %v881
          %v883 = vpop.f32.mrb[0].mxu0
          %v884 = vpop.f32.mrb[0].mxu0
          %v885 = vadd.f32 0.0, %v884
          %v886 = vpop.f32.mrb[0].mxu0
          %887 = vmatprep.mubr.bf16.mxu0 0
          %888 = vmatmul.mubr.bf16.gmra.mrb[0].mxu0 %v585
          %v889 = vpop.f32.mrb[0].mxu0
          %v890 = vadd.f32 0.0, %v889
          %v891 = vpop.f32.mrb[0].mxu0
          %v892 = vpop.f32.mrb[0].mxu0
          %v893 = vadd.f32 0.0, %v892
          %v894 = vpop.f32.mrb[0].mxu0
          %895 = vmatprep.mubr.bf16.mxu0 0
          %896 = vmatmul.mubr.bf16.gmra.mrb[0].mxu0 %v586
          %v897 = vpop.f32.mrb[0].mxu0
          %v898 = vadd.f32 0.0, %v897
          %v899 = vpop.f32.mrb[0].mxu0
          %v900 = vpop.f32.mrb[0].mxu0
          %v901 = vadd.f32 0.0, %v900
          %v902 = vpop.f32.mrb[0].mxu0
          %903 = vmatprep.mubr.bf16.mxu0 0
          %904 = vmatmul.mubr.bf16.gmra.mrb[0].mxu0 %v587
          %v905 = vpop.f32.mrb[0].mxu0
          %v906 = vadd.f32 0.0, %v905
          %v907 = vpop.f32.mrb[0].mxu0
          %v908 = vpop.f32.mrb[0].mxu0
          %v909 = vadd.f32 0.0, %v908
          %v910 = vpop.f32.mrb[0].mxu0
          %911 = vmatprep.mubr.bf16.mxu0 0
          %912 = vmatmul.mubr.bf16.gmra.mrb[0].mxu0 %v588
          %v913 = vpop.f32.mrb[0].mxu0
          %v914 = vadd.f32 0.0, %v913
          %v915 = vpop.f32.mrb[0].mxu0
          %v916 = vpop.f32.mrb[0].mxu0
          %v917 = vadd.f32 0.0, %v916
          %v918 = vpop.f32.mrb[0].mxu0
          %919 = vmatprep.mubr.bf16.mxu0 0
          %920 = vmatmul.mubr.bf16.gmra.mrb[0].mxu0 %v589
          %v921 = vpop.f32.mrb[0].mxu0
          %v922 = vadd.f32 0.0, %v921
          %v923 = vpop.f32.mrb[0].mxu0
          %v924 = vpop.f32.mrb[0].mxu0
          %v925 = vadd.f32 0.0, %v924
          %v926 = vpop.f32.mrb[0].mxu0
          %927 = vdwg.mxu0
          %v928 = vpack.c.bf16 %v869, %v866
          %v929 = vpack.c.bf16 %v877, %v874
          %v930 = vpack.c.bf16 %v885, %v882
          %v931 = vpack.c.bf16 %v893, %v890
          %v932 = vpack.c.bf16 %v901, %v898
          %v933 = vpack.c.bf16 %v909, %v906
          %v934 = vpack.c.bf16 %v917, %v914
          %v935 = vpack.c.bf16 %v925, %v922
          %936 = vst [vmem:[#allocation4 + $0x40] sm:$0xff] %v928
          %937 = vst [vmem:[#allocation4 + $0x48] sm:$0xff] %v929
          %938 = vst [vmem:[#allocation4 + $0x50] sm:$0xff] %v930
          %939 = vst [vmem:[#allocation4 + $0x58] sm:$0xff] %v931
          %940 = vst [vmem:[#allocation4 + $0x60] sm:$0xff] %v932
          %941 = vst [vmem:[#allocation4 + $0x68] sm:$0xff] %v933
          %942 = vst [vmem:[#allocation4 + $0x70] sm:$0xff] %v934
          %943 = vst [vmem:[#allocation4 + $0x78] sm:$0xff] %v935
          %v944 = vld [vmem:[%s317 + $0x180] sm:$0xf]
          %v945 = vld [vmem:[%s317 + $0x184] sm:$0xf]
          %v948 = vunpack.c.l.b16 %v944
          %v949 = vunpack.c.l.b16 %v945
          %v950 = vpack.c.b16 %v949, %v948
          %952 = vst [vmem:[#allocation4 + $0x80] sm:$0xff] %v950
        $region64: #{tpu_custom_call.1} parent=51 // pred_fallthru
          _
        %v953 = vld [vmem:[%s360] sm:$0xff]
        %v954 = vld [vmem:[%s360 + $0x8] sm:$0xf]
        %v955 = vld [vmem:[%s360 + $0xc] sm:$0xff]
        %v956 = vld [vmem:[%s360 + $0x14] sm:$0xf]
        %v957 = vld [vmem:[%s360 + $0x18] sm:$0xff]
        %v958 = vld [vmem:[%s360 + $0x20] sm:$0xf]
        %v959 = vld [vmem:[%s360 + $0x24] sm:$0xff]
        %v960 = vld [vmem:[%s360 + $0x2c] sm:$0xf]
        %v961 = vld [vmem:[%s360 + $0x30] sm:$0xff]
        %v962 = vld [vmem:[%s360 + $0x38] sm:$0xf]
        %v963 = vld [vmem:[%s360 + $0x3c] sm:$0xff]
        %v964 = vld [vmem:[%s360 + $0x44] sm:$0xf]
        %v965 = vld [vmem:[%s360 + $0x48] sm:$0xff]
        %v966 = vld [vmem:[%s360 + $0x50] sm:$0xf]
        %v967 = vld [vmem:[%s360 + $0x54] sm:$0xff]
        %v968 = vld [vmem:[%s360 + $0x5c] sm:$0xf]
        %v969 = vld [vmem:[%s360 + $0x60] sm:$0xff]
        %v970 = vld [vmem:[%s360 + $0x68] sm:$0xf]
        %v971 = vld [vmem:[%s360 + $0x6c] sm:$0xff]
        %v972 = vld [vmem:[%s360 + $0x74] sm:$0xf]
        %v973 = vld [vmem:[%s360 + $0x78] sm:$0xff]
        %v974 = vld [vmem:[%s360 + $0x80] sm:$0xf]
        %v975 = vld [vmem:[%s360 + $0x84] sm:$0xff]
        %v976 = vld [vmem:[%s360 + $0x8c] sm:$0xf]
        %v977 = vld [vmem:[%s360 + $0x90] sm:$0xff]
        %v978 = vld [vmem:[%s360 + $0x98] sm:$0xf]
        %v979 = vld [vmem:[%s360 + $0x9c] sm:$0xff]
        %v980 = vld [vmem:[%s360 + $0xa4] sm:$0xf]
        %v981 = vld [vmem:[%s360 + $0xa8] sm:$0xff]
        %v982 = vld [vmem:[%s360 + $0xb0] sm:$0xf]
        %v983 = vld [vmem:[%s360 + $0xb4] sm:$0xff]
        %v984 = vld [vmem:[%s360 + $0xbc] sm:$0xf]
        %v985 = vld [vmem:[%s360 + $0xc0] sm:$0xff]
        %v986 = vld [vmem:[%s360 + $0xc8] sm:$0xf]
        %v987 = vld [vmem:[%s360 + $0xcc] sm:$0xff]
        %v988 = vld [vmem:[%s360 + $0xd4] sm:$0xf]
        %v989 = vld [vmem:[%s360 + $0xd8] sm:$0xff]
        %v990 = vld [vmem:[%s360 + $0xe0] sm:$0xf]
        %v991 = vld [vmem:[%s360 + $0xe4] sm:$0xff]
        %v992 = vld [vmem:[%s360 + $0xec] sm:$0xf]
        %v993 = vld [vmem:[%s360 + $0xf0] sm:$0xff]
        %v994 = vld [vmem:[%s360 + $0xf8] sm:$0xf]
        %v995 = vld [vmem:[%s360 + $0xfc] sm:$0xff]
        %v996 = vld [vmem:[%s360 + $0x104] sm:$0xf]
        %v997 = vld [vmem:[%s360 + $0x108] sm:$0xff]
        %v998 = vld [vmem:[%s360 + $0x110] sm:$0xf]
        %v999 = vld [vmem:[%s360 + $0x114] sm:$0xff]
        %v1000 = vld [vmem:[%s360 + $0x11c] sm:$0xf]
        %v1001 = vld [vmem:[%s360 + $0x120] sm:$0xff]
        %v1002 = vld [vmem:[%s360 + $0x128] sm:$0xf]
        %v1003 = vld [vmem:[%s360 + $0x12c] sm:$0xff]
        %v1004 = vld [vmem:[%s360 + $0x134] sm:$0xf]
        %v1005 = vld [vmem:[%s360 + $0x138] sm:$0xff]
        %v1006 = vld [vmem:[%s360 + $0x140] sm:$0xf]
        %v1007 = vld [vmem:[%s360 + $0x144] sm:$0xff]
        %v1008 = vld [vmem:[%s360 + $0x14c] sm:$0xf]
        %v1009 = vld [vmem:[%s360 + $0x150] sm:$0xff]
        %v1010 = vld [vmem:[%s360 + $0x158] sm:$0xf]
        %v1011 = vld [vmem:[%s360 + $0x15c] sm:$0xff]
        %v1012 = vld [vmem:[%s360 + $0x164] sm:$0xf]
        %v1013 = vld [vmem:[#allocation4] sm:$0xff]
        %v1014 = vld [vmem:[#allocation4 + $0x8] sm:$0xff]
        %v1015 = vld [vmem:[#allocation4 + $0x10] sm:$0xff]
        %v1016 = vld [vmem:[#allocation4 + $0x18] sm:$0xff]
        %v1017 = vld [vmem:[#allocation4 + $0x20] sm:$0xff]
        %v1018 = vld [vmem:[#allocation4 + $0x28] sm:$0xff]
        %v1019 = vld [vmem:[#allocation4 + $0x30] sm:$0xff]
        %v1020 = vld [vmem:[#allocation4 + $0x38] sm:$0xff]
        %v1021 = vld [vmem:[#allocation4 + $0x40] sm:$0xff]
        %v1022 = vld [vmem:[#allocation4 + $0x48] sm:$0xff]
        %v1023 = vld [vmem:[#allocation4 + $0x50] sm:$0xff]
        %v1024 = vld [vmem:[#allocation4 + $0x58] sm:$0xff]
        %v1025 = vld [vmem:[#allocation4 + $0x60] sm:$0xff]
        %v1026 = vld [vmem:[#allocation4 + $0x68] sm:$0xff]
        %v1027 = vld [vmem:[#allocation4 + $0x70] sm:$0xff]
        %v1028 = vld [vmem:[#allocation4 + $0x78] sm:$0xff]
        %v1029 = vld [vmem:[#allocation4 + $0x80] sm:$0xff]
        %v1090 = vunpack.c.l.b16 %v953
        %v1091 = vunpack.c.h.b16 %v953
        %v1092 = vunpack.c.l.b16 %v954
        %v1093 = vunpack.c.l.b16 %v955
        %v1094 = vunpack.c.h.b16 %v955
        %v1095 = vunpack.c.l.b16 %v956
        %v1096 = vunpack.c.l.b16 %v957
        %v1097 = vunpack.c.h.b16 %v957
        %v1098 = vunpack.c.l.b16 %v958
        %v1099 = vunpack.c.l.b16 %v959
        %v1100 = vunpack.c.h.b16 %v959
        %v1101 = vunpack.c.l.b16 %v960
        %v1102 = vunpack.c.l.b16 %v961
        %v1103 = vunpack.c.h.b16 %v961
        %v1104 = vunpack.c.l.b16 %v962
        %v1105 = vunpack.c.l.b16 %v963
        %v1106 = vunpack.c.h.b16 %v963
        %v1107 = vunpack.c.l.b16 %v964
        %v1108 = vunpack.c.l.b16 %v965
        %v1109 = vunpack.c.h.b16 %v965
        %v1110 = vunpack.c.l.b16 %v966
        %v1111 = vunpack.c.l.b16 %v967
        %v1112 = vunpack.c.h.b16 %v967
        %v1113 = vunpack.c.l.b16 %v968
        %v1114 = vunpack.c.l.b16 %v969
        %v1115 = vunpack.c.h.b16 %v969
        %v1116 = vunpack.c.l.b16 %v970
        %v1117 = vunpack.c.l.b16 %v971
        %v1118 = vunpack.c.h.b16 %v971
        %v1119 = vunpack.c.l.b16 %v972
        %v1120 = vunpack.c.l.b16 %v973
        %v1121 = vunpack.c.h.b16 %v973
        %v1122 = vunpack.c.l.b16 %v974
        %v1123 = vunpack.c.l.b16 %v975
        %v1124 = vunpack.c.h.b16 %v975
        %v1125 = vunpack.c.l.b16 %v976
        %v1126 = vunpack.c.l.b16 %v977
        %v1127 = vunpack.c.h.b16 %v977
        %v1128 = vunpack.c.l.b16 %v978
        %v1129 = vunpack.c.l.b16 %v979
        %v1130 = vunpack.c.h.b16 %v979
        %v1131 = vunpack.c.l.b16 %v980
        %v1132 = vunpack.c.l.b16 %v981
        %v1133 = vunpack.c.h.b16 %v981
        %v1134 = vunpack.c.l.b16 %v982
        %v1135 = vunpack.c.l.b16 %v983
        %v1136 = vunpack.c.h.b16 %v983
        %v1137 = vunpack.c.l.b16 %v984
        %v1138 = vunpack.c.l.b16 %v985
        %v1139 = vunpack.c.h.b16 %v985
        %v1140 = vunpack.c.l.b16 %v986
        %v1141 = vunpack.c.l.b16 %v987
        %v1142 = vunpack.c.h.b16 %v987
        %v1143 = vunpack.c.l.b16 %v988
        %v1144 = vunpack.c.l.b16 %v989
        %v1145 = vunpack.c.h.b16 %v989
        %v1146 = vunpack.c.l.b16 %v990
        %v1147 = vunpack.c.l.b16 %v991
        %v1148 = vunpack.c.h.b16 %v991
        %v1149 = vunpack.c.l.b16 %v992
        %v1150 = vunpack.c.l.b16 %v993
        %v1151 = vunpack.c.h.b16 %v993
        %v1152 = vunpack.c.l.b16 %v994
        %v1153 = vunpack.c.l.b16 %v995
        %v1154 = vunpack.c.h.b16 %v995
        %v1155 = vunpack.c.l.b16 %v996
        %v1156 = vunpack.c.l.b16 %v997
        %v1157 = vunpack.c.h.b16 %v997
        %v1158 = vunpack.c.l.b16 %v998
        %v1159 = vunpack.c.l.b16 %v999
        %v1160 = vunpack.c.h.b16 %v999
        %v1161 = vunpack.c.l.b16 %v1000
        %v1162 = vunpack.c.l.b16 %v1001
        %v1163 = vunpack.c.h.b16 %v1001
        %v1164 = vunpack.c.l.b16 %v1002
        %v1165 = vunpack.c.l.b16 %v1003
        %v1166 = vunpack.c.h.b16 %v1003
        %v1167 = vunpack.c.l.b16 %v1004
        %v1168 = vunpack.c.l.b16 %v1005
        %v1169 = vunpack.c.h.b16 %v1005
        %v1170 = vunpack.c.l.b16 %v1006
        %v1171 = vunpack.c.l.b16 %v1007
        %v1172 = vunpack.c.h.b16 %v1007
        %v1173 = vunpack.c.l.b16 %v1008
        %v1174 = vunpack.c.l.b16 %v1009
        %v1175 = vunpack.c.h.b16 %v1009
        %v1176 = vunpack.c.l.b16 %v1010
        %v1177 = vunpack.c.l.b16 %v1011
        %v1178 = vunpack.c.h.b16 %v1011
        %v1179 = vunpack.c.l.b16 %v1012
        %v1180 = vpack.c.b16 %v1093, %v1090
        %v1181 = vpack.c.b16 %v1094, %v1091
        %v1182 = vpack.c.b16 %v1095, %v1092
        %v1183 = vpack.c.b16 %v1099, %v1096
        %v1184 = vpack.c.b16 %v1100, %v1097
        %v1185 = vpack.c.b16 %v1101, %v1098
        %v1186 = vpack.c.b16 %v1105, %v1102
        %v1187 = vpack.c.b16 %v1106, %v1103
        %v1188 = vpack.c.b16 %v1107, %v1104
        %v1189 = vpack.c.b16 %v1111, %v1108
        %v1190 = vpack.c.b16 %v1112, %v1109
        %v1191 = vpack.c.b16 %v1113, %v1110
        %v1192 = vpack.c.b16 %v1117, %v1114
        %v1193 = vpack.c.b16 %v1118, %v1115
        %v1194 = vpack.c.b16 %v1119, %v1116
        %v1195 = vpack.c.b16 %v1123, %v1120
        %v1196 = vpack.c.b16 %v1124, %v1121
        %v1197 = vpack.c.b16 %v1125, %v1122
        %v1198 = vpack.c.b16 %v1129, %v1126
        %v1199 = vpack.c.b16 %v1130, %v1127
        %v1200 = vpack.c.b16 %v1131, %v1128
        %v1201 = vpack.c.b16 %v1135, %v1132
        %v1202 = vpack.c.b16 %v1136, %v1133
        %v1203 = vpack.c.b16 %v1137, %v1134
        %v1204 = vpack.c.b16 %v1141, %v1138
        %v1205 = vpack.c.b16 %v1142, %v1139
        %v1206 = vpack.c.b16 %v1143, %v1140
        %v1207 = vpack.c.b16 %v1147, %v1144
        %v1208 = vpack.c.b16 %v1148, %v1145
        %v1209 = vpack.c.b16 %v1149, %v1146
        %v1210 = vpack.c.b16 %v1153, %v1150
        %v1211 = vpack.c.b16 %v1154, %v1151
        %v1212 = vpack.c.b16 %v1155, %v1152
        %v1213 = vpack.c.b16 %v1159, %v1156
        %v1214 = vpack.c.b16 %v1160, %v1157
        %v1215 = vpack.c.b16 %v1161, %v1158
        %v1216 = vpack.c.b16 %v1165, %v1162
        %v1217 = vpack.c.b16 %v1166, %v1163
        %v1218 = vpack.c.b16 %v1167, %v1164
        %v1219 = vpack.c.b16 %v1171, %v1168
        %v1220 = vpack.c.b16 %v1172, %v1169
        %v1221 = vpack.c.b16 %v1173, %v1170
        %v1222 = vpack.c.b16 %v1177, %v1174
        %v1223 = vpack.c.b16 %v1178, %v1175
        %v1224 = vpack.c.b16 %v1179, %v1176
        %vm1255 = vcmask 130048
        %v1257 = vsel %vm1255, %v1182, 0
        %v1260 = vsel %vm1255, %v1185, 0
        %v1263 = vsel %vm1255, %v1188, 0
        %v1266 = vsel %vm1255, %v1191, 0
        %v1269 = vsel %vm1255, %v1194, 0
        %v1272 = vsel %vm1255, %v1197, 0
        %v1275 = vsel %vm1255, %v1200, 0
        %v1278 = vsel %vm1255, %v1203, 0
        %v1281 = vsel %vm1255, %v1206, 0
        %v1284 = vsel %vm1255, %v1209, 0
        %v1287 = vsel %vm1255, %v1212, 0
        %v1290 = vsel %vm1255, %v1215, 0
        %v1293 = vsel %vm1255, %v1218, 0
        %v1296 = vsel %vm1255, %v1221, 0
        %v1299 = vsel %vm1255, %v1224, 0
        %1301 = vmatprep.subr.bf16.mxu0 0
        %1302 = vmatpush1.bf16.msra.mxu0 %v1013
        %1303 = vmatprep.subr.bf16.mxu0 0
        %1304 = vmatpush1.bf16.msra.mxu0 %v1014
        %1305 = vmatprep.subr.bf16.mxu0 0
        %1306 = vmatpush1.bf16.msra.mxu0 %v1015
        %1307 = vmatprep.subr.bf16.mxu0 0
        %1308 = vmatpush1.bf16.msra.mxu0 %v1016
        %1309 = vmatprep.subr.bf16.mxu0 0
        %1310 = vmatpush1.bf16.msra.mxu0 %v1017
        %1311 = vmatprep.subr.bf16.mxu0 0
        %1312 = vmatpush1.bf16.msra.mxu0 %v1018
        %1313 = vmatprep.subr.bf16.mxu0 0
        %1314 = vmatpush1.bf16.msra.mxu0 %v1019
        %1315 = vmatprep.subr.bf16.mxu0 0
        %1316 = vmatpush1.bf16.msra.mxu0 %v1020
        %1317 = vmatprep.subr.bf16.mxu0 0
        %1318 = vmatpush1.bf16.msra.mxu0 %v1021
        %1319 = vmatprep.subr.bf16.mxu0 0
        %1320 = vmatpush1.bf16.msra.mxu0 %v1022
        %1321 = vmatprep.subr.bf16.mxu0 0
        %1322 = vmatpush1.bf16.msra.mxu0 %v1023
        %1323 = vmatprep.subr.bf16.mxu0 0
        %1324 = vmatpush1.bf16.msra.mxu0 %v1024
        %1325 = vmatprep.subr.bf16.mxu0 0
        %1326 = vmatpush1.bf16.msra.mxu0 %v1025
        %1327 = vmatprep.subr.bf16.mxu0 0
        %1328 = vmatpush1.bf16.msra.mxu0 %v1026
        %1329 = vmatprep.subr.bf16.mxu0 0
        %1330 = vmatpush1.bf16.msra.mxu0 %v1027
        %1331 = vmatprep.subr.bf16.mxu0 0
        %1332 = vmatpush1.bf16.msra.mxu0 %v1028
        %1333 = vmatprep.mubr.bf16.mxu0 %v1181
        %1334 = vmatmul.mubr.bf16.gmra.mrb[0].mxu0 %v1180
        %v1335 = vpop.f32.mrb[0].mxu0
        %v1336 = vadd.f32 0.0, %v1335
        %v1337 = vpop.f32.mrb[0].mxu0
        %v1338 = vpop.f32.mrb[0].mxu0
        %v1339 = vadd.f32 0.0, %v1338
        %v1340 = vpop.f32.mrb[0].mxu0
        %1341 = vmatprep.mubr.bf16.mxu0 %v1184
        %1342 = vmatmul.mubr.bf16.gmra.mrb[0].mxu0 %v1183
        %v1343 = vpop.f32.mrb[0].mxu0
        %v1344 = vadd.f32 0.0, %v1343
        %v1345 = vpop.f32.mrb[0].mxu0
        %v1346 = vpop.f32.mrb[0].mxu0
        %v1347 = vadd.f32 0.0, %v1346
        %v1348 = vpop.f32.mrb[0].mxu0
        %1349 = vmatprep.mubr.bf16.mxu0 %v1187
        %1350 = vmatmul.mubr.bf16.gmra.mrb[0].mxu0 %v1186
        %v1351 = vpop.f32.mrb[0].mxu0
        %v1352 = vadd.f32 0.0, %v1351
        %v1353 = vpop.f32.mrb[0].mxu0
        %v1354 = vpop.f32.mrb[0].mxu0
        %v1355 = vadd.f32 0.0, %v1354
        %v1356 = vpop.f32.mrb[0].mxu0
        %1357 = vmatprep.mubr.bf16.mxu0 %v1190
        %1358 = vmatmul.mubr.bf16.gmra.mrb[0].mxu0 %v1189
        %v1359 = vpop.f32.mrb[0].mxu0
        %v1360 = vadd.f32 0.0, %v1359
        %v1361 = vpop.f32.mrb[0].mxu0
        %v1362 = vpop.f32.mrb[0].mxu0
        %v1363 = vadd.f32 0.0, %v1362
        %v1364 = vpop.f32.mrb[0].mxu0
        %1365 = vmatprep.mubr.bf16.mxu0 %v1193
        %1366 = vmatmul.mubr.bf16.gmra.mrb[0].mxu0 %v1192
        %v1367 = vpop.f32.mrb[0].mxu0
        %v1368 = vadd.f32 0.0, %v1367
        %v1369 = vpop.f32.mrb[0].mxu0
        %v1370 = vpop.f32.mrb[0].mxu0
        %v1371 = vadd.f32 0.0, %v1370
        %v1372 = vpop.f32.mrb[0].mxu0
        %1373 = vmatprep.mubr.bf16.mxu0 %v1196
        %1374 = vmatmul.mubr.bf16.gmra.mrb[0].mxu0 %v1195
        %v1375 = vpop.f32.mrb[0].mxu0
        %v1376 = vadd.f32 0.0, %v1375
        %v1377 = vpop.f32.mrb[0].mxu0
        %v1378 = vpop.f32.mrb[0].mxu0
        %v1379 = vadd.f32 0.0, %v1378
        %v1380 = vpop.f32.mrb[0].mxu0
        %1381 = vmatprep.mubr.bf16.mxu0 %v1199
        %1382 = vmatmul.mubr.bf16.gmra.mrb[0].mxu0 %v1198
        %v1383 = vpop.f32.mrb[0].mxu0
        %v1384 = vadd.f32 0.0, %v1383
        %v1385 = vpop.f32.mrb[0].mxu0
        %v1386 = vpop.f32.mrb[0].mxu0
        %v1387 = vadd.f32 0.0, %v1386
        %v1388 = vpop.f32.mrb[0].mxu0
        %1389 = vmatprep.mubr.bf16.mxu0 %v1202
        %1390 = vmatmul.mubr.bf16.gmra.mrb[0].mxu0 %v1201
        %v1391 = vpop.f32.mrb[0].mxu0
        %v1392 = vadd.f32 0.0, %v1391
        %v1393 = vpop.f32.mrb[0].mxu0
        %v1394 = vpop.f32.mrb[0].mxu0
        %v1395 = vadd.f32 0.0, %v1394
        %v1396 = vpop.f32.mrb[0].mxu0
        %1397 = vmatprep.mubr.bf16.mxu0 %v1205
        %1398 = vmatmul.mubr.bf16.gmra.mrb[0].mxu0 %v1204
        %v1399 = vpop.f32.mrb[0].mxu0
        %v1400 = vadd.f32 0.0, %v1399
        %v1401 = vpop.f32.mrb[0].mxu0
        %v1402 = vpop.f32.mrb[0].mxu0
        %v1403 = vadd.f32 0.0, %v1402
        %v1404 = vpop.f32.mrb[0].mxu0
        %1405 = vmatprep.mubr.bf16.mxu0 %v1208
        %1406 = vmatmul.mubr.bf16.gmra.mrb[0].mxu0 %v1207
        %v1407 = vpop.f32.mrb[0].mxu0
        %v1408 = vadd.f32 0.0, %v1407
        %v1409 = vpop.f32.mrb[0].mxu0
        %v1410 = vpop.f32.mrb[0].mxu0
        %v1411 = vadd.f32 0.0, %v1410
        %v1412 = vpop.f32.mrb[0].mxu0
        %1413 = vmatprep.mubr.bf16.mxu0 %v1211
        %1414 = vmatmul.mubr.bf16.gmra.mrb[0].mxu0 %v1210
        %v1415 = vpop.f32.mrb[0].mxu0
        %v1416 = vadd.f32 0.0, %v1415
        %v1417 = vpop.f32.mrb[0].mxu0
        %v1418 = vpop.f32.mrb[0].mxu0
        %v1419 = vadd.f32 0.0, %v1418
        %v1420 = vpop.f32.mrb[0].mxu0
        %1421 = vmatprep.mubr.bf16.mxu0 %v1214
        %1422 = vmatmul.mubr.bf16.gmra.mrb[0].mxu0 %v1213
        %v1423 = vpop.f32.mrb[0].mxu0
        %v1424 = vadd.f32 0.0, %v1423
        %v1425 = vpop.f32.mrb[0].mxu0
        %v1426 = vpop.f32.mrb[0].mxu0
        %v1427 = vadd.f32 0.0, %v1426
        %v1428 = vpop.f32.mrb[0].mxu0
        %1429 = vmatprep.mubr.bf16.mxu0 %v1217
        %1430 = vmatmul.mubr.bf16.gmra.mrb[0].mxu0 %v1216
        %v1431 = vpop.f32.mrb[0].mxu0
        %v1432 = vadd.f32 0.0, %v1431
        %v1433 = vpop.f32.mrb[0].mxu0
        %v1434 = vpop.f32.mrb[0].mxu0
        %v1435 = vadd.f32 0.0, %v1434
        %v1436 = vpop.f32.mrb[0].mxu0
        %1437 = vmatprep.mubr.bf16.mxu0 %v1220
        %1438 = vmatmul.mubr.bf16.gmra.mrb[0].mxu0 %v1219
        %v1439 = vpop.f32.mrb[0].mxu0
        %v1440 = vadd.f32 0.0, %v1439
        %v1441 = vpop.f32.mrb[0].mxu0
        %v1442 = vpop.f32.mrb[0].mxu0
        %v1443 = vadd.f32 0.0, %v1442
        %v1444 = vpop.f32.mrb[0].mxu0
        %1445 = vmatprep.mubr.bf16.mxu0 %v1223
        %1446 = vmatmul.mubr.bf16.gmra.mrb[0].mxu0 %v1222
        %v1447 = vpop.f32.mrb[0].mxu0
        %v1448 = vadd.f32 0.0, %v1447
        %v1449 = vpop.f32.mrb[0].mxu0
        %v1450 = vpop.f32.mrb[0].mxu0
        %v1451 = vadd.f32 0.0, %v1450
        %v1452 = vpop.f32.mrb[0].mxu0
        %1453 = vdwg.mxu0
        %1454 = vmatprep.subr.bf16.mxu0 0
        %1455 = vmatpush1.bf16.msra.mxu0 %v1029
        %1456 = vmatprep.subr.bf16.mxu0 0
        %1457 = vmatpush1.bf16.msra.mxu0 0
        %1458 = vmatprep.subr.bf16.mxu0 0
        %1459 = vmatpush1.bf16.msra.mxu0 0
        %1460 = vmatprep.subr.bf16.mxu0 0
        %1461 = vmatpush1.bf16.msra.mxu0 0
        %1462 = vmatprep.subr.bf16.mxu0 0
        %1463 = vmatpush1.bf16.msra.mxu0 0
        %1464 = vmatprep.subr.bf16.mxu0 0
        %1465 = vmatpush1.bf16.msra.mxu0 0
        %1466 = vmatprep.subr.bf16.mxu0 0
        %1467 = vmatpush1.bf16.msra.mxu0 0
        %1468 = vmatprep.subr.bf16.mxu0 0
        %1469 = vmatpush1.bf16.msra.mxu0 0
        %1470 = vmatprep.subr.bf16.mxu0 0
        %1471 = vmatpush1.bf16.msra.mxu0 0
        %1472 = vmatprep.subr.bf16.mxu0 0
        %1473 = vmatpush1.bf16.msra.mxu0 0
        %1474 = vmatprep.subr.bf16.mxu0 0
        %1475 = vmatpush1.bf16.msra.mxu0 0
        %1476 = vmatprep.subr.bf16.mxu0 0
        %1477 = vmatpush1.bf16.msra.mxu0 0
        %1478 = vmatprep.subr.bf16.mxu0 0
        %1479 = vmatpush1.bf16.msra.mxu0 0
        %1480 = vmatprep.subr.bf16.mxu0 0
        %1481 = vmatpush1.bf16.msra.mxu0 0
        %1482 = vmatprep.subr.bf16.mxu0 0
        %1483 = vmatpush1.bf16.msra.mxu0 0
        %1484 = vmatprep.subr.bf16.mxu0 0
        %1485 = vmatpush1.bf16.msra.mxu0 0
        %1486 = vmatprep.mubr.bf16.mxu0 0
        %1487 = vmatmul.mubr.bf16.gmra.mrb[0].mxu0 %v1257
        %v1488 = vpop.f32.mrb[0].mxu0
        %v1489 = vadd.f32 %v1336, %v1488
        %v1490 = vpop.f32.mrb[0].mxu0
        %v1491 = vpop.f32.mrb[0].mxu0
        %v1492 = vadd.f32 %v1339, %v1491
        %v1493 = vpop.f32.mrb[0].mxu0
        %1494 = vmatprep.mubr.bf16.mxu0 0
        %1495 = vmatmul.mubr.bf16.gmra.mrb[0].mxu0 %v1260
        %v1496 = vpop.f32.mrb[0].mxu0
        %v1497 = vadd.f32 %v1344, %v1496
        %v1498 = vpop.f32.mrb[0].mxu0
        %v1499 = vpop.f32.mrb[0].mxu0
        %v1500 = vadd.f32 %v1347, %v1499
        %v1501 = vpop.f32.mrb[0].mxu0
        %1502 = vmatprep.mubr.bf16.mxu0 0
        %1503 = vmatmul.mubr.bf16.gmra.mrb[0].mxu0 %v1263
        %v1504 = vpop.f32.mrb[0].mxu0
        %v1505 = vadd.f32 %v1352, %v1504
        %v1506 = vpop.f32.mrb[0].mxu0
        %v1507 = vpop.f32.mrb[0].mxu0
        %v1508 = vadd.f32 %v1355, %v1507
        %v1509 = vpop.f32.mrb[0].mxu0
        %1510 = vmatprep.mubr.bf16.mxu0 0
        %1511 = vmatmul.mubr.bf16.gmra.mrb[0].mxu0 %v1266
        %v1512 = vpop.f32.mrb[0].mxu0
        %v1513 = vadd.f32 %v1360, %v1512
        %v1514 = vpop.f32.mrb[0].mxu0
        %v1515 = vpop.f32.mrb[0].mxu0
        %v1516 = vadd.f32 %v1363, %v1515
        %v1517 = vpop.f32.mrb[0].mxu0
        %1518 = vmatprep.mubr.bf16.mxu0 0
        %1519 = vmatmul.mubr.bf16.gmra.mrb[0].mxu0 %v1269
        %v1520 = vpop.f32.mrb[0].mxu0
        %v1521 = vadd.f32 %v1368, %v1520
        %v1522 = vpop.f32.mrb[0].mxu0
        %v1523 = vpop.f32.mrb[0].mxu0
        %v1524 = vadd.f32 %v1371, %v1523
        %v1525 = vpop.f32.mrb[0].mxu0
        %1526 = vmatprep.mubr.bf16.mxu0 0
        %1527 = vmatmul.mubr.bf16.gmra.mrb[0].mxu0 %v1272
        %v1528 = vpop.f32.mrb[0].mxu0
        %v1529 = vadd.f32 %v1376, %v1528
        %v1530 = vpop.f32.mrb[0].mxu0
        %v1531 = vpop.f32.mrb[0].mxu0
        %v1532 = vadd.f32 %v1379, %v1531
        %v1533 = vpop.f32.mrb[0].mxu0
        %1534 = vmatprep.mubr.bf16.mxu0 0
        %1535 = vmatmul.mubr.bf16.gmra.mrb[0].mxu0 %v1275
        %v1536 = vpop.f32.mrb[0].mxu0
        %v1537 = vadd.f32 %v1384, %v1536
        %v1538 = vpop.f32.mrb[0].mxu0
        %v1539 = vpop.f32.mrb[0].mxu0
        %v1540 = vadd.f32 %v1387, %v1539
        %v1541 = vpop.f32.mrb[0].mxu0
        %1542 = vmatprep.mubr.bf16.mxu0 0
        %1543 = vmatmul.mubr.bf16.gmra.mrb[0].mxu0 %v1278
        %v1544 = vpop.f32.mrb[0].mxu0
        %v1545 = vadd.f32 %v1392, %v1544
        %v1546 = vpop.f32.mrb[0].mxu0
        %v1547 = vpop.f32.mrb[0].mxu0
        %v1548 = vadd.f32 %v1395, %v1547
        %v1549 = vpop.f32.mrb[0].mxu0
        %1550 = vmatprep.mubr.bf16.mxu0 0
        %1551 = vmatmul.mubr.bf16.gmra.mrb[0].mxu0 %v1281
        %v1552 = vpop.f32.mrb[0].mxu0
        %v1553 = vadd.f32 %v1400, %v1552
        %v1554 = vpop.f32.mrb[0].mxu0
        %v1555 = vpop.f32.mrb[0].mxu0
        %v1556 = vadd.f32 %v1403, %v1555
        %v1557 = vpop.f32.mrb[0].mxu0
        %1558 = vmatprep.mubr.bf16.mxu0 0
        %1559 = vmatmul.mubr.bf16.gmra.mrb[0].mxu0 %v1284
        %v1560 = vpop.f32.mrb[0].mxu0
        %v1561 = vadd.f32 %v1408, %v1560
        %v1562 = vpop.f32.mrb[0].mxu0
        %v1563 = vpop.f32.mrb[0].mxu0
        %v1564 = vadd.f32 %v1411, %v1563
        %v1565 = vpop.f32.mrb[0].mxu0
        %1566 = vmatprep.mubr.bf16.mxu0 0
        %1567 = vmatmul.mubr.bf16.gmra.mrb[0].mxu0 %v1287
        %v1568 = vpop.f32.mrb[0].mxu0
        %v1569 = vadd.f32 %v1416, %v1568
        %v1570 = vpop.f32.mrb[0].mxu0
        %v1571 = vpop.f32.mrb[0].mxu0
        %v1572 = vadd.f32 %v1419, %v1571
        %v1573 = vpop.f32.mrb[0].mxu0
        %1574 = vmatprep.mubr.bf16.mxu0 0
        %1575 = vmatmul.mubr.bf16.gmra.mrb[0].mxu0 %v1290
        %v1576 = vpop.f32.mrb[0].mxu0
        %v1577 = vadd.f32 %v1424, %v1576
        %v1578 = vpop.f32.mrb[0].mxu0
        %v1579 = vpop.f32.mrb[0].mxu0
        %v1580 = vadd.f32 %v1427, %v1579
        %v1581 = vpop.f32.mrb[0].mxu0
        %1582 = vmatprep.mubr.bf16.mxu0 0
        %1583 = vmatmul.mubr.bf16.gmra.mrb[0].mxu0 %v1293
        %v1584 = vpop.f32.mrb[0].mxu0
        %v1585 = vadd.f32 %v1432, %v1584
        %v1586 = vpop.f32.mrb[0].mxu0
        %v1587 = vpop.f32.mrb[0].mxu0
        %v1588 = vadd.f32 %v1435, %v1587
        %v1589 = vpop.f32.mrb[0].mxu0
        %1590 = vmatprep.mubr.bf16.mxu0 0
        %1591 = vmatmul.mubr.bf16.gmra.mrb[0].mxu0 %v1296
        %v1592 = vpop.f32.mrb[0].mxu0
        %v1593 = vadd.f32 %v1440, %v1592
        %v1594 = vpop.f32.mrb[0].mxu0
        %v1595 = vpop.f32.mrb[0].mxu0
        %v1596 = vadd.f32 %v1443, %v1595
        %v1597 = vpop.f32.mrb[0].mxu0
        %1598 = vmatprep.mubr.bf16.mxu0 0
        %1599 = vmatmul.mubr.bf16.gmra.mrb[0].mxu0 %v1299
        %v1600 = vpop.f32.mrb[0].mxu0
        %v1601 = vadd.f32 %v1448, %v1600
        %v1602 = vpop.f32.mrb[0].mxu0
        %v1603 = vpop.f32.mrb[0].mxu0
        %v1604 = vadd.f32 %v1451, %v1603
        %v1605 = vpop.f32.mrb[0].mxu0
        %1606 = vdwg.mxu0
        %v1607 = vxor.u32 %v1489, 2147483648
        %v1608 = vxor.u32 %v1492, 2147483648
        %v1609 = vxor.u32 %v1497, 2147483648
        %v1610 = vxor.u32 %v1500, 2147483648
        %v1611 = vxor.u32 %v1505, 2147483648
        %v1612 = vxor.u32 %v1508, 2147483648
        %v1613 = vxor.u32 %v1513, 2147483648
        %v1614 = vxor.u32 %v1516, 2147483648
        %v1615 = vxor.u32 %v1521, 2147483648
        %v1616 = vxor.u32 %v1524, 2147483648
        %v1617 = vxor.u32 %v1529, 2147483648
        %v1618 = vxor.u32 %v1532, 2147483648
        %v1619 = vxor.u32 %v1537, 2147483648
        %v1620 = vxor.u32 %v1540, 2147483648
        %v1621 = vxor.u32 %v1545, 2147483648
        %v1622 = vxor.u32 %v1548, 2147483648
        %v1623 = vxor.u32 %v1553, 2147483648
        %v1624 = vxor.u32 %v1556, 2147483648
        %v1625 = vxor.u32 %v1561, 2147483648
        %v1626 = vxor.u32 %v1564, 2147483648
        %v1627 = vxor.u32 %v1569, 2147483648
        %v1628 = vxor.u32 %v1572, 2147483648
        %v1629 = vxor.u32 %v1577, 2147483648
        %v1630 = vxor.u32 %v1580, 2147483648
        %v1631 = vxor.u32 %v1585, 2147483648
        %v1632 = vxor.u32 %v1588, 2147483648
        %v1633 = vxor.u32 %v1593, 2147483648
        %v1634 = vxor.u32 %v1596, 2147483648
        %v1635 = vxor.u32 %v1601, 2147483648
        %v1636 = vxor.u32 %v1604, 2147483648
        %v1637 = vmul.f32 %v1607, 1.442695
        %v1638 = vpow.pop %v1637
        %v1639 = vmul.f32 %v1608, 1.442695
        %v1640 = vpow.pop %v1639
        %v1641 = vmul.f32 %v1609, 1.442695
        %v1642 = vpow.pop %v1641
        %v1643 = vmul.f32 %v1610, 1.442695
        %v1644 = vpow.pop %v1643
        %v1645 = vmul.f32 %v1611, 1.442695
        %v1646 = vpow.pop %v1645
        %v1647 = vmul.f32 %v1612, 1.442695
        %v1648 = vpow.pop %v1647
        %v1649 = vmul.f32 %v1613, 1.442695
        %v1650 = vpow.pop %v1649
        %v1651 = vmul.f32 %v1614, 1.442695
        %v1652 = vpow.pop %v1651
        %v1653 = vmul.f32 %v1615, 1.442695
        %v1654 = vpow.pop %v1653
        %v1655 = vmul.f32 %v1616, 1.442695
        %v1656 = vpow.pop %v1655
        %v1657 = vmul.f32 %v1617, 1.442695
        %v1658 = vpow.pop %v1657
        %v1659 = vmul.f32 %v1618, 1.442695
        %v1660 = vpow.pop %v1659
        %v1661 = vmul.f32 %v1619, 1.442695
        %v1662 = vpow.pop %v1661
        %v1663 = vmul.f32 %v1620, 1.442695
        %v1664 = vpow.pop %v1663
        %v1665 = vmul.f32 %v1621, 1.442695
        %v1666 = vpow.pop %v1665
        %v1667 = vmul.f32 %v1622, 1.442695
        %v1668 = vpow.pop %v1667
        %v1669 = vmul.f32 %v1623, 1.442695
        %v1670 = vpow.pop %v1669
        %v1671 = vmul.f32 %v1624, 1.442695
        %v1672 = vpow.pop %v1671
        %v1673 = vmul.f32 %v1625, 1.442695
        %v1674 = vpow.pop %v1673
        %v1675 = vmul.f32 %v1626, 1.442695
        %v1676 = vpow.pop %v1675
        %v1677 = vmul.f32 %v1627, 1.442695
        %v1678 = vpow.pop %v1677
        %v1679 = vmul.f32 %v1628, 1.442695
        %v1680 = vpow.pop %v1679
        %v1681 = vmul.f32 %v1629, 1.442695
        %v1682 = vpow.pop %v1681
        %v1683 = vmul.f32 %v1630, 1.442695
        %v1684 = vpow.pop %v1683
        %v1685 = vmul.f32 %v1631, 1.442695
        %v1686 = vpow.pop %v1685
        %v1687 = vmul.f32 %v1632, 1.442695
        %v1688 = vpow.pop %v1687
        %v1689 = vmul.f32 %v1633, 1.442695
        %v1690 = vpow.pop %v1689
        %v1691 = vmul.f32 %v1634, 1.442695
        %v1692 = vpow.pop %v1691
        %v1693 = vmul.f32 %v1635, 1.442695
        %v1694 = vpow.pop %v1693
        %v1695 = vmul.f32 %v1636, 1.442695
        %v1696 = vpow.pop %v1695
        %v1697 = vadd.f32 %v1638, 1.0
        %v1698 = vadd.f32 %v1640, 1.0
        %v1699 = vadd.f32 %v1642, 1.0
        %v1700 = vadd.f32 %v1644, 1.0
        %v1701 = vadd.f32 %v1646, 1.0
        %v1702 = vadd.f32 %v1648, 1.0
        %v1703 = vadd.f32 %v1650, 1.0
        %v1704 = vadd.f32 %v1652, 1.0
        %v1705 = vadd.f32 %v1654, 1.0
        %v1706 = vadd.f32 %v1656, 1.0
        %v1707 = vadd.f32 %v1658, 1.0
        %v1708 = vadd.f32 %v1660, 1.0
        %v1709 = vadd.f32 %v1662, 1.0
        %v1710 = vadd.f32 %v1664, 1.0
        %v1711 = vadd.f32 %v1666, 1.0
        %v1712 = vadd.f32 %v1668, 1.0
        %v1713 = vadd.f32 %v1670, 1.0
        %v1714 = vadd.f32 %v1672, 1.0
        %v1715 = vadd.f32 %v1674, 1.0
        %v1716 = vadd.f32 %v1676, 1.0
        %v1717 = vadd.f32 %v1678, 1.0
        %v1718 = vadd.f32 %v1680, 1.0
        %v1719 = vadd.f32 %v1682, 1.0
        %v1720 = vadd.f32 %v1684, 1.0
        %v1721 = vadd.f32 %v1686, 1.0
        %v1722 = vadd.f32 %v1688, 1.0
        %v1723 = vadd.f32 %v1690, 1.0
        %v1724 = vadd.f32 %v1692, 1.0
        %v1725 = vadd.f32 %v1694, 1.0
        %v1726 = vadd.f32 %v1696, 1.0
        %v1727 = vrcp.pop %v1697
        %v1728 = vmul.f32 1.0, %v1727
        %v1729 = vrcp.pop %v1698
        %v1730 = vmul.f32 1.0, %v1729
        %v1731 = vrcp.pop %v1699
        %v1732 = vmul.f32 1.0, %v1731
        %v1733 = vrcp.pop %v1700
        %v1734 = vmul.f32 1.0, %v1733
        %v1735 = vrcp.pop %v1701
        %v1736 = vmul.f32 1.0, %v1735
        %v1737 = vrcp.pop %v1702
        %v1738 = vmul.f32 1.0, %v1737
        %v1739 = vrcp.pop %v1703
        %v1740 = vmul.f32 1.0, %v1739
        %v1741 = vrcp.pop %v1704
        %v1742 = vmul.f32 1.0, %v1741
        %v1743 = vrcp.pop %v1705
        %v1744 = vmul.f32 1.0, %v1743
        %v1745 = vrcp.pop %v1706
        %v1746 = vmul.f32 1.0, %v1745
        %v1747 = vrcp.pop %v1707
        %v1748 = vmul.f32 1.0, %v1747
        %v1749 = vrcp.pop %v1708
        %v1750 = vmul.f32 1.0, %v1749
        %v1751 = vrcp.pop %v1709
        %v1752 = vmul.f32 1.0, %v1751
        %v1753 = vrcp.pop %v1710
        %v1754 = vmul.f32 1.0, %v1753
        %v1755 = vrcp.pop %v1711
        %v1756 = vmul.f32 1.0, %v1755
        %v1757 = vrcp.pop %v1712
        %v1758 = vmul.f32 1.0, %v1757
        %v1759 = vrcp.pop %v1713
        %v1760 = vmul.f32 1.0, %v1759
        %v1761 = vrcp.pop %v1714
        %v1762 = vmul.f32 1.0, %v1761
        %v1763 = vrcp.pop %v1715
        %v1764 = vmul.f32 1.0, %v1763
        %v1765 = vrcp.pop %v1716
        %v1766 = vmul.f32 1.0, %v1765
        %v1767 = vrcp.pop %v1717
        %v1768 = vmul.f32 1.0, %v1767
        %v1769 = vrcp.pop %v1718
        %v1770 = vmul.f32 1.0, %v1769
        %v1771 = vrcp.pop %v1719
        %v1772 = vmul.f32 1.0, %v1771
        %v1773 = vrcp.pop %v1720
        %v1774 = vmul.f32 1.0, %v1773
        %v1775 = vrcp.pop %v1721
        %v1776 = vmul.f32 1.0, %v1775
        %v1777 = vrcp.pop %v1722
        %v1778 = vmul.f32 1.0, %v1777
        %v1779 = vrcp.pop %v1723
        %v1780 = vmul.f32 1.0, %v1779
        %v1781 = vrcp.pop %v1724
        %v1782 = vmul.f32 1.0, %v1781
        %v1783 = vrcp.pop %v1725
        %v1784 = vmul.f32 1.0, %v1783
        %v1785 = vrcp.pop %v1726
        %v1786 = vmul.f32 1.0, %v1785
        %v1787 = vmul.f32 %v1489, %v1728
        %v1788 = vmul.f32 %v1492, %v1730
        %v1789 = vmul.f32 %v1497, %v1732
        %v1790 = vmul.f32 %v1500, %v1734
        %v1791 = vmul.f32 %v1505, %v1736
        %v1792 = vmul.f32 %v1508, %v1738
        %v1793 = vmul.f32 %v1513, %v1740
        %v1794 = vmul.f32 %v1516, %v1742
        %v1795 = vmul.f32 %v1521, %v1744
        %v1796 = vmul.f32 %v1524, %v1746
        %v1797 = vmul.f32 %v1529, %v1748
        %v1798 = vmul.f32 %v1532, %v1750
        %v1799 = vmul.f32 %v1537, %v1752
        %v1800 = vmul.f32 %v1540, %v1754
        %v1801 = vmul.f32 %v1545, %v1756
        %v1802 = vmul.f32 %v1548, %v1758
        %v1803 = vmul.f32 %v1553, %v1760
        %v1804 = vmul.f32 %v1556, %v1762
        %v1805 = vmul.f32 %v1561, %v1764
        %v1806 = vmul.f32 %v1564, %v1766
        %v1807 = vmul.f32 %v1569, %v1768
        %v1808 = vmul.f32 %v1572, %v1770
        %v1809 = vmul.f32 %v1577, %v1772
        %v1810 = vmul.f32 %v1580, %v1774
        %v1811 = vmul.f32 %v1585, %v1776
        %v1812 = vmul.f32 %v1588, %v1778
        %v1813 = vmul.f32 %v1593, %v1780
        %v1814 = vmul.f32 %v1596, %v1782
        %v1815 = vmul.f32 %v1601, %v1784
        %v1816 = vmul.f32 %v1604, %v1786
        %v1817 = vpack.c.bf16 %v1788, %v1787
        %v1818 = vpack.c.bf16 %v1790, %v1789
        %v1819 = vpack.c.bf16 %v1792, %v1791
        %v1820 = vpack.c.bf16 %v1794, %v1793
        %v1821 = vpack.c.bf16 %v1796, %v1795
        %v1822 = vpack.c.bf16 %v1798, %v1797
        %v1823 = vpack.c.bf16 %v1800, %v1799
        %v1824 = vpack.c.bf16 %v1802, %v1801
        %v1825 = vpack.c.bf16 %v1804, %v1803
        %v1826 = vpack.c.bf16 %v1806, %v1805
        %v1827 = vpack.c.bf16 %v1808, %v1807
        %v1828 = vpack.c.bf16 %v1810, %v1809
        %v1829 = vpack.c.bf16 %v1812, %v1811
        %v1830 = vpack.c.bf16 %v1814, %v1813
        %v1831 = vpack.c.bf16 %v1816, %v1815
        %v1832 = vld [vmem:[%s317 + $0x80] sm:$0xf]
        %v1833 = vld [vmem:[%s317 + $0x84] sm:$0xf]
        %v1834 = vld [vmem:[%s317 + $0x88] sm:$0xf]
        %v1835 = vld [vmem:[%s317 + $0x8c] sm:$0xf]
        %v1836 = vld [vmem:[%s317 + $0x90] sm:$0xf]
        %v1837 = vld [vmem:[%s317 + $0x94] sm:$0xf]
        %v1838 = vld [vmem:[%s317 + $0x98] sm:$0xf]
        %v1839 = vld [vmem:[%s317 + $0x9c] sm:$0xf]
        %v1840 = vld [vmem:[%s317 + $0xa0] sm:$0xf]
        %v1841 = vld [vmem:[%s317 + $0xa4] sm:$0xf]
        %v1842 = vld [vmem:[%s317 + $0xa8] sm:$0xf]
        %v1843 = vld [vmem:[%s317 + $0xac] sm:$0xf]
        %v1844 = vld [vmem:[%s317 + $0xb0] sm:$0xf]
        %v1845 = vld [vmem:[%s317 + $0xb4] sm:$0xf]
        %v1846 = vld [vmem:[%s317 + $0xb8] sm:$0xf]
        %v1847 = vld [vmem:[%s317 + $0xbc] sm:$0xf]
        %v1848 = vld [vmem:[%s365] sm:$0x1]
        %v1849 = vlaneseq
        %v1850 = vshrl.u32 %v1849, 7
        %v1851 = vsub.s32 0, %v1850
        %v1852 = vrot.slane %v1848, %v1851
        %v1869 = vunpack.c.l.b16 %v1832
        %v1870 = vunpack.c.l.b16 %v1833
        %v1871 = vunpack.c.l.b16 %v1834
        %v1872 = vunpack.c.l.b16 %v1835
        %v1873 = vunpack.c.l.b16 %v1836
        %v1874 = vunpack.c.l.b16 %v1837
        %v1875 = vunpack.c.l.b16 %v1838
        %v1876 = vunpack.c.l.b16 %v1839
        %v1877 = vunpack.c.l.b16 %v1840
        %v1878 = vunpack.c.l.b16 %v1841
        %v1879 = vunpack.c.l.b16 %v1842
        %v1880 = vunpack.c.l.b16 %v1843
        %v1881 = vunpack.c.l.b16 %v1844
        %v1882 = vunpack.c.l.b16 %v1845
        %v1883 = vunpack.c.l.b16 %v1846
        %v1884 = vunpack.c.l.b16 %v1847
        %v1885 = vpack.c.b16 %v1870, %v1869
        %v1886 = vpack.c.b16 %v1872, %v1871
        %v1887 = vpack.c.b16 %v1874, %v1873
        %v1888 = vpack.c.b16 %v1876, %v1875
        %v1889 = vpack.c.b16 %v1878, %v1877
        %v1890 = vpack.c.b16 %v1880, %v1879
        %v1891 = vpack.c.b16 %v1882, %v1881
        %v1892 = vpack.c.b16 %v1884, %v1883
        %1901 = vmatprep.subr.bf16.mxu0 0
        %1902 = vmatpush1.bf16.msra.mxu0 %v1885
        %1903 = vmatprep.subr.bf16.mxu0 0
        %1904 = vmatpush1.bf16.msra.mxu0 %v1886
        %1905 = vmatprep.subr.bf16.mxu0 0
        %1906 = vmatpush1.bf16.msra.mxu0 %v1887
        %1907 = vmatprep.subr.bf16.mxu0 0
        %1908 = vmatpush1.bf16.msra.mxu0 %v1888
        %1909 = vmatprep.subr.bf16.mxu0 0
        %1910 = vmatpush1.bf16.msra.mxu0 %v1889
        %1911 = vmatprep.subr.bf16.mxu0 0
        %1912 = vmatpush1.bf16.msra.mxu0 %v1890
        %1913 = vmatprep.subr.bf16.mxu0 0
        %1914 = vmatpush1.bf16.msra.mxu0 %v1891
        %1915 = vmatprep.subr.bf16.mxu0 0
        %1916 = vmatpush1.bf16.msra.mxu0 %v1892
        %1917 = vmatprep.subr.bf16.mxu0 0
        %1918 = vmatpush1.bf16.msra.mxu0 0
        %1919 = vmatprep.subr.bf16.mxu0 0
        %1920 = vmatpush1.bf16.msra.mxu0 0
        %1921 = vmatprep.subr.bf16.mxu0 0
        %1922 = vmatpush1.bf16.msra.mxu0 0
        %1923 = vmatprep.subr.bf16.mxu0 0
        %1924 = vmatpush1.bf16.msra.mxu0 0
        %1925 = vmatprep.subr.bf16.mxu0 0
        %1926 = vmatpush1.bf16.msra.mxu0 0
        %1927 = vmatprep.subr.bf16.mxu0 0
        %1928 = vmatpush1.bf16.msra.mxu0 0
        %1929 = vmatprep.subr.bf16.mxu0 0
        %1930 = vmatpush1.bf16.msra.mxu0 0
        %1931 = vmatprep.subr.bf16.mxu0 0
        %1932 = vmatpush1.bf16.msra.mxu0 0
        %1933 = vmatprep.mubr.bf16.mxu0 0
        %1934 = vmatmul.mubr.bf16.gmra.mrb[0].mxu0 %v1817
        %v1935 = vpop.f32.mrb[0].mxu0
        %v1936 = vadd.f32 %v1852, %v1935
        %v1937 = vpop.f32.mrb[0].mxu0
        %v1938 = vpop.f32.mrb[0].mxu0
        %v1939 = vadd.f32 %v1852, %v1938
        %v1940 = vpop.f32.mrb[0].mxu0
        %1941 = vmatprep.mubr.bf16.mxu0 0
        %1942 = vmatmul.mubr.bf16.gmra.mrb[0].mxu0 %v1818
        %v1943 = vpop.f32.mrb[0].mxu0
        %v1944 = vadd.f32 %v1852, %v1943
        %v1945 = vpop.f32.mrb[0].mxu0
        %v1946 = vpop.f32.mrb[0].mxu0
        %v1947 = vadd.f32 %v1852, %v1946
        %v1948 = vpop.f32.mrb[0].mxu0
        %1949 = vmatprep.mubr.bf16.mxu0 0
        %1950 = vmatmul.mubr.bf16.gmra.mrb[0].mxu0 %v1819
        %v1951 = vpop.f32.mrb[0].mxu0
        %v1952 = vadd.f32 %v1852, %v1951
        %v1953 = vpop.f32.mrb[0].mxu0
        %v1954 = vpop.f32.mrb[0].mxu0
        %v1955 = vadd.f32 %v1852, %v1954
        %v1956 = vpop.f32.mrb[0].mxu0
        %1957 = vmatprep.mubr.bf16.mxu0 0
        %1958 = vmatmul.mubr.bf16.gmra.mrb[0].mxu0 %v1820
        %v1959 = vpop.f32.mrb[0].mxu0
        %v1960 = vadd.f32 %v1852, %v1959
        %v1961 = vpop.f32.mrb[0].mxu0
        %v1962 = vpop.f32.mrb[0].mxu0
        %v1963 = vadd.f32 %v1852, %v1962
        %v1964 = vpop.f32.mrb[0].mxu0
        %1965 = vmatprep.mubr.bf16.mxu0 0
        %1966 = vmatmul.mubr.bf16.gmra.mrb[0].mxu0 %v1821
        %v1967 = vpop.f32.mrb[0].mxu0
        %v1968 = vadd.f32 %v1852, %v1967
        %v1969 = vpop.f32.mrb[0].mxu0
        %v1970 = vpop.f32.mrb[0].mxu0
        %v1971 = vadd.f32 %v1852, %v1970
        %v1972 = vpop.f32.mrb[0].mxu0
        %1973 = vmatprep.mubr.bf16.mxu0 0
        %1974 = vmatmul.mubr.bf16.gmra.mrb[0].mxu0 %v1822
        %v1975 = vpop.f32.mrb[0].mxu0
        %v1976 = vadd.f32 %v1852, %v1975
        %v1977 = vpop.f32.mrb[0].mxu0
        %v1978 = vpop.f32.mrb[0].mxu0
        %v1979 = vadd.f32 %v1852, %v1978
        %v1980 = vpop.f32.mrb[0].mxu0
        %1981 = vmatprep.mubr.bf16.mxu0 0
        %1982 = vmatmul.mubr.bf16.gmra.mrb[0].mxu0 %v1823
        %v1983 = vpop.f32.mrb[0].mxu0
        %v1984 = vadd.f32 %v1852, %v1983
        %v1985 = vpop.f32.mrb[0].mxu0
        %v1986 = vpop.f32.mrb[0].mxu0
        %v1987 = vadd.f32 %v1852, %v1986
        %v1988 = vpop.f32.mrb[0].mxu0
        %1989 = vmatprep.mubr.bf16.mxu0 0
        %1990 = vmatmul.mubr.bf16.gmra.mrb[0].mxu0 %v1824
        %v1991 = vpop.f32.mrb[0].mxu0
        %v1992 = vadd.f32 %v1852, %v1991
        %v1993 = vpop.f32.mrb[0].mxu0
        %v1994 = vpop.f32.mrb[0].mxu0
        %v1995 = vadd.f32 %v1852, %v1994
        %v1996 = vpop.f32.mrb[0].mxu0
        %1997 = vmatprep.mubr.bf16.mxu0 0
        %1998 = vmatmul.mubr.bf16.gmra.mrb[0].mxu0 %v1825
        %v1999 = vpop.f32.mrb[0].mxu0
        %v2000 = vadd.f32 %v1852, %v1999
        %v2001 = vpop.f32.mrb[0].mxu0
        %v2002 = vpop.f32.mrb[0].mxu0
        %v2003 = vadd.f32 %v1852, %v2002
        %v2004 = vpop.f32.mrb[0].mxu0
        %2005 = vmatprep.mubr.bf16.mxu0 0
        %2006 = vmatmul.mubr.bf16.gmra.mrb[0].mxu0 %v1826
        %v2007 = vpop.f32.mrb[0].mxu0
        %v2008 = vadd.f32 %v1852, %v2007
        %v2009 = vpop.f32.mrb[0].mxu0
        %v2010 = vpop.f32.mrb[0].mxu0
        %v2011 = vadd.f32 %v1852, %v2010
        %v2012 = vpop.f32.mrb[0].mxu0
        %2013 = vmatprep.mubr.bf16.mxu0 0
        %2014 = vmatmul.mubr.bf16.gmra.mrb[0].mxu0 %v1827
        %v2015 = vpop.f32.mrb[0].mxu0
        %v2016 = vadd.f32 %v1852, %v2015
        %v2017 = vpop.f32.mrb[0].mxu0
        %v2018 = vpop.f32.mrb[0].mxu0
        %v2019 = vadd.f32 %v1852, %v2018
        %v2020 = vpop.f32.mrb[0].mxu0
        %2021 = vmatprep.mubr.bf16.mxu0 0
        %2022 = vmatmul.mubr.bf16.gmra.mrb[0].mxu0 %v1828
        %v2023 = vpop.f32.mrb[0].mxu0
        %v2024 = vadd.f32 %v1852, %v2023
        %v2025 = vpop.f32.mrb[0].mxu0
        %v2026 = vpop.f32.mrb[0].mxu0
        %v2027 = vadd.f32 %v1852, %v2026
        %v2028 = vpop.f32.mrb[0].mxu0
        %2029 = vmatprep.mubr.bf16.mxu0 0
        %2030 = vmatmul.mubr.bf16.gmra.mrb[0].mxu0 %v1829
        %v2031 = vpop.f32.mrb[0].mxu0
        %v2032 = vadd.f32 %v1852, %v2031
        %v2033 = vpop.f32.mrb[0].mxu0
        %v2034 = vpop.f32.mrb[0].mxu0
        %v2035 = vadd.f32 %v1852, %v2034
        %v2036 = vpop.f32.mrb[0].mxu0
        %2037 = vmatprep.mubr.bf16.mxu0 0
        %2038 = vmatmul.mubr.bf16.gmra.mrb[0].mxu0 %v1830
        %v2039 = vpop.f32.mrb[0].mxu0
        %v2040 = vadd.f32 %v1852, %v2039
        %v2041 = vpop.f32.mrb[0].mxu0
        %v2042 = vpop.f32.mrb[0].mxu0
        %v2043 = vadd.f32 %v1852, %v2042
        %v2044 = vpop.f32.mrb[0].mxu0
        %2045 = vmatprep.mubr.bf16.mxu0 0
        %2046 = vmatmul.mubr.bf16.gmra.mrb[0].mxu0 %v1831
        %v2047 = vpop.f32.mrb[0].mxu0
        %v2048 = vadd.f32 %v1852, %v2047
        %v2049 = vpop.f32.mrb[0].mxu0
        %v2050 = vpop.f32.mrb[0].mxu0
        %v2051 = vadd.f32 %v1852, %v2050
        %v2052 = vpop.f32.mrb[0].mxu0
        %2053 = vdwg.mxu0
        %v2054 = vxor.u32 %v1936, 2147483648
        %v2055 = vxor.u32 %v1939, 2147483648
        %v2056 = vxor.u32 %v1944, 2147483648
        %v2057 = vxor.u32 %v1947, 2147483648
        %v2058 = vxor.u32 %v1952, 2147483648
        %v2059 = vxor.u32 %v1955, 2147483648
        %v2060 = vxor.u32 %v1960, 2147483648
        %v2061 = vxor.u32 %v1963, 2147483648
        %v2062 = vxor.u32 %v1968, 2147483648
        %v2063 = vxor.u32 %v1971, 2147483648
        %v2064 = vxor.u32 %v1976, 2147483648
        %v2065 = vxor.u32 %v1979, 2147483648
        %v2066 = vxor.u32 %v1984, 2147483648
        %v2067 = vxor.u32 %v1987, 2147483648
        %v2068 = vxor.u32 %v1992, 2147483648
        %v2069 = vxor.u32 %v1995, 2147483648
        %v2070 = vxor.u32 %v2000, 2147483648
        %v2071 = vxor.u32 %v2003, 2147483648
        %v2072 = vxor.u32 %v2008, 2147483648
        %v2073 = vxor.u32 %v2011, 2147483648
        %v2074 = vxor.u32 %v2016, 2147483648
        %v2075 = vxor.u32 %v2019, 2147483648
        %v2076 = vxor.u32 %v2024, 2147483648
        %v2077 = vxor.u32 %v2027, 2147483648
        %v2078 = vxor.u32 %v2032, 2147483648
        %v2079 = vxor.u32 %v2035, 2147483648
        %v2080 = vxor.u32 %v2040, 2147483648
        %v2081 = vxor.u32 %v2043, 2147483648
        %v2082 = vxor.u32 %v2048, 2147483648
        %v2083 = vxor.u32 %v2051, 2147483648
        %v2084 = vmul.f32 %v2054, 1.442695
        %v2085 = vpow.pop %v2084
        %v2086 = vmul.f32 %v2055, 1.442695
        %v2087 = vpow.pop %v2086
        %v2088 = vmul.f32 %v2056, 1.442695
        %v2089 = vpow.pop %v2088
        %v2090 = vmul.f32 %v2057, 1.442695
        %v2091 = vpow.pop %v2090
        %v2092 = vmul.f32 %v2058, 1.442695
        %v2093 = vpow.pop %v2092
        %v2094 = vmul.f32 %v2059, 1.442695
        %v2095 = vpow.pop %v2094
        %v2096 = vmul.f32 %v2060, 1.442695
        %v2097 = vpow.pop %v2096
        %v2098 = vmul.f32 %v2061, 1.442695
        %v2099 = vpow.pop %v2098
        %v2100 = vmul.f32 %v2062, 1.442695
        %v2101 = vpow.pop %v2100
        %v2102 = vmul.f32 %v2063, 1.442695
        %v2103 = vpow.pop %v2102
        %v2104 = vmul.f32 %v2064, 1.442695
        %v2105 = vpow.pop %v2104
        %v2106 = vmul.f32 %v2065, 1.442695
        %v2107 = vpow.pop %v2106
        %v2108 = vmul.f32 %v2066, 1.442695
        %v2109 = vpow.pop %v2108
        %v2110 = vmul.f32 %v2067, 1.442695
        %v2111 = vpow.pop %v2110
        %v2112 = vmul.f32 %v2068, 1.442695
        %v2113 = vpow.pop %v2112
        %v2114 = vmul.f32 %v2069, 1.442695
        %v2115 = vpow.pop %v2114
        %v2116 = vmul.f32 %v2070, 1.442695
        %v2117 = vpow.pop %v2116
        %v2118 = vmul.f32 %v2071, 1.442695
        %v2119 = vpow.pop %v2118
        %v2120 = vmul.f32 %v2072, 1.442695
        %v2121 = vpow.pop %v2120
        %v2122 = vmul.f32 %v2073, 1.442695
        %v2123 = vpow.pop %v2122
        %v2124 = vmul.f32 %v2074, 1.442695
        %v2125 = vpow.pop %v2124
        %v2126 = vmul.f32 %v2075, 1.442695
        %v2127 = vpow.pop %v2126
        %v2128 = vmul.f32 %v2076, 1.442695
        %v2129 = vpow.pop %v2128
        %v2130 = vmul.f32 %v2077, 1.442695
        %v2131 = vpow.pop %v2130
        %v2132 = vmul.f32 %v2078, 1.442695
        %v2133 = vpow.pop %v2132
        %v2134 = vmul.f32 %v2079, 1.442695
        %v2135 = vpow.pop %v2134
        %v2136 = vmul.f32 %v2080, 1.442695
        %v2137 = vpow.pop %v2136
        %v2138 = vmul.f32 %v2081, 1.442695
        %v2139 = vpow.pop %v2138
        %v2140 = vmul.f32 %v2082, 1.442695
        %v2141 = vpow.pop %v2140
        %v2142 = vmul.f32 %v2083, 1.442695
        %v2143 = vpow.pop %v2142
        %v2144 = vadd.f32 %v2085, 1.0
        %v2145 = vadd.f32 %v2087, 1.0
        %v2146 = vadd.f32 %v2089, 1.0
        %v2147 = vadd.f32 %v2091, 1.0
        %v2148 = vadd.f32 %v2093, 1.0
        %v2149 = vadd.f32 %v2095, 1.0
        %v2150 = vadd.f32 %v2097, 1.0
        %v2151 = vadd.f32 %v2099, 1.0
        %v2152 = vadd.f32 %v2101, 1.0
        %v2153 = vadd.f32 %v2103, 1.0
        %v2154 = vadd.f32 %v2105, 1.0
        %v2155 = vadd.f32 %v2107, 1.0
        %v2156 = vadd.f32 %v2109, 1.0
        %v2157 = vadd.f32 %v2111, 1.0
        %v2158 = vadd.f32 %v2113, 1.0
        %v2159 = vadd.f32 %v2115, 1.0
        %v2160 = vadd.f32 %v2117, 1.0
        %v2161 = vadd.f32 %v2119, 1.0
        %v2162 = vadd.f32 %v2121, 1.0
        %v2163 = vadd.f32 %v2123, 1.0
        %v2164 = vadd.f32 %v2125, 1.0
        %v2165 = vadd.f32 %v2127, 1.0
        %v2166 = vadd.f32 %v2129, 1.0
        %v2167 = vadd.f32 %v2131, 1.0
        %v2168 = vadd.f32 %v2133, 1.0
        %v2169 = vadd.f32 %v2135, 1.0
        %v2170 = vadd.f32 %v2137, 1.0
        %v2171 = vadd.f32 %v2139, 1.0
        %v2172 = vadd.f32 %v2141, 1.0
        %v2173 = vadd.f32 %v2143, 1.0
        %v2174 = vrcp.pop %v2144
        %v2175 = vmul.f32 1.0, %v2174
        %v2176 = vrcp.pop %v2145
        %v2177 = vmul.f32 1.0, %v2176
        %v2178 = vrcp.pop %v2146
        %v2179 = vmul.f32 1.0, %v2178
        %v2180 = vrcp.pop %v2147
        %v2181 = vmul.f32 1.0, %v2180
        %v2182 = vrcp.pop %v2148
        %v2183 = vmul.f32 1.0, %v2182
        %v2184 = vrcp.pop %v2149
        %v2185 = vmul.f32 1.0, %v2184
        %v2186 = vrcp.pop %v2150
        %v2187 = vmul.f32 1.0, %v2186
        %v2188 = vrcp.pop %v2151
        %v2189 = vmul.f32 1.0, %v2188
        %v2190 = vrcp.pop %v2152
        %v2191 = vmul.f32 1.0, %v2190
        %v2192 = vrcp.pop %v2153
        %v2193 = vmul.f32 1.0, %v2192
        %v2194 = vrcp.pop %v2154
        %v2195 = vmul.f32 1.0, %v2194
        %v2196 = vrcp.pop %v2155
        %v2197 = vmul.f32 1.0, %v2196
        %v2198 = vrcp.pop %v2156
        %v2199 = vmul.f32 1.0, %v2198
        %v2200 = vrcp.pop %v2157
        %v2201 = vmul.f32 1.0, %v2200
        %v2202 = vrcp.pop %v2158
        %v2203 = vmul.f32 1.0, %v2202
        %v2204 = vrcp.pop %v2159
        %v2205 = vmul.f32 1.0, %v2204
        %v2206 = vrcp.pop %v2160
        %v2207 = vmul.f32 1.0, %v2206
        %v2208 = vrcp.pop %v2161
        %v2209 = vmul.f32 1.0, %v2208
        %v2210 = vrcp.pop %v2162
        %v2211 = vmul.f32 1.0, %v2210
        %v2212 = vrcp.pop %v2163
        %v2213 = vmul.f32 1.0, %v2212
        %v2214 = vrcp.pop %v2164
        %v2215 = vmul.f32 1.0, %v2214
        %v2216 = vrcp.pop %v2165
        %v2217 = vmul.f32 1.0, %v2216
        %v2218 = vrcp.pop %v2166
        %v2219 = vmul.f32 1.0, %v2218
        %v2220 = vrcp.pop %v2167
        %v2221 = vmul.f32 1.0, %v2220
        %v2222 = vrcp.pop %v2168
        %v2223 = vmul.f32 1.0, %v2222
        %v2224 = vrcp.pop %v2169
        %v2225 = vmul.f32 1.0, %v2224
        %v2226 = vrcp.pop %v2170
        %v2227 = vmul.f32 1.0, %v2226
        %v2228 = vrcp.pop %v2171
        %v2229 = vmul.f32 1.0, %v2228
        %v2230 = vrcp.pop %v2172
        %v2231 = vmul.f32 1.0, %v2230
        %v2232 = vrcp.pop %v2173
        %v2233 = vmul.f32 1.0, %v2232
        %v2234 = vmul.f32 %v1936, %v2175
        %v2235 = vmul.f32 %v1939, %v2177
        %v2236 = vmul.f32 %v1944, %v2179
        %v2237 = vmul.f32 %v1947, %v2181
        %v2238 = vmul.f32 %v1952, %v2183
        %v2239 = vmul.f32 %v1955, %v2185
        %v2240 = vmul.f32 %v1960, %v2187
        %v2241 = vmul.f32 %v1963, %v2189
        %v2242 = vmul.f32 %v1968, %v2191
        %v2243 = vmul.f32 %v1971, %v2193
        %v2244 = vmul.f32 %v1976, %v2195
        %v2245 = vmul.f32 %v1979, %v2197
        %v2246 = vmul.f32 %v1984, %v2199
        %v2247 = vmul.f32 %v1987, %v2201
        %v2248 = vmul.f32 %v1992, %v2203
        %v2249 = vmul.f32 %v1995, %v2205
        %v2250 = vmul.f32 %v2000, %v2207
        %v2251 = vmul.f32 %v2003, %v2209
        %v2252 = vmul.f32 %v2008, %v2211
        %v2253 = vmul.f32 %v2011, %v2213
        %v2254 = vmul.f32 %v2016, %v2215
        %v2255 = vmul.f32 %v2019, %v2217
        %v2256 = vmul.f32 %v2024, %v2219
        %v2257 = vmul.f32 %v2027, %v2221
        %v2258 = vmul.f32 %v2032, %v2223
        %v2259 = vmul.f32 %v2035, %v2225
        %v2260 = vmul.f32 %v2040, %v2227
        %v2261 = vmul.f32 %v2043, %v2229
        %v2262 = vmul.f32 %v2048, %v2231
        %v2263 = vmul.f32 %v2051, %v2233
        %v2264 = vld [vmem:[#allocation3] sm:$0xff]
        %v2265 = vld [vmem:[#allocation3 + $0x8] sm:$0xff]
        %v2266 = vld [vmem:[#allocation3 + $0x10] sm:$0xff]
        %v2267 = vld [vmem:[#allocation3 + $0x18] sm:$0xff]
        %v2268 = vld [vmem:[#allocation3 + $0x20] sm:$0xff]
        %v2269 = vld [vmem:[#allocation3 + $0x28] sm:$0xff]
        %v2270 = vld [vmem:[#allocation3 + $0x30] sm:$0xff]
        %v2271 = vld [vmem:[#allocation3 + $0x38] sm:$0xff]
        %v2272 = vld [vmem:[#allocation3 + $0x40] sm:$0xff]
        %v2273 = vld [vmem:[#allocation3 + $0x48] sm:$0xff]
        %v2274 = vld [vmem:[#allocation3 + $0x50] sm:$0xff]
        %v2275 = vld [vmem:[#allocation3 + $0x58] sm:$0xff]
        %v2276 = vld [vmem:[#allocation3 + $0x60] sm:$0xff]
        %v2277 = vld [vmem:[#allocation3 + $0x68] sm:$0xff]
        %v2278 = vld [vmem:[#allocation3 + $0x70] sm:$0xff]
        %v2279 = vld [vmem:[#allocation3 + $0x78] sm:$0xff]
        %v2280 = vpack.c.bf16 %v2235, %v2234
        %v2281 = vpack.c.bf16 %v2237, %v2236
        %v2282 = vpack.c.bf16 %v2239, %v2238
        %v2283 = vpack.c.bf16 %v2241, %v2240
        %v2284 = vpack.c.bf16 %v2243, %v2242
        %v2285 = vpack.c.bf16 %v2245, %v2244
        %v2286 = vpack.c.bf16 %v2247, %v2246
        %v2287 = vpack.c.bf16 %v2249, %v2248
        %v2288 = vpack.c.bf16 %v2251, %v2250
        %v2289 = vpack.c.bf16 %v2253, %v2252
        %v2290 = vpack.c.bf16 %v2255, %v2254
        %v2291 = vpack.c.bf16 %v2257, %v2256
        %v2292 = vpack.c.bf16 %v2259, %v2258
        %v2293 = vpack.c.bf16 %v2261, %v2260
        %v2294 = vpack.c.bf16 %v2263, %v2262
        %2295 = vxpose.xlu0.c.b16.start [1/8] %v1180, 128
        %2296 = vxpose.xlu0.c.b16.cont [2/8] %v1183, 128
        %2297 = vxpose.xlu0.c.b16.cont [3/8] %v1186, 128
        %2298 = vxpose.xlu0.c.b16.cont [4/8] %v1189, 128
        %2299 = vxpose.xlu0.c.b16.cont [5/8] %v1192, 128
        %2300 = vxpose.xlu0.c.b16.cont [6/8] %v1195, 128
        %2301 = vxpose.xlu0.c.b16.cont [7/8] %v1198, 128
        %2302 = vxpose.xlu0.c.b16.end [8/8] %v1201, 128
        %v2303 = vpop.trf.xlu0
        %v2304 = vpop.trf.xlu0
        %v2305 = vpop.trf.xlu0
        %v2306 = vpop.trf.xlu0
        %v2307 = vpop.trf.xlu0
        %v2308 = vpop.trf.xlu0
        %v2309 = vpop.trf.xlu0
        %v2310 = vpop.trf.xlu0
        %2311 = vxpose.xlu0.c.b16.start [1/8] %v1204, 128
        %2312 = vxpose.xlu0.c.b16.cont [2/8] %v1207, 128
        %2313 = vxpose.xlu0.c.b16.cont [3/8] %v1210, 128
        %2314 = vxpose.xlu0.c.b16.cont [4/8] %v1213, 128
        %2315 = vxpose.xlu0.c.b16.cont [5/8] %v1216, 128
        %2316 = vxpose.xlu0.c.b16.cont [6/8] %v1219, 128
        %2317 = vxpose.xlu0.c.b16.cont [7/8] %v1222, 128
        %2318 = vxpose.xlu0.c.b16.end [8/8] 0, 128
        %v2319 = vpop.trf.xlu0
        %v2320 = vpop.trf.xlu0
        %v2321 = vpop.trf.xlu0
        %v2322 = vpop.trf.xlu0
        %v2323 = vpop.trf.xlu0
        %v2324 = vpop.trf.xlu0
        %v2325 = vpop.trf.xlu0
        %v2326 = vpop.trf.xlu0
        %vm2327 = vcmask 916480
        %v2329 = vsel %vm2327, %v2319, 0
        %v2332 = vsel %vm2327, %v2320, 0
        %v2335 = vsel %vm2327, %v2321, 0
        %v2338 = vsel %vm2327, %v2322, 0
        %v2341 = vsel %vm2327, %v2323, 0
        %v2344 = vsel %vm2327, %v2324, 0
        %v2347 = vsel %vm2327, %v2325, 0
        %v2350 = vsel %vm2327, %v2326, 0
        %2352 = vmatprep.subr.bf16.mxu0 0
        %2353 = vmatpush1.bf16.msra.mxu0 %v2280
        %2354 = vmatprep.subr.bf16.mxu0 0
        %2355 = vmatpush1.bf16.msra.mxu0 %v2281
        %2356 = vmatprep.subr.bf16.mxu0 0
        %2357 = vmatpush1.bf16.msra.mxu0 %v2282
        %2358 = vmatprep.subr.bf16.mxu0 0
        %2359 = vmatpush1.bf16.msra.mxu0 %v2283
        %2360 = vmatprep.subr.bf16.mxu0 0
        %2361 = vmatpush1.bf16.msra.mxu0 %v2284
        %2362 = vmatprep.subr.bf16.mxu0 0
        %2363 = vmatpush1.bf16.msra.mxu0 %v2285
        %2364 = vmatprep.subr.bf16.mxu0 0
        %2365 = vmatpush1.bf16.msra.mxu0 %v2286
        %2366 = vmatprep.subr.bf16.mxu0 0
        %2367 = vmatpush1.bf16.msra.mxu0 %v2287
        %2368 = vmatprep.subr.bf16.mxu0 0
        %2369 = vmatpush1.bf16.msra.mxu0 %v2288
        %2370 = vmatprep.subr.bf16.mxu0 0
        %2371 = vmatpush1.bf16.msra.mxu0 %v2289
        %2372 = vmatprep.subr.bf16.mxu0 0
        %2373 = vmatpush1.bf16.msra.mxu0 %v2290
        %2374 = vmatprep.subr.bf16.mxu0 0
        %2375 = vmatpush1.bf16.msra.mxu0 %v2291
        %2376 = vmatprep.subr.bf16.mxu0 0
        %2377 = vmatpush1.bf16.msra.mxu0 %v2292
        %2378 = vmatprep.subr.bf16.mxu0 0
        %2379 = vmatpush1.bf16.msra.mxu0 %v2293
        %2380 = vmatprep.subr.bf16.mxu0 0
        %2381 = vmatpush1.bf16.msra.mxu0 %v2294
        %2382 = vmatprep.subr.bf16.mxu0 0
        %2383 = vmatpush1.bf16.msra.mxu0 0
        %2384 = vmatprep.mubr.bf16.mxu0 %v2329
        %2385 = vmatmul.mubr.bf16.gmra.mrb[0].mxu0 %v2303
        %v2386 = vpop.f32.mrb[0].mxu0
        %v2387 = vadd.f32 0.0, %v2386
        %v2388 = vpop.f32.mrb[0].mxu0
        %v2389 = vpop.f32.mrb[0].mxu0
        %v2390 = vadd.f32 0.0, %v2389
        %v2391 = vpop.f32.mrb[0].mxu0
        %2392 = vmatprep.mubr.bf16.mxu0 %v2332
        %2393 = vmatmul.mubr.bf16.gmra.mrb[0].mxu0 %v2304
        %v2394 = vpop.f32.mrb[0].mxu0
        %v2395 = vadd.f32 0.0, %v2394
        %v2396 = vpop.f32.mrb[0].mxu0
        %v2397 = vpop.f32.mrb[0].mxu0
        %v2398 = vadd.f32 0.0, %v2397
        %v2399 = vpop.f32.mrb[0].mxu0
        %2400 = vmatprep.mubr.bf16.mxu0 %v2335
        %2401 = vmatmul.mubr.bf16.gmra.mrb[0].mxu0 %v2305
        %v2402 = vpop.f32.mrb[0].mxu0
        %v2403 = vadd.f32 0.0, %v2402
        %v2404 = vpop.f32.mrb[0].mxu0
        %v2405 = vpop.f32.mrb[0].mxu0
        %v2406 = vadd.f32 0.0, %v2405
        %v2407 = vpop.f32.mrb[0].mxu0
        %2408 = vmatprep.mubr.bf16.mxu0 %v2338
        %2409 = vmatmul.mubr.bf16.gmra.mrb[0].mxu0 %v2306
        %v2410 = vpop.f32.mrb[0].mxu0
        %v2411 = vadd.f32 0.0, %v2410
        %v2412 = vpop.f32.mrb[0].mxu0
        %v2413 = vpop.f32.mrb[0].mxu0
        %v2414 = vadd.f32 0.0, %v2413
        %v2415 = vpop.f32.mrb[0].mxu0
        %2416 = vmatprep.mubr.bf16.mxu0 %v2341
        %2417 = vmatmul.mubr.bf16.gmra.mrb[0].mxu0 %v2307
        %v2418 = vpop.f32.mrb[0].mxu0
        %v2419 = vadd.f32 0.0, %v2418
        %v2420 = vpop.f32.mrb[0].mxu0
        %v2421 = vpop.f32.mrb[0].mxu0
        %v2422 = vadd.f32 0.0, %v2421
        %v2423 = vpop.f32.mrb[0].mxu0
        %2424 = vmatprep.mubr.bf16.mxu0 %v2344
        %2425 = vmatmul.mubr.bf16.gmra.mrb[0].mxu0 %v2308
        %v2426 = vpop.f32.mrb[0].mxu0
        %v2427 = vadd.f32 0.0, %v2426
        %v2428 = vpop.f32.mrb[0].mxu0
        %v2429 = vpop.f32.mrb[0].mxu0
        %v2430 = vadd.f32 0.0, %v2429
        %v2431 = vpop.f32.mrb[0].mxu0
        %2432 = vmatprep.mubr.bf16.mxu0 %v2347
        %2433 = vmatmul.mubr.bf16.gmra.mrb[0].mxu0 %v2309
        %v2434 = vpop.f32.mrb[0].mxu0
        %v2435 = vadd.f32 0.0, %v2434
        %v2436 = vpop.f32.mrb[0].mxu0
        %v2437 = vpop.f32.mrb[0].mxu0
        %v2438 = vadd.f32 0.0, %v2437
        %v2439 = vpop.f32.mrb[0].mxu0
        %2440 = vmatprep.mubr.bf16.mxu0 %v2350
        %2441 = vmatmul.mubr.bf16.gmra.mrb[0].mxu0 %v2310
        %v2442 = vpop.f32.mrb[0].mxu0
        %v2443 = vadd.f32 0.0, %v2442
        %v2444 = vpop.f32.mrb[0].mxu0
        %v2445 = vpop.f32.mrb[0].mxu0
        %v2446 = vadd.f32 0.0, %v2445
        %v2447 = vpop.f32.mrb[0].mxu0
        %2448 = vdwg.mxu0
        %v2449 = vadd.f32 %v2264, %v2387
        %v2450 = vadd.f32 %v2265, %v2390
        %v2451 = vadd.f32 %v2266, %v2395
        %v2452 = vadd.f32 %v2267, %v2398
        %v2453 = vadd.f32 %v2268, %v2403
        %v2454 = vadd.f32 %v2269, %v2406
        %v2455 = vadd.f32 %v2270, %v2411
        %v2456 = vadd.f32 %v2271, %v2414
        %v2457 = vadd.f32 %v2272, %v2419
        %v2458 = vadd.f32 %v2273, %v2422
        %v2459 = vadd.f32 %v2274, %v2427
        %v2460 = vadd.f32 %v2275, %v2430
        %v2461 = vadd.f32 %v2276, %v2435
        %v2462 = vadd.f32 %v2277, %v2438
        %v2463 = vadd.f32 %v2278, %v2443
        %v2464 = vadd.f32 %v2279, %v2446
        %2465 = vst [vmem:[#allocation3] sm:$0xff] %v2449
        %2466 = vst [vmem:[#allocation3 + $0x8] sm:$0xff] %v2450
        %2467 = vst [vmem:[#allocation3 + $0x10] sm:$0xff] %v2451
        %2468 = vst [vmem:[#allocation3 + $0x18] sm:$0xff] %v2452
        %2469 = vst [vmem:[#allocation3 + $0x20] sm:$0xff] %v2453
        %2470 = vst [vmem:[#allocation3 + $0x28] sm:$0xff] %v2454
        %2471 = vst [vmem:[#allocation3 + $0x30] sm:$0xff] %v2455
        %2472 = vst [vmem:[#allocation3 + $0x38] sm:$0xff] %v2456
        %2473 = vst [vmem:[#allocation3 + $0x40] sm:$0xff] %v2457
        %2474 = vst [vmem:[#allocation3 + $0x48] sm:$0xff] %v2458
        %2475 = vst [vmem:[#allocation3 + $0x50] sm:$0xff] %v2459
        %2476 = vst [vmem:[#allocation3 + $0x58] sm:$0xff] %v2460
        %2477 = vst [vmem:[#allocation3 + $0x60] sm:$0xff] %v2461
        %2478 = vst [vmem:[#allocation3 + $0x68] sm:$0xff] %v2462
        %2479 = vst [vmem:[#allocation3 + $0x70] sm:$0xff] %v2463
        %2480 = vst [vmem:[#allocation3 + $0x78] sm:$0xff] %v2464
        // Predicated region
        $region65: #{tpu_custom_call.1} parent=51 // pred_check
          %p2481 = pneg %p368
        $region66: #{tpu_custom_call.1} parent=51 // pred_check_branch
          %2483 = sbr.rel (%p2481) target = $region68
        $region67: #{tpu_custom_call.1} parent=51 // pred_region
          %v2484 = vld [vmem:[#allocation2] sm:$0xff]
          %v2485 = vld [vmem:[#allocation2 + $0x8] sm:$0xff]
          %v2486 = vld [vmem:[#allocation2 + $0x10] sm:$0xff]
          %v2487 = vld [vmem:[#allocation2 + $0x18] sm:$0xff]
          %v2488 = vld [vmem:[#allocation2 + $0x20] sm:$0xff]
          %v2489 = vld [vmem:[#allocation2 + $0x28] sm:$0xff]
          %v2490 = vld [vmem:[#allocation2 + $0x30] sm:$0xff]
          %v2491 = vld [vmem:[#allocation2 + $0x38] sm:$0xff]
          %v2492 = vld [vmem:[#allocation2 + $0x40] sm:$0xff]
          %v2493 = vld [vmem:[#allocation2 + $0x48] sm:$0xff]
          %v2494 = vld [vmem:[#allocation2 + $0x50] sm:$0xff]
          %v2495 = vld [vmem:[#allocation2 + $0x58] sm:$0xff]
          %v2496 = vld [vmem:[#allocation2 + $0x60] sm:$0xff]
          %v2497 = vld [vmem:[#allocation2 + $0x68] sm:$0xff]
          %v2498 = vld [vmem:[#allocation2 + $0x70] sm:$0xff]
          %v2499 = vld [vmem:[#allocation2 + $0x78] sm:$0xff]
          %v2500 = vld [vmem:[#allocation3] sm:$0xff]
          %v2501 = vld [vmem:[#allocation3 + $0x8] sm:$0xff]
          %v2502 = vld [vmem:[#allocation3 + $0x10] sm:$0xff]
          %v2503 = vld [vmem:[#allocation3 + $0x18] sm:$0xff]
          %v2504 = vld [vmem:[#allocation3 + $0x20] sm:$0xff]
          %v2505 = vld [vmem:[#allocation3 + $0x28] sm:$0xff]
          %v2506 = vld [vmem:[#allocation3 + $0x30] sm:$0xff]
          %v2507 = vld [vmem:[#allocation3 + $0x38] sm:$0xff]
          %v2508 = vld [vmem:[#allocation3 + $0x40] sm:$0xff]
          %v2509 = vld [vmem:[#allocation3 + $0x48] sm:$0xff]
          %v2510 = vld [vmem:[#allocation3 + $0x50] sm:$0xff]
          %v2511 = vld [vmem:[#allocation3 + $0x58] sm:$0xff]
          %v2512 = vld [vmem:[#allocation3 + $0x60] sm:$0xff]
          %v2513 = vld [vmem:[#allocation3 + $0x68] sm:$0xff]
          %v2514 = vld [vmem:[#allocation3 + $0x70] sm:$0xff]
          %v2515 = vld [vmem:[#allocation3 + $0x78] sm:$0xff]
          %v2516 = vpack.c.bf16 %v2485, %v2484
          %v2517 = vpack.c.bf16 %v2501, %v2500
          %v2518 = vpack.c.bf16 %v2487, %v2486
          %v2519 = vpack.c.bf16 %v2503, %v2502
          %v2520 = vpack.c.bf16 %v2489, %v2488
          %v2521 = vpack.c.bf16 %v2505, %v2504
          %v2522 = vpack.c.bf16 %v2491, %v2490
          %v2523 = vpack.c.bf16 %v2507, %v2506
          %v2524 = vpack.c.bf16 %v2493, %v2492
          %v2525 = vpack.c.bf16 %v2509, %v2508
          %v2526 = vpack.c.bf16 %v2495, %v2494
          %v2527 = vpack.c.bf16 %v2511, %v2510
          %v2528 = vpack.c.bf16 %v2497, %v2496
          %v2529 = vpack.c.bf16 %v2513, %v2512
          %v2530 = vpack.c.bf16 %v2499, %v2498
          %v2531 = vpack.c.bf16 %v2515, %v2514
          %v2532 = vld [vmem:[%s317 + $0xc0] sm:$0xf]
          %v2533 = vld [vmem:[%s317 + $0xc4] sm:$0xf]
          %v2534 = vld [vmem:[%s317 + $0xc8] sm:$0xf]
          %v2535 = vld [vmem:[%s317 + $0xcc] sm:$0xf]
          %v2536 = vld [vmem:[%s317 + $0xd0] sm:$0xf]
          %v2537 = vld [vmem:[%s317 + $0xd4] sm:$0xf]
          %v2538 = vld [vmem:[%s317 + $0xd8] sm:$0xf]
          %v2539 = vld [vmem:[%s317 + $0xdc] sm:$0xf]
          %v2540 = vld [vmem:[%s317 + $0xe0] sm:$0xf]
          %v2541 = vld [vmem:[%s317 + $0xe4] sm:$0xf]
          %v2542 = vld [vmem:[%s317 + $0xe8] sm:$0xf]
          %v2543 = vld [vmem:[%s317 + $0xec] sm:$0xf]
          %v2544 = vld [vmem:[%s317 + $0xf0] sm:$0xf]
          %v2545 = vld [vmem:[%s317 + $0xf4] sm:$0xf]
          %v2546 = vld [vmem:[%s317 + $0xf8] sm:$0xf]
          %v2547 = vld [vmem:[%s317 + $0xfc] sm:$0xf]
          %v2548 = vld [vmem:[%s317 + $0x100] sm:$0xf]
          %v2549 = vld [vmem:[%s317 + $0x104] sm:$0xf]
          %v2550 = vld [vmem:[%s317 + $0x108] sm:$0xf]
          %v2551 = vld [vmem:[%s317 + $0x10c] sm:$0xf]
          %v2552 = vld [vmem:[%s317 + $0x110] sm:$0xf]
          %v2553 = vld [vmem:[%s317 + $0x114] sm:$0xf]
          %v2554 = vld [vmem:[%s317 + $0x118] sm:$0xf]
          %v2555 = vld [vmem:[%s317 + $0x11c] sm:$0xf]
          %v2556 = vld [vmem:[%s317 + $0x120] sm:$0xf]
          %v2557 = vld [vmem:[%s317 + $0x124] sm:$0xf]
          %v2558 = vld [vmem:[%s317 + $0x128] sm:$0xf]
          %v2559 = vld [vmem:[%s317 + $0x12c] sm:$0xf]
          %v2560 = vld [vmem:[%s317 + $0x130] sm:$0xf]
          %v2561 = vld [vmem:[%s317 + $0x134] sm:$0xf]
          %v2562 = vld [vmem:[%s317 + $0x138] sm:$0xf]
          %v2563 = vld [vmem:[%s317 + $0x13c] sm:$0xf]
          %v2564 = vld [vmem:[%s365 + $0x1] sm:$0x1]
          %v2565 = vlaneseq
          %v2566 = vshrl.u32 %v2565, 7
          %v2567 = vsub.s32 0, %v2566
          %v2568 = vrot.slane %v2564, %v2567
          %v2601 = vunpack.c.l.b16 %v2532
          %v2602 = vunpack.c.l.b16 %v2533
          %v2603 = vunpack.c.l.b16 %v2534
          %v2604 = vunpack.c.l.b16 %v2535
          %v2605 = vunpack.c.l.b16 %v2536
          %v2606 = vunpack.c.l.b16 %v2537
          %v2607 = vunpack.c.l.b16 %v2538
          %v2608 = vunpack.c.l.b16 %v2539
          %v2609 = vunpack.c.l.b16 %v2540
          %v2610 = vunpack.c.l.b16 %v2541
          %v2611 = vunpack.c.l.b16 %v2542
          %v2612 = vunpack.c.l.b16 %v2543
          %v2613 = vunpack.c.l.b16 %v2544
          %v2614 = vunpack.c.l.b16 %v2545
          %v2615 = vunpack.c.l.b16 %v2546
          %v2616 = vunpack.c.l.b16 %v2547
          %v2617 = vunpack.c.l.b16 %v2548
          %v2618 = vunpack.c.l.b16 %v2549
          %v2619 = vunpack.c.l.b16 %v2550
          %v2620 = vunpack.c.l.b16 %v2551
          %v2621 = vunpack.c.l.b16 %v2552
          %v2622 = vunpack.c.l.b16 %v2553
          %v2623 = vunpack.c.l.b16 %v2554
          %v2624 = vunpack.c.l.b16 %v2555
          %v2625 = vunpack.c.l.b16 %v2556
          %v2626 = vunpack.c.l.b16 %v2557
          %v2627 = vunpack.c.l.b16 %v2558
          %v2628 = vunpack.c.l.b16 %v2559
          %v2629 = vunpack.c.l.b16 %v2560
          %v2630 = vunpack.c.l.b16 %v2561
          %v2631 = vunpack.c.l.b16 %v2562
          %v2632 = vunpack.c.l.b16 %v2563
          %v2633 = vpack.c.b16 %v2602, %v2601
          %v2634 = vpack.c.b16 %v2604, %v2603
          %v2635 = vpack.c.b16 %v2606, %v2605
          %v2636 = vpack.c.b16 %v2608, %v2607
          %v2637 = vpack.c.b16 %v2610, %v2609
          %v2638 = vpack.c.b16 %v2612, %v2611
          %v2639 = vpack.c.b16 %v2614, %v2613
          %v2640 = vpack.c.b16 %v2616, %v2615
          %v2641 = vpack.c.b16 %v2618, %v2617
          %v2642 = vpack.c.b16 %v2620, %v2619
          %v2643 = vpack.c.b16 %v2622, %v2621
          %v2644 = vpack.c.b16 %v2624, %v2623
          %v2645 = vpack.c.b16 %v2626, %v2625
          %v2646 = vpack.c.b16 %v2628, %v2627
          %v2647 = vpack.c.b16 %v2630, %v2629
          %v2648 = vpack.c.b16 %v2632, %v2631
          %2665 = vmatprep.subr.bf16.mxu0 0
          %2666 = vmatpush1.bf16.msra.mxu0 %v2633
          %2667 = vmatprep.subr.bf16.mxu0 0
          %2668 = vmatpush1.bf16.msra.mxu0 %v2634
          %2669 = vmatprep.subr.bf16.mxu0 0
          %2670 = vmatpush1.bf16.msra.mxu0 %v2635
          %2671 = vmatprep.subr.bf16.mxu0 0
          %2672 = vmatpush1.bf16.msra.mxu0 %v2636
          %2673 = vmatprep.subr.bf16.mxu0 0
          %2674 = vmatpush1.bf16.msra.mxu0 %v2637
          %2675 = vmatprep.subr.bf16.mxu0 0
          %2676 = vmatpush1.bf16.msra.mxu0 %v2638
          %2677 = vmatprep.subr.bf16.mxu0 0
          %2678 = vmatpush1.bf16.msra.mxu0 %v2639
          %2679 = vmatprep.subr.bf16.mxu0 0
          %2680 = vmatpush1.bf16.msra.mxu0 %v2640
          %2681 = vmatprep.subr.bf16.mxu0 0
          %2682 = vmatpush1.bf16.msra.mxu0 %v2641
          %2683 = vmatprep.subr.bf16.mxu0 0
          %2684 = vmatpush1.bf16.msra.mxu0 %v2642
          %2685 = vmatprep.subr.bf16.mxu0 0
          %2686 = vmatpush1.bf16.msra.mxu0 %v2643
          %2687 = vmatprep.subr.bf16.mxu0 0
          %2688 = vmatpush1.bf16.msra.mxu0 %v2644
          %2689 = vmatprep.subr.bf16.mxu0 0
          %2690 = vmatpush1.bf16.msra.mxu0 %v2645
          %2691 = vmatprep.subr.bf16.mxu0 0
          %2692 = vmatpush1.bf16.msra.mxu0 %v2646
          %2693 = vmatprep.subr.bf16.mxu0 0
          %2694 = vmatpush1.bf16.msra.mxu0 %v2647
          %2695 = vmatprep.subr.bf16.mxu0 0
          %2696 = vmatpush1.bf16.msra.mxu0 %v2648
          %2697 = vmatprep.mubr.bf16.mxu0 %v2517
          %2698 = vmatmul.mubr.bf16.gmra.mrb[0].mxu0 %v2516
          %v2699 = vpop.f32.mrb[0].mxu0
          %v2700 = vadd.f32 %v2568, %v2699
          %v2701 = vpop.f32.mrb[0].mxu0
          %v2702 = vpop.f32.mrb[0].mxu0
          %v2703 = vadd.f32 %v2568, %v2702
          %v2704 = vpop.f32.mrb[0].mxu0
          %2705 = vmatprep.mubr.bf16.mxu0 %v2519
          %2706 = vmatmul.mubr.bf16.gmra.mrb[0].mxu0 %v2518
          %v2707 = vpop.f32.mrb[0].mxu0
          %v2708 = vadd.f32 %v2568, %v2707
          %v2709 = vpop.f32.mrb[0].mxu0
          %v2710 = vpop.f32.mrb[0].mxu0
          %v2711 = vadd.f32 %v2568, %v2710
          %v2712 = vpop.f32.mrb[0].mxu0
          %2713 = vmatprep.mubr.bf16.mxu0 %v2521
          %2714 = vmatmul.mubr.bf16.gmra.mrb[0].mxu0 %v2520
          %v2715 = vpop.f32.mrb[0].mxu0
          %v2716 = vadd.f32 %v2568, %v2715
          %v2717 = vpop.f32.mrb[0].mxu0
          %v2718 = vpop.f32.mrb[0].mxu0
          %v2719 = vadd.f32 %v2568, %v2718
          %v2720 = vpop.f32.mrb[0].mxu0
          %2721 = vmatprep.mubr.bf16.mxu0 %v2523
          %2722 = vmatmul.mubr.bf16.gmra.mrb[0].mxu0 %v2522
          %v2723 = vpop.f32.mrb[0].mxu0
          %v2724 = vadd.f32 %v2568, %v2723
          %v2725 = vpop.f32.mrb[0].mxu0
          %v2726 = vpop.f32.mrb[0].mxu0
          %v2727 = vadd.f32 %v2568, %v2726
          %v2728 = vpop.f32.mrb[0].mxu0
          %2729 = vmatprep.mubr.bf16.mxu0 %v2525
          %2730 = vmatmul.mubr.bf16.gmra.mrb[0].mxu0 %v2524
          %v2731 = vpop.f32.mrb[0].mxu0
          %v2732 = vadd.f32 %v2568, %v2731
          %v2733 = vpop.f32.mrb[0].mxu0
          %v2734 = vpop.f32.mrb[0].mxu0
          %v2735 = vadd.f32 %v2568, %v2734
          %v2736 = vpop.f32.mrb[0].mxu0
          %2737 = vmatprep.mubr.bf16.mxu0 %v2527
          %2738 = vmatmul.mubr.bf16.gmra.mrb[0].mxu0 %v2526
          %v2739 = vpop.f32.mrb[0].mxu0
          %v2740 = vadd.f32 %v2568, %v2739
          %v2741 = vpop.f32.mrb[0].mxu0
          %v2742 = vpop.f32.mrb[0].mxu0
          %v2743 = vadd.f32 %v2568, %v2742
          %v2744 = vpop.f32.mrb[0].mxu0
          %2745 = vmatprep.mubr.bf16.mxu0 %v2529
          %2746 = vmatmul.mubr.bf16.gmra.mrb[0].mxu0 %v2528
          %v2747 = vpop.f32.mrb[0].mxu0
          %v2748 = vadd.f32 %v2568, %v2747
          %v2749 = vpop.f32.mrb[0].mxu0
          %v2750 = vpop.f32.mrb[0].mxu0
          %v2751 = vadd.f32 %v2568, %v2750
          %v2752 = vpop.f32.mrb[0].mxu0
          %2753 = vmatprep.mubr.bf16.mxu0 %v2531
          %2754 = vmatmul.mubr.bf16.gmra.mrb[0].mxu0 %v2530
          %v2755 = vpop.f32.mrb[0].mxu0
          %v2756 = vadd.f32 %v2568, %v2755
          %v2757 = vpop.f32.mrb[0].mxu0
          %v2758 = vpop.f32.mrb[0].mxu0
          %v2759 = vadd.f32 %v2568, %v2758
          %v2760 = vpop.f32.mrb[0].mxu0
          %2761 = vdwg.mxu0
          %v2762 = vxor.u32 %v2700, 2147483648
          %v2763 = vxor.u32 %v2703, 2147483648
          %v2764 = vxor.u32 %v2708, 2147483648
          %v2765 = vxor.u32 %v2711, 2147483648
          %v2766 = vxor.u32 %v2716, 2147483648
          %v2767 = vxor.u32 %v2719, 2147483648
          %v2768 = vxor.u32 %v2724, 2147483648
          %v2769 = vxor.u32 %v2727, 2147483648
          %v2770 = vxor.u32 %v2732, 2147483648
          %v2771 = vxor.u32 %v2735, 2147483648
          %v2772 = vxor.u32 %v2740, 2147483648
          %v2773 = vxor.u32 %v2743, 2147483648
          %v2774 = vxor.u32 %v2748, 2147483648
          %v2775 = vxor.u32 %v2751, 2147483648
          %v2776 = vxor.u32 %v2756, 2147483648
          %v2777 = vxor.u32 %v2759, 2147483648
          %v2778 = vmul.f32 %v2762, 1.442695
          %v2779 = vpow.pop %v2778
          %v2780 = vmul.f32 %v2763, 1.442695
          %v2781 = vpow.pop %v2780
          %v2782 = vmul.f32 %v2764, 1.442695
          %v2783 = vpow.pop %v2782
          %v2784 = vmul.f32 %v2765, 1.442695
          %v2785 = vpow.pop %v2784
          %v2786 = vmul.f32 %v2766, 1.442695
          %v2787 = vpow.pop %v2786
          %v2788 = vmul.f32 %v2767, 1.442695
          %v2789 = vpow.pop %v2788
          %v2790 = vmul.f32 %v2768, 1.442695
          %v2791 = vpow.pop %v2790
          %v2792 = vmul.f32 %v2769, 1.442695
          %v2793 = vpow.pop %v2792
          %v2794 = vmul.f32 %v2770, 1.442695
          %v2795 = vpow.pop %v2794
          %v2796 = vmul.f32 %v2771, 1.442695
          %v2797 = vpow.pop %v2796
          %v2798 = vmul.f32 %v2772, 1.442695
          %v2799 = vpow.pop %v2798
          %v2800 = vmul.f32 %v2773, 1.442695
          %v2801 = vpow.pop %v2800
          %v2802 = vmul.f32 %v2774, 1.442695
          %v2803 = vpow.pop %v2802
          %v2804 = vmul.f32 %v2775, 1.442695
          %v2805 = vpow.pop %v2804
          %v2806 = vmul.f32 %v2776, 1.442695
          %v2807 = vpow.pop %v2806
          %v2808 = vmul.f32 %v2777, 1.442695
          %v2809 = vpow.pop %v2808
          %v2810 = vadd.f32 %v2779, 1.0
          %v2811 = vadd.f32 %v2781, 1.0
          %v2812 = vadd.f32 %v2783, 1.0
          %v2813 = vadd.f32 %v2785, 1.0
          %v2814 = vadd.f32 %v2787, 1.0
          %v2815 = vadd.f32 %v2789, 1.0
          %v2816 = vadd.f32 %v2791, 1.0
          %v2817 = vadd.f32 %v2793, 1.0
          %v2818 = vadd.f32 %v2795, 1.0
          %v2819 = vadd.f32 %v2797, 1.0
          %v2820 = vadd.f32 %v2799, 1.0
          %v2821 = vadd.f32 %v2801, 1.0
          %v2822 = vadd.f32 %v2803, 1.0
          %v2823 = vadd.f32 %v2805, 1.0
          %v2824 = vadd.f32 %v2807, 1.0
          %v2825 = vadd.f32 %v2809, 1.0
          %v2826 = vrcp.pop %v2810
          %v2827 = vmul.f32 1.0, %v2826
          %v2828 = vrcp.pop %v2811
          %v2829 = vmul.f32 1.0, %v2828
          %v2830 = vrcp.pop %v2812
          %v2831 = vmul.f32 1.0, %v2830
          %v2832 = vrcp.pop %v2813
          %v2833 = vmul.f32 1.0, %v2832
          %v2834 = vrcp.pop %v2814
          %v2835 = vmul.f32 1.0, %v2834
          %v2836 = vrcp.pop %v2815
          %v2837 = vmul.f32 1.0, %v2836
          %v2838 = vrcp.pop %v2816
          %v2839 = vmul.f32 1.0, %v2838
          %v2840 = vrcp.pop %v2817
          %v2841 = vmul.f32 1.0, %v2840
          %v2842 = vrcp.pop %v2818
          %v2843 = vmul.f32 1.0, %v2842
          %v2844 = vrcp.pop %v2819
          %v2845 = vmul.f32 1.0, %v2844
          %v2846 = vrcp.pop %v2820
          %v2847 = vmul.f32 1.0, %v2846
          %v2848 = vrcp.pop %v2821
          %v2849 = vmul.f32 1.0, %v2848
          %v2850 = vrcp.pop %v2822
          %v2851 = vmul.f32 1.0, %v2850
          %v2852 = vrcp.pop %v2823
          %v2853 = vmul.f32 1.0, %v2852
          %v2854 = vrcp.pop %v2824
          %v2855 = vmul.f32 1.0, %v2854
          %v2856 = vrcp.pop %v2825
          %v2857 = vmul.f32 1.0, %v2856
          %v2858 = vmul.f32 %v2700, %v2827
          %v2859 = vmul.f32 %v2703, %v2829
          %v2860 = vmul.f32 %v2708, %v2831
          %v2861 = vmul.f32 %v2711, %v2833
          %v2862 = vmul.f32 %v2716, %v2835
          %v2863 = vmul.f32 %v2719, %v2837
          %v2864 = vmul.f32 %v2724, %v2839
          %v2865 = vmul.f32 %v2727, %v2841
          %v2866 = vmul.f32 %v2732, %v2843
          %v2867 = vmul.f32 %v2735, %v2845
          %v2868 = vmul.f32 %v2740, %v2847
          %v2869 = vmul.f32 %v2743, %v2849
          %v2870 = vmul.f32 %v2748, %v2851
          %v2871 = vmul.f32 %v2751, %v2853
          %v2872 = vmul.f32 %v2756, %v2855
          %v2873 = vmul.f32 %v2759, %v2857
          %v2874 = vpack.c.bf16 %v2859, %v2858
          %v2875 = vpack.c.bf16 %v2861, %v2860
          %v2876 = vpack.c.bf16 %v2863, %v2862
          %v2877 = vpack.c.bf16 %v2865, %v2864
          %v2878 = vpack.c.bf16 %v2867, %v2866
          %v2879 = vpack.c.bf16 %v2869, %v2868
          %v2880 = vpack.c.bf16 %v2871, %v2870
          %v2881 = vpack.c.bf16 %v2873, %v2872
          %v2882 = vld [vmem:[%s317 + $0x140] sm:$0xf]
          %v2883 = vld [vmem:[%s317 + $0x144] sm:$0xf]
          %v2884 = vld [vmem:[%s317 + $0x148] sm:$0xf]
          %v2885 = vld [vmem:[%s317 + $0x14c] sm:$0xf]
          %v2886 = vld [vmem:[%s317 + $0x150] sm:$0xf]
          %v2887 = vld [vmem:[%s317 + $0x154] sm:$0xf]
          %v2888 = vld [vmem:[%s317 + $0x158] sm:$0xf]
          %v2889 = vld [vmem:[%s317 + $0x15c] sm:$0xf]
          %v2890 = vld [vmem:[%s317 + $0x160] sm:$0xf]
          %v2891 = vld [vmem:[%s317 + $0x164] sm:$0xf]
          %v2892 = vld [vmem:[%s317 + $0x168] sm:$0xf]
          %v2893 = vld [vmem:[%s317 + $0x16c] sm:$0xf]
          %v2894 = vld [vmem:[%s317 + $0x170] sm:$0xf]
          %v2895 = vld [vmem:[%s317 + $0x174] sm:$0xf]
          %v2896 = vld [vmem:[%s317 + $0x178] sm:$0xf]
          %v2897 = vld [vmem:[%s317 + $0x17c] sm:$0xf]
          %v2898 = vld [vmem:[%s365 + $0x2] sm:$0x1]
          %v2899 = vlaneseq
          %v2900 = vshrl.u32 %v2899, 7
          %v2901 = vsub.s32 0, %v2900
          %v2902 = vrot.slane %v2898, %v2901
          %v2919 = vunpack.c.l.b16 %v2882
          %v2920 = vunpack.c.l.b16 %v2883
          %v2921 = vunpack.c.l.b16 %v2884
          %v2922 = vunpack.c.l.b16 %v2885
          %v2923 = vunpack.c.l.b16 %v2886
          %v2924 = vunpack.c.l.b16 %v2887
          %v2925 = vunpack.c.l.b16 %v2888
          %v2926 = vunpack.c.l.b16 %v2889
          %v2927 = vunpack.c.l.b16 %v2890
          %v2928 = vunpack.c.l.b16 %v2891
          %v2929 = vunpack.c.l.b16 %v2892
          %v2930 = vunpack.c.l.b16 %v2893
          %v2931 = vunpack.c.l.b16 %v2894
          %v2932 = vunpack.c.l.b16 %v2895
          %v2933 = vunpack.c.l.b16 %v2896
          %v2934 = vunpack.c.l.b16 %v2897
          %v2935 = vpack.c.b16 %v2920, %v2919
          %v2936 = vpack.c.b16 %v2922, %v2921
          %v2937 = vpack.c.b16 %v2924, %v2923
          %v2938 = vpack.c.b16 %v2926, %v2925
          %v2939 = vpack.c.b16 %v2928, %v2927
          %v2940 = vpack.c.b16 %v2930, %v2929
          %v2941 = vpack.c.b16 %v2932, %v2931
          %v2942 = vpack.c.b16 %v2934, %v2933
          %2951 = vmatprep.subr.bf16.mxu0 0
          %2952 = vmatpush1.bf16.msra.mxu0 %v2935
          %2953 = vmatprep.subr.bf16.mxu0 0
          %2954 = vmatpush1.bf16.msra.mxu0 %v2936
          %2955 = vmatprep.subr.bf16.mxu0 0
          %2956 = vmatpush1.bf16.msra.mxu0 %v2937
          %2957 = vmatprep.subr.bf16.mxu0 0
          %2958 = vmatpush1.bf16.msra.mxu0 %v2938
          %2959 = vmatprep.subr.bf16.mxu0 0
          %2960 = vmatpush1.bf16.msra.mxu0 %v2939
          %2961 = vmatprep.subr.bf16.mxu0 0
          %2962 = vmatpush1.bf16.msra.mxu0 %v2940
          %2963 = vmatprep.subr.bf16.mxu0 0
          %2964 = vmatpush1.bf16.msra.mxu0 %v2941
          %2965 = vmatprep.subr.bf16.mxu0 0
          %2966 = vmatpush1.bf16.msra.mxu0 %v2942
          %2967 = vmatprep.subr.bf16.mxu0 0
          %2968 = vmatpush1.bf16.msra.mxu0 0
          %2969 = vmatprep.subr.bf16.mxu0 0
          %2970 = vmatpush1.bf16.msra.mxu0 0
          %2971 = vmatprep.subr.bf16.mxu0 0
          %2972 = vmatpush1.bf16.msra.mxu0 0
          %2973 = vmatprep.subr.bf16.mxu0 0
          %2974 = vmatpush1.bf16.msra.mxu0 0
          %2975 = vmatprep.subr.bf16.mxu0 0
          %2976 = vmatpush1.bf16.msra.mxu0 0
          %2977 = vmatprep.subr.bf16.mxu0 0
          %2978 = vmatpush1.bf16.msra.mxu0 0
          %2979 = vmatprep.subr.bf16.mxu0 0
          %2980 = vmatpush1.bf16.msra.mxu0 0
          %2981 = vmatprep.subr.bf16.mxu0 0
          %2982 = vmatpush1.bf16.msra.mxu0 0
          %2983 = vmatprep.mubr.bf16.mxu0 0
          %2984 = vmatmul.mubr.bf16.gmra.mrb[0].mxu0 %v2874
          %v2985 = vpop.f32.mrb[0].mxu0
          %v2986 = vadd.f32 %v2902, %v2985
          %v2987 = vpop.f32.mrb[0].mxu0
          %v2988 = vpop.f32.mrb[0].mxu0
          %v2989 = vadd.f32 %v2902, %v2988
          %v2990 = vpop.f32.mrb[0].mxu0
          %2991 = vmatprep.mubr.bf16.mxu0 0
          %2992 = vmatmul.mubr.bf16.gmra.mrb[0].mxu0 %v2875
          %v2993 = vpop.f32.mrb[0].mxu0
          %v2994 = vadd.f32 %v2902, %v2993
          %v2995 = vpop.f32.mrb[0].mxu0
          %v2996 = vpop.f32.mrb[0].mxu0
          %v2997 = vadd.f32 %v2902, %v2996
          %v2998 = vpop.f32.mrb[0].mxu0
          %2999 = vmatprep.mubr.bf16.mxu0 0
          %3000 = vmatmul.mubr.bf16.gmra.mrb[0].mxu0 %v2876
          %v3001 = vpop.f32.mrb[0].mxu0
          %v3002 = vadd.f32 %v2902, %v3001
          %v3003 = vpop.f32.mrb[0].mxu0
          %v3004 = vpop.f32.mrb[0].mxu0
          %v3005 = vadd.f32 %v2902, %v3004
          %v3006 = vpop.f32.mrb[0].mxu0
          %3007 = vmatprep.mubr.bf16.mxu0 0
          %3008 = vmatmul.mubr.bf16.gmra.mrb[0].mxu0 %v2877
          %v3009 = vpop.f32.mrb[0].mxu0
          %v3010 = vadd.f32 %v2902, %v3009
          %v3011 = vpop.f32.mrb[0].mxu0
          %v3012 = vpop.f32.mrb[0].mxu0
          %v3013 = vadd.f32 %v2902, %v3012
          %v3014 = vpop.f32.mrb[0].mxu0
          %3015 = vmatprep.mubr.bf16.mxu0 0
          %3016 = vmatmul.mubr.bf16.gmra.mrb[0].mxu0 %v2878
          %v3017 = vpop.f32.mrb[0].mxu0
          %v3018 = vadd.f32 %v2902, %v3017
          %v3019 = vpop.f32.mrb[0].mxu0
          %v3020 = vpop.f32.mrb[0].mxu0
          %v3021 = vadd.f32 %v2902, %v3020
          %v3022 = vpop.f32.mrb[0].mxu0
          %3023 = vmatprep.mubr.bf16.mxu0 0
          %3024 = vmatmul.mubr.bf16.gmra.mrb[0].mxu0 %v2879
          %v3025 = vpop.f32.mrb[0].mxu0
          %v3026 = vadd.f32 %v2902, %v3025
          %v3027 = vpop.f32.mrb[0].mxu0
          %v3028 = vpop.f32.mrb[0].mxu0
          %v3029 = vadd.f32 %v2902, %v3028
          %v3030 = vpop.f32.mrb[0].mxu0
          %3031 = vmatprep.mubr.bf16.mxu0 0
          %3032 = vmatmul.mubr.bf16.gmra.mrb[0].mxu0 %v2880
          %v3033 = vpop.f32.mrb[0].mxu0
          %v3034 = vadd.f32 %v2902, %v3033
          %v3035 = vpop.f32.mrb[0].mxu0
          %v3036 = vpop.f32.mrb[0].mxu0
          %v3037 = vadd.f32 %v2902, %v3036
          %v3038 = vpop.f32.mrb[0].mxu0
          %3039 = vmatprep.mubr.bf16.mxu0 0
          %3040 = vmatmul.mubr.bf16.gmra.mrb[0].mxu0 %v2881
          %v3041 = vpop.f32.mrb[0].mxu0
          %v3042 = vadd.f32 %v2902, %v3041
          %v3043 = vpop.f32.mrb[0].mxu0
          %v3044 = vpop.f32.mrb[0].mxu0
          %v3045 = vadd.f32 %v2902, %v3044
          %v3046 = vpop.f32.mrb[0].mxu0
          %3047 = vdwg.mxu0
          %v3048 = vadd.f32 %v2484, %v2986
          %v3049 = vadd.f32 %v2485, %v2989
          %v3050 = vadd.f32 %v2486, %v2994
          %v3051 = vadd.f32 %v2487, %v2997
          %v3052 = vadd.f32 %v2488, %v3002
          %v3053 = vadd.f32 %v2489, %v3005
          %v3054 = vadd.f32 %v2490, %v3010
          %v3055 = vadd.f32 %v2491, %v3013
          %v3056 = vadd.f32 %v2492, %v3018
          %v3057 = vadd.f32 %v2493, %v3021
          %v3058 = vadd.f32 %v2494, %v3026
          %v3059 = vadd.f32 %v2495, %v3029
          %v3060 = vadd.f32 %v2496, %v3034
          %v3061 = vadd.f32 %v2497, %v3037
          %v3062 = vadd.f32 %v2498, %v3042
          %v3063 = vadd.f32 %v2499, %v3045
          %3064 = vst [vmem:[#allocation2] sm:$0xff] %v3048
          %3065 = vst [vmem:[#allocation2 + $0x8] sm:$0xff] %v3049
          %3066 = vst [vmem:[#allocation2 + $0x10] sm:$0xff] %v3050
          %3067 = vst [vmem:[#allocation2 + $0x18] sm:$0xff] %v3051
          %3068 = vst [vmem:[#allocation2 + $0x20] sm:$0xff] %v3052
          %3069 = vst [vmem:[#allocation2 + $0x28] sm:$0xff] %v3053
          %3070 = vst [vmem:[#allocation2 + $0x30] sm:$0xff] %v3054
          %3071 = vst [vmem:[#allocation2 + $0x38] sm:$0xff] %v3055
          %3072 = vst [vmem:[#allocation2 + $0x40] sm:$0xff] %v3056
          %3073 = vst [vmem:[#allocation2 + $0x48] sm:$0xff] %v3057
          %3074 = vst [vmem:[#allocation2 + $0x50] sm:$0xff] %v3058
          %3075 = vst [vmem:[#allocation2 + $0x58] sm:$0xff] %v3059
          %3076 = vst [vmem:[#allocation2 + $0x60] sm:$0xff] %v3060
          %3077 = vst [vmem:[#allocation2 + $0x68] sm:$0xff] %v3061
          %3078 = vst [vmem:[#allocation2 + $0x70] sm:$0xff] %v3062
          %3079 = vst [vmem:[#allocation2 + $0x78] sm:$0xff] %v3063
        $region68: #{tpu_custom_call.1} parent=51 // pred_fallthru
          _
        %p3080 = scmp.eq.s32.totalorder %s27, 3
        %p3081 = pnand %p3080, %p368
        %p3082 = pneg %p3081
        // Predicated region
        $region69: #{tpu_custom_call.1} parent=51 // pred_check
          _
        $region70: #{tpu_custom_call.1} parent=51 // pred_check_branch
          %3084 = sbr.rel (%p3081) target = $region72
        $region71: #{tpu_custom_call.1} parent=51 // pred_region
          %v3085 = vld [vmem:[#allocation2] sm:$0xff]
          %v3086 = vld [vmem:[#allocation2 + $0x8] sm:$0xff]
          %v3087 = vld [vmem:[#allocation2 + $0x10] sm:$0xff]
          %v3088 = vld [vmem:[#allocation2 + $0x18] sm:$0xff]
          %v3089 = vld [vmem:[#allocation2 + $0x20] sm:$0xff]
          %v3090 = vld [vmem:[#allocation2 + $0x28] sm:$0xff]
          %v3091 = vld [vmem:[#allocation2 + $0x30] sm:$0xff]
          %v3092 = vld [vmem:[#allocation2 + $0x38] sm:$0xff]
          %v3093 = vld [vmem:[#allocation2 + $0x40] sm:$0xff]
          %v3094 = vld [vmem:[#allocation2 + $0x48] sm:$0xff]
          %v3095 = vld [vmem:[#allocation2 + $0x50] sm:$0xff]
          %v3096 = vld [vmem:[#allocation2 + $0x58] sm:$0xff]
          %v3097 = vld [vmem:[#allocation2 + $0x60] sm:$0xff]
          %v3098 = vld [vmem:[#allocation2 + $0x68] sm:$0xff]
          %v3099 = vld [vmem:[#allocation2 + $0x70] sm:$0xff]
          %v3100 = vld [vmem:[#allocation2 + $0x78] sm:$0xff]
          %v3101 = vpack.c.bf16 %v3086, %v3085
          %v3102 = vpack.c.bf16 %v3088, %v3087
          %v3103 = vpack.c.bf16 %v3090, %v3089
          %v3104 = vpack.c.bf16 %v3092, %v3091
          %v3105 = vpack.c.bf16 %v3094, %v3093
          %v3106 = vpack.c.bf16 %v3096, %v3095
          %v3107 = vpack.c.bf16 %v3098, %v3097
          %v3108 = vpack.c.bf16 %v3100, %v3099
          %v3109 = vld [vmem:[%s4] sm:$0xf]
          %v3110 = vld [vmem:[%s4 + $0x4] sm:$0xf]
          %v3111 = vld [vmem:[%s4 + $0x8] sm:$0xf]
          %v3112 = vld [vmem:[%s4 + $0xc] sm:$0xf]
          %v3113 = vld [vmem:[%s4 + $0x10] sm:$0xf]
          %v3114 = vld [vmem:[%s4 + $0x14] sm:$0xf]
          %v3115 = vld [vmem:[%s4 + $0x18] sm:$0xf]
          %v3116 = vld [vmem:[%s4 + $0x1c] sm:$0xf]
          %v3117 = vld [vmem:[%s4 + $0x20] sm:$0xf]
          %v3118 = vld [vmem:[%s4 + $0x24] sm:$0xf]
          %v3119 = vld [vmem:[%s4 + $0x28] sm:$0xf]
          %v3120 = vld [vmem:[%s4 + $0x2c] sm:$0xf]
          %v3121 = vld [vmem:[%s4 + $0x30] sm:$0xf]
          %v3122 = vld [vmem:[%s4 + $0x34] sm:$0xf]
          %v3123 = vld [vmem:[%s4 + $0x38] sm:$0xf]
          %v3124 = vld [vmem:[%s4 + $0x3c] sm:$0xf]
          %v3125 = vld [vmem:[%s5] sm:$0x1]
          %v3127 = vlaneseq
          %v3128 = vshrl.u32 %v3127, 7
          %v3129 = vsub.s32 0, %v3128
          %v3130 = vrot.slane %v3125, %v3129
          %v3148 = vunpack.c.l.b16 %v3109
          %v3149 = vunpack.c.l.b16 %v3110
          %v3150 = vunpack.c.l.b16 %v3111
          %v3151 = vunpack.c.l.b16 %v3112
          %v3152 = vunpack.c.l.b16 %v3113
          %v3153 = vunpack.c.l.b16 %v3114
          %v3154 = vunpack.c.l.b16 %v3115
          %v3155 = vunpack.c.l.b16 %v3116
          %v3156 = vunpack.c.l.b16 %v3117
          %v3157 = vunpack.c.l.b16 %v3118
          %v3158 = vunpack.c.l.b16 %v3119
          %v3159 = vunpack.c.l.b16 %v3120
          %v3160 = vunpack.c.l.b16 %v3121
          %v3161 = vunpack.c.l.b16 %v3122
          %v3162 = vunpack.c.l.b16 %v3123
          %v3163 = vunpack.c.l.b16 %v3124
          %v3164 = vpack.c.b16 %v3149, %v3148
          %v3165 = vpack.c.b16 %v3151, %v3150
          %v3166 = vpack.c.b16 %v3153, %v3152
          %v3167 = vpack.c.b16 %v3155, %v3154
          %v3168 = vpack.c.b16 %v3157, %v3156
          %v3169 = vpack.c.b16 %v3159, %v3158
          %v3170 = vpack.c.b16 %v3161, %v3160
          %v3171 = vpack.c.b16 %v3163, %v3162
          %3180 = vmatprep.subr.bf16.mxu0 0
          %3181 = vmatpush1.bf16.msra.mxu0 %v3164
          %3182 = vmatprep.subr.bf16.mxu0 0
          %3183 = vmatpush1.bf16.msra.mxu0 %v3165
          %3184 = vmatprep.subr.bf16.mxu0 0
          %3185 = vmatpush1.bf16.msra.mxu0 %v3166
          %3186 = vmatprep.subr.bf16.mxu0 0
          %3187 = vmatpush1.bf16.msra.mxu0 %v3167
          %3188 = vmatprep.subr.bf16.mxu0 0
          %3189 = vmatpush1.bf16.msra.mxu0 %v3168
          %3190 = vmatprep.subr.bf16.mxu0 0
          %3191 = vmatpush1.bf16.msra.mxu0 %v3169
          %3192 = vmatprep.subr.bf16.mxu0 0
          %3193 = vmatpush1.bf16.msra.mxu0 %v3170
          %3194 = vmatprep.subr.bf16.mxu0 0
          %3195 = vmatpush1.bf16.msra.mxu0 %v3171
          %3196 = vmatprep.subr.bf16.mxu0 0
          %3197 = vmatpush1.bf16.msra.mxu0 0
          %3198 = vmatprep.subr.bf16.mxu0 0
          %3199 = vmatpush1.bf16.msra.mxu0 0
          %3200 = vmatprep.subr.bf16.mxu0 0
          %3201 = vmatpush1.bf16.msra.mxu0 0
          %3202 = vmatprep.subr.bf16.mxu0 0
          %3203 = vmatpush1.bf16.msra.mxu0 0
          %3204 = vmatprep.subr.bf16.mxu0 0
          %3205 = vmatpush1.bf16.msra.mxu0 0
          %3206 = vmatprep.subr.bf16.mxu0 0
          %3207 = vmatpush1.bf16.msra.mxu0 0
          %3208 = vmatprep.subr.bf16.mxu0 0
          %3209 = vmatpush1.bf16.msra.mxu0 0
          %3210 = vmatprep.subr.bf16.mxu0 0
          %3211 = vmatpush1.bf16.msra.mxu0 0
          %3212 = vmatprep.mubr.bf16.mxu0 0
          %3213 = vmatmul.mubr.bf16.gmra.mrb[0].mxu0 %v3101
          %v3214 = vpop.f32.mrb[0].mxu0
          %v3215 = vadd.f32 %v3130, %v3214
          %v3216 = vpop.f32.mrb[0].mxu0
          %v3217 = vpop.f32.mrb[0].mxu0
          %v3218 = vadd.f32 %v3130, %v3217
          %v3219 = vpop.f32.mrb[0].mxu0
          %3220 = vmatprep.mubr.bf16.mxu0 0
          %3221 = vmatmul.mubr.bf16.gmra.mrb[0].mxu0 %v3102
          %v3222 = vpop.f32.mrb[0].mxu0
          %v3223 = vadd.f32 %v3130, %v3222
          %v3224 = vpop.f32.mrb[0].mxu0
          %v3225 = vpop.f32.mrb[0].mxu0
          %v3226 = vadd.f32 %v3130, %v3225
          %v3227 = vpop.f32.mrb[0].mxu0
          %3228 = vmatprep.mubr.bf16.mxu0 0
          %3229 = vmatmul.mubr.bf16.gmra.mrb[0].mxu0 %v3103
          %v3230 = vpop.f32.mrb[0].mxu0
          %v3231 = vadd.f32 %v3130, %v3230
          %v3232 = vpop.f32.mrb[0].mxu0
          %v3233 = vpop.f32.mrb[0].mxu0
          %v3234 = vadd.f32 %v3130, %v3233
          %v3235 = vpop.f32.mrb[0].mxu0
          %3236 = vmatprep.mubr.bf16.mxu0 0
          %3237 = vmatmul.mubr.bf16.gmra.mrb[0].mxu0 %v3104
          %v3238 = vpop.f32.mrb[0].mxu0
          %v3239 = vadd.f32 %v3130, %v3238
          %v3240 = vpop.f32.mrb[0].mxu0
          %v3241 = vpop.f32.mrb[0].mxu0
          %v3242 = vadd.f32 %v3130, %v3241
          %v3243 = vpop.f32.mrb[0].mxu0
          %3244 = vmatprep.mubr.bf16.mxu0 0
          %3245 = vmatmul.mubr.bf16.gmra.mrb[0].mxu0 %v3105
          %v3246 = vpop.f32.mrb[0].mxu0
          %v3247 = vadd.f32 %v3130, %v3246
          %v3248 = vpop.f32.mrb[0].mxu0
          %v3249 = vpop.f32.mrb[0].mxu0
          %v3250 = vadd.f32 %v3130, %v3249
          %v3251 = vpop.f32.mrb[0].mxu0
          %3252 = vmatprep.mubr.bf16.mxu0 0
          %3253 = vmatmul.mubr.bf16.gmra.mrb[0].mxu0 %v3106
          %v3254 = vpop.f32.mrb[0].mxu0
          %v3255 = vadd.f32 %v3130, %v3254
          %v3256 = vpop.f32.mrb[0].mxu0
          %v3257 = vpop.f32.mrb[0].mxu0
          %v3258 = vadd.f32 %v3130, %v3257
          %v3259 = vpop.f32.mrb[0].mxu0
          %3260 = vmatprep.mubr.bf16.mxu0 0
          %3261 = vmatmul.mubr.bf16.gmra.mrb[0].mxu0 %v3107
          %v3262 = vpop.f32.mrb[0].mxu0
          %v3263 = vadd.f32 %v3130, %v3262
          %v3264 = vpop.f32.mrb[0].mxu0
          %v3265 = vpop.f32.mrb[0].mxu0
          %v3266 = vadd.f32 %v3130, %v3265
          %v3267 = vpop.f32.mrb[0].mxu0
          %3268 = vmatprep.mubr.bf16.mxu0 0
          %3269 = vmatmul.mubr.bf16.gmra.mrb[0].mxu0 %v3108
          %v3270 = vpop.f32.mrb[0].mxu0
          %v3271 = vadd.f32 %v3130, %v3270
          %v3272 = vpop.f32.mrb[0].mxu0
          %v3273 = vpop.f32.mrb[0].mxu0
          %v3274 = vadd.f32 %v3130, %v3273
          %v3275 = vpop.f32.mrb[0].mxu0
          %3276 = vdwg.mxu0
          %3277 = vst [vmem:[#allocation8] sm:$0xff] %v3215
          %3278 = vst [vmem:[#allocation8 + $0x8] sm:$0xff] %v3218
          %3279 = vst [vmem:[#allocation8 + $0x10] sm:$0xff] %v3223
          %3280 = vst [vmem:[#allocation8 + $0x18] sm:$0xff] %v3226
          %3281 = vst [vmem:[#allocation8 + $0x20] sm:$0xff] %v3231
          %3282 = vst [vmem:[#allocation8 + $0x28] sm:$0xff] %v3234
          %3283 = vst [vmem:[#allocation8 + $0x30] sm:$0xff] %v3239
          %3284 = vst [vmem:[#allocation8 + $0x38] sm:$0xff] %v3242
          %3285 = vst [vmem:[#allocation8 + $0x40] sm:$0xff] %v3247
          %3286 = vst [vmem:[#allocation8 + $0x48] sm:$0xff] %v3250
          %3287 = vst [vmem:[#allocation8 + $0x50] sm:$0xff] %v3255
          %3288 = vst [vmem:[#allocation8 + $0x58] sm:$0xff] %v3258
          %3289 = vst [vmem:[#allocation8 + $0x60] sm:$0xff] %v3263
          %3290 = vst [vmem:[#allocation8 + $0x68] sm:$0xff] %v3266
          %3291 = vst [vmem:[#allocation8 + $0x70] sm:$0xff] %v3271
          %3292 = vst [vmem:[#allocation8 + $0x78] sm:$0xff] %v3274
        $region72: #{tpu_custom_call.1} parent=51 // pred_fallthru
          _
        // Predicated region
        $region73: #{tpu_custom_call.1} parent=51 // pred_check
          %p3293 = pneg %p231
        $region74: #{tpu_custom_call.1} parent=51 // pred_check_branch
          %3295 = sbr.rel (%p3293) target = $region76
        $region75: #{tpu_custom_call.1} parent=51 // pred_region
          %s3297 = ssub.s32 2048, 2048
          %3298 = vsyncadd [#allocation7], %s3297
          %s3299 = sshll.u32 [#allocation8], 4
          %s3300 = int_to_ptr.vmem [resolvable:$true] %s3299
          %3305 = dma.vmem_to_hbm [thread:$0]  %s3300, 2048, %s8, [#allocation7], 128, 128, 8
        $region76: #{tpu_custom_call.1} parent=51 // pred_fallthru
          _
        // Predicated region
        $region77: #{tpu_custom_call.1} parent=51 // pred_check
          %p3306 = pneg %p231
        $region78: #{tpu_custom_call.1} parent=51 // pred_check_branch
          %3308 = sbr.rel (%p3306) target = $region80
        $region79: #{tpu_custom_call.1} parent=51 // pred_region
          %3309 = dma.done [#allocation7], 2048
        $region80: #{tpu_custom_call.1} parent=51 // pred_fallthru
          _
      $region52: #{tpu_custom_call.1} parent=5 // pred_fallthru
        _
      %p3310 = scmp.le.s32.totalorder 2, %s18
      // Predicated region
      $region81: #{tpu_custom_call.1} parent=5 // pred_check
        %p3311 = pneg %p3310
      $region82: #{tpu_custom_call.1} parent=5 // pred_check_branch
        %3313 = sbr.rel (%p3311) target = $region84
      $region83: #{tpu_custom_call.1} parent=5 // pred_region
        %s3314 = ssub.s32 %s18, 2
      $region84: #{tpu_custom_call.1} parent=5 // pred_fallthru
        _
    $region6: #{tpu_custom_call.1} parent=1 // loop_footer
      %s22 = sadd.s32 1, %s18
    $region7: #{tpu_custom_call.1} parent=1 // loop_footer_branch
      %17 = sbr.rel target = $region3
    $region8: #{tpu_custom_call.1} parent=1 // loop_exit
      _
    %3315 = vsyncpa [#allocation6], 1
    %s3316 = scalar_lea.sflag [#allocation6], 1
    %3317 = vsyncpa %s3316, 1
    %3318 = vsyncpa [#allocation7], 1
    %s3319 = scalar_lea.sflag [#allocation7], 1
    %3320 = vsyncpa %s3319, 1

</llo_original>
